<compile_context>
chip_gen: v5e
topology: v5e:2x2
jax: 0.10.0
libtpu: 0.0.40
codegen_flags: <defaults>
</compile_context>

<pallas_src>
import functools

import jax
import jax.numpy as jnp
from jax.experimental import pallas as pl
from jax.experimental.pallas import tpu as pltpu


# ----------------------------------------------------------------------------
# helpers
# ----------------------------------------------------------------------------
def _preferred_row_tile():
    """256 fills the 2x256^2 MXUs of v6e/v7x; 128 for the 128-wide older gens."""
    try:
        kind = jax.devices()[0].device_kind.lower()
    except Exception:
        return 256
    return 128 if any(s in kind for s in ("v2", "v3", "v4", "v5")) else 256


def _pick_row_tile(m, preferred=None):
    if preferred is None:
        preferred = _preferred_row_tile()
    for t in (preferred, 256, 128):
        if t <= m and m % t == 0:
            return t
    return m  # single full-extent row block (always layout-legal)


def _pick_col_tile(m, preferred=1024):
    for t in (preferred, 2048, 1024, 512, 256, 128):
        if t <= m and m % t == 0:
            return t
    return m


def _physical_vmem_bytes():
    try:
        return int(pltpu.get_tpu_info().vmem_capacity_bytes)
    except Exception:
        return 128 << 20  # v5e/v6e; v7x reports its 64 MiB via get_tpu_info


def _vmem_limit(*byte_terms, slack=8 << 20):
    # Generation-aware cap: leave ~25% of physical VMEM for compiler-internal
    # scratch and pipeline bookkeeping (matters most on v7x's 64 MiB).
    cap = (_physical_vmem_bytes() * 3) // 4
    return int(max(16 << 20, min(cap, sum(byte_terms) + slack)))


# ----------------------------------------------------------------------------
# ContrastiveHead: Linear(dim_in, dim_in) -> ReLU -> Linear(dim_in, feat_dim)
#                  -> L2 normalize along dim=1
# ----------------------------------------------------------------------------
def _contrastive_head_kernel(x_ref, w1_ref, b1_ref, w2_ref, b2_ref,
                             feat_ref, feat_bf_ref, feat_t_ref):
    # bf16 operands on the MXU, f32 accumulation; bias / ReLU / normalize in f32.
    h = jnp.dot(x_ref[...], w1_ref[...], preferred_element_type=jnp.float32)
    h = jnp.maximum(h + b1_ref[...], 0.0)
    f = jnp.dot(h.astype(jnp.bfloat16), w2_ref[...],
                preferred_element_type=jnp.float32) + b2_ref[...]
    # F.normalize(feat, dim=1) == f / max(||f||_2, 1e-12), written rsqrt-multiply.
    inv_norm = jax.lax.rsqrt(jnp.maximum(jnp.sum(f * f, axis=1, keepdims=True), 1e-24))
    fn = f * inv_norm
    feat_ref[...] = fn                              # f32 module output
    feat_bf_ref[...] = fn.astype(jnp.bfloat16)      # bf16 copy for the loss kernel
    feat_t_ref[...] = fn.T.astype(jnp.bfloat16)     # bf16 features^T (XLU transpose)


def contrastive_head_pallas(x, w1, b1, w2, b2, *, tm=None):
    """Returns (features_f32 [M,F], features_bf16 [M,F], features_T_bf16 [F,M])."""
    m, d_in = x.shape
    f_dim = w2.shape[1]
    assert w1.shape == (d_in, d_in) and b1.shape == (d_in,)
    assert w2.shape == (d_in, f_dim) and b2.shape == (f_dim,)
    assert d_in % 128 == 0 and f_dim % 128 == 0, "keep matmul dims lane-dense (x128)"
    if tm is None:
        tm = _pick_row_tile(m)
    assert m % tm == 0

    xb = x.astype(jnp.bfloat16)
    w1b = w1.astype(jnp.bfloat16)
    w2b = w2.astype(jnp.bfloat16)
    b1r = b1.astype(jnp.float32).reshape(1, d_in)
    b2r = b2.astype(jnp.float32).reshape(1, f_dim)

    vmem_limit = _vmem_limit(
        2 * tm * d_in * 2,                  # x row stripe (bf16, double buffered)
        2 * d_in * d_in * 2,                # W1 (worst case: double buffered fallback)
        2 * d_in * f_dim * 2,               # W2
        2 * tm * f_dim * (4 + 2 + 2),       # f32 + bf16 + bf16^T output tiles
        6 * tm * max(d_in, f_dim) * 4,      # f32 intermediates
    )

    out_shape = (jax.ShapeDtypeStruct((m, f_dim), jnp.float32),
                 jax.ShapeDtypeStruct((m, f_dim), jnp.bfloat16),
                 jax.ShapeDtypeStruct((f_dim, m), jnp.bfloat16))

    def build(single_buffer_consts):
        if single_buffer_consts:
            # Constant operands (index_map == (0,0) for every step): one buffer only.
            const = lambda shape: pl.BlockSpec(shape, lambda i: (0, 0),
                                               pipeline_mode=pl.Buffered(1))
        else:
            const = lambda shape: pl.BlockSpec(shape, lambda i: (0, 0))
        return pl.pallas_call(
            _contrastive_head_kernel,
            out_shape=out_shape,
            grid_spec=pltpu.PrefetchScalarGridSpec(
                num_scalar_prefetch=0,
                grid=(m // tm,),
                in_specs=[
                    pl.BlockSpec((tm, d_in), lambda i: (i, 0)),   # x row stripe
                    const((d_in, d_in)),                          # W1
                    const((1, d_in)),                             # b1
                    const((d_in, f_dim)),                         # W2
                    const((1, f_dim)),                            # b2
                ],
                out_specs=(
                    pl.BlockSpec((tm, f_dim), lambda i: (i, 0)),  # f32 features
                    pl.BlockSpec((tm, f_dim), lambda i: (i, 0)),  # bf16 features
                    pl.BlockSpec((f_dim, tm), lambda i: (0, i)),  # bf16 features^T
                ),
            ),
            compiler_params=pltpu.CompilerParams(
                dimension_semantics=("parallel",),
                vmem_limit_bytes=vmem_limit),
        )

    try:
        return build(True)(xb, w1b, b1r, w2b, b2r)
    except Exception:
        # pl.Buffered(1) unsupported on this jax/libtpu -> default double buffering.
        return build(False)(xb, w1b, b1r, w2b, b2r)


def contrastive_head_ref(x, w1, b1, w2, b2):
    """Pure-JAX reference matching the kernel's bf16-matmul / f32-accumulate path."""
    xb, w1b, w2b = (t.astype(jnp.bfloat16) for t in (x, w1, w2))
    h = jnp.dot(xb, w1b, preferred_element_type=jnp.float32) + b1[None, :]
    h = jnp.maximum(h, 0.0)
    f = jnp.dot(h.astype(jnp.bfloat16), w2b,
                preferred_element_type=jnp.float32) + b2[None, :]
    norm = jnp.sqrt(jnp.sum(f * f, axis=1, keepdims=True))
    return f / jnp.maximum(norm, 1e-12)


# ----------------------------------------------------------------------------
# SupConLoss over the normalized features (column-tiled online softmax)
# ----------------------------------------------------------------------------
def _supcon_loss_kernel(q_ref, ft_ref, labc_ref, labr_ref, w_ref, loss_ref,
                        m_sc, l_sc, sp_sc, ns_sc, *, inv_temp):
    i = pl.program_id(0)
    j = pl.program_id(1)
    tm, tn = q_ref.shape[0], ft_ref.shape[1]

    @pl.when(j == 0)
    def _():
        m_sc[...] = jnp.full((tm, 1), -jnp.inf, jnp.float32)
        l_sc[...] = jnp.zeros((tm, 1), jnp.float32)
        sp_sc[...] = jnp.zeros((tm, 1), jnp.float32)
        ns_sc[...] = jnp.zeros((tm, 1), jnp.float32)

    # 1/T applied to the small [tm,K] bf16 operand; dense bf16 NN matmul against the
    # pre-transposed features^T column block (no in-kernel transpose), f32 accumulate.
    q = q_ref[...] * inv_temp                                            # bf16 [tm,K]
    sim = jnp.dot(q, ft_ref[...], preferred_element_type=jnp.float32)    # f32 [tm,tn]

    row_ids = jax.lax.broadcasted_iota(jnp.int32, (tm, tn), 0) + i * tm
    col_ids = jax.lax.broadcasted_iota(jnp.int32, (tm, tn), 1) + j * tn
    not_diag = row_ids != col_ids
    same_label = labc_ref[...] == labr_ref[...]               # [tm,1] == [1,tn]

    # Online-softmax denominator over the off-diagonal entries.
    m_new = jnp.maximum(m_sc[...], jnp.max(sim, axis=1, keepdims=True))
    alpha = jnp.exp(m_sc[...] - m_new)
    # TODO(synk): evaluate exp in bf16 on v6e/v7x (bf16 EUP) behind an accuracy gate.
    p = jnp.where(not_diag, jnp.exp(sim - m_new), 0.0)
    l_sc[...] = alpha * l_sc[...] + jnp.sum(p, axis=1, keepdims=True)
    m_sc[...] = m_new

    # Positive-pair statistics on the raw sim (the row max cancels algebraically in
    # the folded log-prob, so no shift is needed here).
    sp_sc[...] += jnp.sum(jnp.where(jnp.logical_and(not_diag, same_label), sim, 0.0),
                          axis=1, keepdims=True)
    ns_sc[...] += jnp.sum(jnp.where(same_label, 1.0, 0.0), axis=1, keepdims=True)

    @pl.when(j == pl.num_programs(1) - 1)
    def _():
        log_z = m_sc[...] + jnp.log(l_sc[...])        # log sum_{offdiag} exp(sim)
        n_same = ns_sc[...]                           # includes the diagonal
        n_pos = n_same - 1.0
        # Folded log-prob: sum_pos(sim - logZ) = sum_pos(sim) - n_pos * logZ.
        per_label_log_prob = (sp_sc[...] - n_pos * log_z) / n_same
        loss_ref[...] = -per_label_log_prob * w_ref[...]


def supcon_loss_pallas(features, labels, ious, *, temperature=0.2,
                       iou_threshold=0.5, reweight_func='none',
                       features_t=None, tm=None, tn=None):
    m, k = features.shape
    if tm is None:
        tm = _pick_row_tile(m)
    if tn is None:
        tn = _pick_col_tile(m)
    assert m % tm == 0 and m % tn == 0
    # TODO(synk): pad + mask M % tm != 0 (padded columns must be excluded from logZ
    #             and the positive sums) instead of asserting divisibility.

    feats = features.astype(jnp.bfloat16)
    feats_t = feats.T if features_t is None else features_t.astype(jnp.bfloat16)
    assert feats_t.shape == (k, m)

    # Lane-dense contraction dim: zero-pad K to x128 (pairwise dots unchanged).
    k_pad = -k % 128
    if k_pad:
        feats = jnp.pad(feats, ((0, 0), (0, k_pad)))
        feats_t = jnp.pad(feats_t, ((0, k_pad), (0, 0)))
        k = k + k_pad

    labels_col = labels.astype(jnp.int32).reshape(m, 1)
    labels_row = labels.astype(jnp.int32).reshape(1, m)

    # keep / reweight hoisted out of the kernel (plain XLA): removes the per-step
    # sub-128-lane keep store and the per-row exp(iou) from the kernel body.
    ious = ious.astype(jnp.float32)
    keep = (ious >= iou_threshold).astype(jnp.float32)
    if reweight_func == 'none':
        coef = jnp.ones_like(ious)
    elif reweight_func == 'linear':
        coef = ious
    elif reweight_func == 'exp':
        coef = jnp.exp(ious) - 1.0
    else:
        raise ValueError(reweight_func)
    weight = (coef * keep).reshape(m, 1)

    kernel = functools.partial(_supcon_loss_kernel, inv_temp=float(1.0 / temperature))

    vmem_limit = _vmem_limit(
        2 * tm * k * 2,            # feature row stripe (bf16)
        2 * k * tn * 2,            # features^T column block (bf16)
        2 * 1 * tn * 4,            # labels row block
        3 * 2 * tm * 128 * 4,      # lane-padded [tm,1] inputs / output
        4 * tm * 128 * 4,          # [tm,1] online-softmax scratch
        8 * tm * tn * 4,           # f32 [tm,tn] intermediates
    )

    loss_terms = pl.pallas_call(
        kernel,
        out_shape=jax.ShapeDtypeStruct((m, 1), jnp.float32),
        grid_spec=pltpu.PrefetchScalarGridSpec(
            num_scalar_prefetch=0,
            grid=(m // tm, m // tn),        # rows parallel, columns = online softmax
            in_specs=[
                pl.BlockSpec((tm, k), lambda i, j: (i, 0)),   # feature row stripe
                pl.BlockSpec((k, tn), lambda i, j: (0, j)),   # features^T column blk
                pl.BlockSpec((tm, 1), lambda i, j: (i, 0)),   # labels (column vec)
                pl.BlockSpec((1, tn), lambda i, j: (0, j)),   # labels (row slice)
                pl.BlockSpec((tm, 1), lambda i, j: (i, 0)),   # per-row weight
            ],
            out_specs=pl.BlockSpec((tm, 1), lambda i, j: (i, 0)),
            scratch_shapes=[pltpu.VMEM((tm, 1), jnp.float32)] * 4,
        ),
        compiler_params=pltpu.CompilerParams(
            dimension_semantics=("parallel", "arbitrary"),
            vmem_limit_bytes=vmem_limit),
    )(feats, feats_t, labels_col, labels_row, weight)

    # Masked mean over kept proposals == loss[keep].mean() in the PyTorch reference
    # (NaN when nothing passes iou_threshold, matching PyTorch).
    return jnp.sum(loss_terms) / jnp.sum(keep)


def supcon_loss_ref(features, labels, ious, *, temperature=0.2, iou_threshold=0.5,
                    reweight_func='none', matmul_dtype=jnp.float32):
    """Pure-JAX reference mirroring the PyTorch SupConLoss forward."""
    m = features.shape[0]
    labels = labels.reshape(-1, 1)
    label_mask = (labels == labels.T).astype(jnp.float32)
    if matmul_dtype == jnp.bfloat16:
        # Matches the kernel's bf16 similarity path (scales the small operand).
        f = features.astype(jnp.bfloat16)
        sim = jnp.dot(f * (1.0 / temperature), f.T,
                      preferred_element_type=jnp.float32)
    else:
        sim = jnp.dot(features, features.T,
                      precision=jax.lax.Precision.HIGHEST) / temperature
    sim = sim - jnp.max(sim, axis=1, keepdims=True)
    logits_mask = 1.0 - jnp.eye(m, dtype=jnp.float32)
    exp_sim = jnp.exp(sim) * logits_mask
    log_prob = sim - jnp.log(jnp.sum(exp_sim, axis=1, keepdims=True))
    per_label_log_prob = (jnp.sum(log_prob * logits_mask * label_mask, axis=1)
                          / jnp.sum(label_mask, axis=1))
    keep = (ious >= iou_threshold).astype(jnp.float32)
    if reweight_func == 'none':
        coef = jnp.ones_like(ious)
    elif reweight_func == 'linear':
        coef = ious
    else:
        coef = jnp.exp(ious) - 1.0
    loss = -per_label_log_prob * coef * keep
    return jnp.sum(loss) / jnp.sum(keep)


# ----------------------------------------------------------------------------
# demo / self-check
# ----------------------------------------------------------------------------
if __name__ == "__main__":
    key = jax.random.PRNGKey(0)
    kx, kw1, kb1, kw2, kb2, kl, ki = jax.random.split(key, 7)

    # Small but MXU/lane-friendly shapes: 512 proposals, dim_in=128, feat_dim=128.
    M, DIM_IN, FEAT_DIM = 512, 128, 128

    x = jax.random.normal(kx, (M, DIM_IN), dtype=jnp.float32)
    # c2_xavier_fill is init-time only; any reasonable scaled-normal init works here.
    w1 = jax.random.normal(kw1, (DIM_IN, DIM_IN), dtype=jnp.float32) / jnp.sqrt(DIM_IN)
    b1 = 0.1 * jax.random.normal(kb1, (DIM_IN,), dtype=jnp.float32)
    w2 = jax.random.normal(kw2, (DIM_IN, FEAT_DIM), dtype=jnp.float32) / jnp.sqrt(DIM_IN)
    b2 = 0.1 * jax.random.normal(kb2, (FEAT_DIM,), dtype=jnp.float32)
    labels = jax.random.randint(kl, (M,), 0, 4, dtype=jnp.int32)
    ious = jax.random.uniform(ki, (M,), dtype=jnp.float32)

    # --- ContrastiveHead forward (the spec module) ---
    feats, feats_bf, feats_t = contrastive_head_pallas(x, w1, b1, w2, b2)
    feats = jax.block_until_ready(feats)
    feats_ref = contrastive_head_ref(x, w1, b1, w2, b2)
    assert jnp.allclose(feats, feats_ref, rtol=1e-3, atol=1e-3), "head mismatch"
    assert jnp.allclose(jnp.linalg.norm(feats, axis=1), 1.0, atol=1e-3), "not unit norm"
    assert jnp.allclose(feats_bf.astype(jnp.float32), feats, atol=1e-2), "bf16 copy off"
    assert jnp.array_equal(feats_t.T, feats_bf), "transposed copy mismatch"

    # --- SupConLoss over the normalized features ---
    # tn=256 (< M) exercises the online-softmax column axis at demo scale.
    loss = supcon_loss_pallas(feats_bf, labels, ious, features_t=feats_t,
                              temperature=0.2, iou_threshold=0.5,
                              reweight_func='none', tn=256)
    loss = jax.block_until_ready(loss)

    loss_matched = supcon_loss_ref(feats, labels, ious, temperature=0.2,
                                   iou_threshold=0.5, reweight_func='none',
                                   matmul_dtype=jnp.bfloat16)
    assert jnp.allclose(loss, loss_matched, rtol=5e-3, atol=5e-3), (loss, loss_matched)

    loss_f32 = supcon_loss_ref(feats, labels, ious, temperature=0.2,
                               iou_threshold=0.5, reweight_func='none',
                               matmul_dtype=jnp.float32)
    assert jnp.allclose(loss, loss_f32, rtol=3e-2, atol=3e-2), (loss, loss_f32)

    print("KERNEL_OK")
</pallas_src>

<mosaic_0001>
module attributes {stable_mosaic.version = 11 : i64} {
  func.func @_contrastive_head_kernel(%arg0: i32, %arg1: memref<256x128xbf16, #tpu.memory_space<vmem>>, %arg2: memref<128x128xbf16, #tpu.memory_space<vmem>>, %arg3: memref<1x128xf32, #tpu.memory_space<vmem>>, %arg4: memref<128x128xbf16, #tpu.memory_space<vmem>>, %arg5: memref<1x128xf32, #tpu.memory_space<vmem>>, %arg6: memref<256x128xf32, #tpu.memory_space<vmem>>, %arg7: memref<256x128xbf16, #tpu.memory_space<vmem>>, %arg8: memref<128x256xbf16, #tpu.memory_space<vmem>>) attributes {dimension_semantics = [#tpu.dimension_semantics<parallel>], iteration_bounds = array<i64: 2>, scalar_prefetch = 0 : i64, scratch_operands = 0 : i64, tpu.core_type = #tpu.core_type<tc>, window_params = [{transform_indices = @transform_0, window_bounds = array<i64: 256, 128>}, {pipeline_mode = #tpu.pipeline_mode<synchronous>, transform_indices = @transform_1, window_bounds = array<i64: 128, 128>}, {pipeline_mode = #tpu.pipeline_mode<synchronous>, transform_indices = @transform_2, window_bounds = array<i64: 1, 128>}, {pipeline_mode = #tpu.pipeline_mode<synchronous>, transform_indices = @transform_3, window_bounds = array<i64: 128, 128>}, {pipeline_mode = #tpu.pipeline_mode<synchronous>, transform_indices = @transform_4, window_bounds = array<i64: 1, 128>}, {transform_indices = @transform_5, window_bounds = array<i64: 256, 128>}, {transform_indices = @transform_6, window_bounds = array<i64: 256, 128>}, {transform_indices = @transform_7, window_bounds = array<i64: 128, 256>}]} {
    %c0 = arith.constant 0 : index
    %c0_0 = arith.constant 0 : index
    %0 = vector.load %arg1[%c0, %c0_0] : memref<256x128xbf16, #tpu.memory_space<vmem>>, vector<256x128xbf16>
    %c0_1 = arith.constant 0 : index
    %c0_2 = arith.constant 0 : index
    %1 = vector.load %arg2[%c0_1, %c0_2] : memref<128x128xbf16, #tpu.memory_space<vmem>>, vector<128x128xbf16>
    %cst = arith.constant dense<0.000000e+00> : vector<256x128xf32>
    %2 = tpu.matmul %0, %1, %cst {dimension_numbers = #tpu.dot_dimension_numbers<[1], [0], [0], [1], [0, 0, 1, 1], [], []>} : vector<256x128xbf16>, vector<128x128xbf16>, vector<256x128xf32> -> vector<256x128xf32>
    %c0_3 = arith.constant 0 : index
    %c0_4 = arith.constant 0 : index
    %3 = vector.load %arg3[%c0_3, %c0_4] : memref<1x128xf32, #tpu.memory_space<vmem>>, vector<1x128xf32>
    %4 = vector.broadcast %3 : vector<1x128xf32> to vector<256x128xf32>
    %5 = arith.addf %2, %4 : vector<256x128xf32>
    %cst_5 = arith.constant 0.000000e+00 : f32
    %6 = vector.broadcast %cst_5 : f32 to vector<256x128xf32>
    %7 = arith.maximumf %5, %6 : vector<256x128xf32>
    %8 = arith.truncf %7 : vector<256x128xf32> to vector<256x128xbf16>
    %c0_6 = arith.constant 0 : index
    %c0_7 = arith.constant 0 : index
    %9 = vector.load %arg4[%c0_6, %c0_7] : memref<128x128xbf16, #tpu.memory_space<vmem>>, vector<128x128xbf16>
    %cst_8 = arith.constant dense<0.000000e+00> : vector<256x128xf32>
    %10 = tpu.matmul %8, %9, %cst_8 {dimension_numbers = #tpu.dot_dimension_numbers<[1], [0], [0], [1], [0, 0, 1, 1], [], []>} : vector<256x128xbf16>, vector<128x128xbf16>, vector<256x128xf32> -> vector<256x128xf32>
    %c0_9 = arith.constant 0 : index
    %c0_10 = arith.constant 0 : index
    %11 = vector.load %arg5[%c0_9, %c0_10] : memref<1x128xf32, #tpu.memory_space<vmem>>, vector<1x128xf32>
    %12 = vector.broadcast %11 : vector<1x128xf32> to vector<256x128xf32>
    %13 = arith.addf %10, %12 : vector<256x128xf32>
    %14 = arith.mulf %13, %13 : vector<256x128xf32>
    %cst_11 = arith.constant dense<0.000000e+00> : vector<256xf32>
    %15 = vector.multi_reduction <add>, %14, %cst_11 [1] : vector<256x128xf32> to vector<256xf32>
    %16 = vector.shape_cast %15 : vector<256xf32> to vector<256x1xf32>
    %cst_12 = arith.constant 1.000000e-24 : f32
    %17 = vector.broadcast %cst_12 : f32 to vector<256x1xf32>
    %18 = arith.maximumf %16, %17 : vector<256x1xf32>
    %19 = math.rsqrt %18 : vector<256x1xf32>
    %20 = vector.broadcast %19 : vector<256x1xf32> to vector<256x128xf32>
    %21 = arith.mulf %13, %20 : vector<256x128xf32>
    %c0_13 = arith.constant 0 : index
    %c0_14 = arith.constant 0 : index
    %22 = vector.load %arg6[%c0_13, %c0_14] : memref<256x128xf32, #tpu.memory_space<vmem>>, vector<256x128xf32>
    tpu.vector_store %arg6[%c0_13, %c0_14], %21 {strides = array<i32>} : memref<256x128xf32, #tpu.memory_space<vmem>>, vector<256x128xf32>,
    %23 = arith.truncf %21 : vector<256x128xf32> to vector<256x128xbf16>
    %c0_15 = arith.constant 0 : index
    %c0_16 = arith.constant 0 : index
    %24 = vector.load %arg7[%c0_15, %c0_16] : memref<256x128xbf16, #tpu.memory_space<vmem>>, vector<256x128xbf16>
    tpu.vector_store %arg7[%c0_15, %c0_16], %23 {strides = array<i32>} : memref<256x128xbf16, #tpu.memory_space<vmem>>, vector<256x128xbf16>,
    %25 = tpu.transpose %21, [1, 0] : vector<256x128xf32> -> vector<128x256xf32>
    %26 = arith.truncf %25 : vector<128x256xf32> to vector<128x256xbf16>
    %c0_17 = arith.constant 0 : index
    %c0_18 = arith.constant 0 : index
    %27 = vector.load %arg8[%c0_17, %c0_18] : memref<128x256xbf16, #tpu.memory_space<vmem>>, vector<128x256xbf16>
    tpu.vector_store %arg8[%c0_17, %c0_18], %26 {strides = array<i32>} : memref<128x256xbf16, #tpu.memory_space<vmem>>, vector<128x256xbf16>,
    return
  }
  func.func @transform_0(%arg0: i32) -> (i32, i32) {
    %c0_i32 = arith.constant 0 : i32
    %c0_i32_0 = arith.constant 0 : i32
    return %arg0, %c0_i32 : i32, i32
  }
  func.func @transform_1(%arg0: i32) -> (i32, i32) {
    %c0_i32 = arith.constant 0 : i32
    %c0_i32_0 = arith.constant 0 : i32
    %c0_i32_1 = arith.constant 0 : i32
    return %c0_i32, %c0_i32_0 : i32, i32
  }
  func.func @transform_2(%arg0: i32) -> (i32, i32) {
    %c0_i32 = arith.constant 0 : i32
    %c0_i32_0 = arith.constant 0 : i32
    %c0_i32_1 = arith.constant 0 : i32
    return %c0_i32, %c0_i32_0 : i32, i32
  }
  func.func @transform_3(%arg0: i32) -> (i32, i32) {
    %c0_i32 = arith.constant 0 : i32
    %c0_i32_0 = arith.constant 0 : i32
    %c0_i32_1 = arith.constant 0 : i32
    return %c0_i32, %c0_i32_0 : i32, i32
  }
  func.func @transform_4(%arg0: i32) -> (i32, i32) {
    %c0_i32 = arith.constant 0 : i32
    %c0_i32_0 = arith.constant 0 : i32
    %c0_i32_1 = arith.constant 0 : i32
    return %c0_i32, %c0_i32_0 : i32, i32
  }
  func.func @transform_5(%arg0: i32) -> (i32, i32) {
    %c0_i32 = arith.constant 0 : i32
    %c0_i32_0 = arith.constant 0 : i32
    return %arg0, %c0_i32 : i32, i32
  }
  func.func @transform_6(%arg0: i32) -> (i32, i32) {
    %c0_i32 = arith.constant 0 : i32
    %c0_i32_0 = arith.constant 0 : i32
    return %arg0, %c0_i32 : i32, i32
  }
  func.func @transform_7(%arg0: i32) -> (i32, i32) {
    %c0_i32 = arith.constant 0 : i32
    %c0_i32_0 = arith.constant 0 : i32
    return %c0_i32, %arg0 : i32, i32
  }
}

module attributes {stable_mosaic.version = 11 : i64} {
  func.func @_contrastive_head_kernel(%arg0: i32, %arg1: memref<256x128xbf16, #tpu.memory_space<vmem>>, %arg2: memref<128x128xbf16, #tpu.memory_space<vmem>>, %arg3: memref<1x128xf32, #tpu.memory_space<vmem>>, %arg4: memref<128x128xbf16, #tpu.memory_space<vmem>>, %arg5: memref<1x128xf32, #tpu.memory_space<vmem>>, %arg6: memref<256x128xf32, #tpu.memory_space<vmem>>, %arg7: memref<256x128xbf16, #tpu.memory_space<vmem>>, %arg8: memref<128x256xbf16, #tpu.memory_space<vmem>>) attributes {dimension_semantics = [#tpu.dimension_semantics<parallel>], iteration_bounds = array<i64: 2>, scalar_prefetch = 0 : i64, scratch_operands = 0 : i64, tpu.core_type = #tpu.core_type<tc>, window_params = [{transform_indices = @transform_0, window_bounds = array<i64: 256, 128>}, {pipeline_mode = #tpu.pipeline_mode<synchronous>, transform_indices = @transform_1, window_bounds = array<i64: 128, 128>}, {pipeline_mode = #tpu.pipeline_mode<synchronous>, transform_indices = @transform_2, window_bounds = array<i64: 1, 128>}, {pipeline_mode = #tpu.pipeline_mode<synchronous>, transform_indices = @transform_3, window_bounds = array<i64: 128, 128>}, {pipeline_mode = #tpu.pipeline_mode<synchronous>, transform_indices = @transform_4, window_bounds = array<i64: 1, 128>}, {transform_indices = @transform_5, window_bounds = array<i64: 256, 128>}, {transform_indices = @transform_6, window_bounds = array<i64: 256, 128>}, {transform_indices = @transform_7, window_bounds = array<i64: 128, 256>}]} {
    %c0 = arith.constant 0 : index
    %c0_0 = arith.constant 0 : index
    %0 = vector.load %arg1[%c0, %c0_0] : memref<256x128xbf16, #tpu.memory_space<vmem>>, vector<256x128xbf16>
    %c0_1 = arith.constant 0 : index
    %c0_2 = arith.constant 0 : index
    %1 = vector.load %arg2[%c0_1, %c0_2] : memref<128x128xbf16, #tpu.memory_space<vmem>>, vector<128x128xbf16>
    %cst = arith.constant dense<0.000000e+00> : vector<256x128xf32>
    %2 = tpu.matmul %0, %1, %cst {dimension_numbers = #tpu.dot_dimension_numbers<[1], [0], [0], [1], [0, 0, 1, 1], [], []>} : vector<256x128xbf16>, vector<128x128xbf16>, vector<256x128xf32> -> vector<256x128xf32>
    %c0_3 = arith.constant 0 : index
    %c0_4 = arith.constant 0 : index
    %3 = vector.load %arg3[%c0_3, %c0_4] : memref<1x128xf32, #tpu.memory_space<vmem>>, vector<1x128xf32>
    %4 = vector.broadcast %3 : vector<1x128xf32> to vector<256x128xf32>
    %5 = arith.addf %2, %4 : vector<256x128xf32>
    %cst_5 = arith.constant 0.000000e+00 : f32
    %6 = vector.broadcast %cst_5 : f32 to vector<256x128xf32>
    %7 = arith.maximumf %5, %6 : vector<256x128xf32>
    %8 = arith.truncf %7 : vector<256x128xf32> to vector<256x128xbf16>
    %c0_6 = arith.constant 0 : index
    %c0_7 = arith.constant 0 : index
    %9 = vector.load %arg4[%c0_6, %c0_7] : memref<128x128xbf16, #tpu.memory_space<vmem>>, vector<128x128xbf16>
    %cst_8 = arith.constant dense<0.000000e+00> : vector<256x128xf32>
    %10 = tpu.matmul %8, %9, %cst_8 {dimension_numbers = #tpu.dot_dimension_numbers<[1], [0], [0], [1], [0, 0, 1, 1], [], []>} : vector<256x128xbf16>, vector<128x128xbf16>, vector<256x128xf32> -> vector<256x128xf32>
    %c0_9 = arith.constant 0 : index
    %c0_10 = arith.constant 0 : index
    %11 = vector.load %arg5[%c0_9, %c0_10] : memref<1x128xf32, #tpu.memory_space<vmem>>, vector<1x128xf32>
    %12 = vector.broadcast %11 : vector<1x128xf32> to vector<256x128xf32>
    %13 = arith.addf %10, %12 : vector<256x128xf32>
    %14 = arith.mulf %13, %13 : vector<256x128xf32>
    %cst_11 = arith.constant dense<0.000000e+00> : vector<256xf32>
    %15 = vector.multi_reduction <add>, %14, %cst_11 [1] : vector<256x128xf32> to vector<256xf32>
    %16 = vector.shape_cast %15 : vector<256xf32> to vector<256x1xf32>
    %cst_12 = arith.constant 1.000000e-24 : f32
    %17 = vector.broadcast %cst_12 : f32 to vector<256x1xf32>
    %18 = arith.maximumf %16, %17 : vector<256x1xf32>
    %19 = math.rsqrt %18 : vector<256x1xf32>
    %20 = vector.broadcast %19 : vector<256x1xf32> to vector<256x128xf32>
    %21 = arith.mulf %13, %20 : vector<256x128xf32>
    %c0_13 = arith.constant 0 : index
    %c0_14 = arith.constant 0 : index
    %22 = vector.load %arg6[%c0_13, %c0_14] : memref<256x128xf32, #tpu.memory_space<vmem>>, vector<256x128xf32>
    tpu.vector_store %arg6[%c0_13, %c0_14], %21 {strides = array<i32>} : memref<256x128xf32, #tpu.memory_space<vmem>>, vector<256x128xf32>,
    %23 = arith.truncf %21 : vector<256x128xf32> to vector<256x128xbf16>
    %c0_15 = arith.constant 0 : index
    %c0_16 = arith.constant 0 : index
    %24 = vector.load %arg7[%c0_15, %c0_16] : memref<256x128xbf16, #tpu.memory_space<vmem>>, vector<256x128xbf16>
    tpu.vector_store %arg7[%c0_15, %c0_16], %23 {strides = array<i32>} : memref<256x128xbf16, #tpu.memory_space<vmem>>, vector<256x128xbf16>,
    %25 = tpu.transpose %21, [1, 0] : vector<256x128xf32> -> vector<128x256xf32>
    %26 = arith.truncf %25 : vector<128x256xf32> to vector<128x256xbf16>
    %c0_17 = arith.constant 0 : index
    %c0_18 = arith.constant 0 : index
    %27 = vector.load %arg8[%c0_17, %c0_18] : memref<128x256xbf16, #tpu.memory_space<vmem>>, vector<128x256xbf16>
    tpu.vector_store %arg8[%c0_17, %c0_18], %26 {strides = array<i32>} : memref<128x256xbf16, #tpu.memory_space<vmem>>, vector<128x256xbf16>,
    return
  }
  func.func @transform_0(%arg0: i32) -> (i32, i32) {
    %c0_i32 = arith.constant 0 : i32
    %c0_i32_0 = arith.constant 0 : i32
    return %arg0, %c0_i32 : i32, i32
  }
  func.func @transform_1(%arg0: i32) -> (i32, i32) {
    %c0_i32 = arith.constant 0 : i32
    %c0_i32_0 = arith.constant 0 : i32
    %c0_i32_1 = arith.constant 0 : i32
    return %c0_i32, %c0_i32_0 : i32, i32
  }
  func.func @transform_2(%arg0: i32) -> (i32, i32) {
    %c0_i32 = arith.constant 0 : i32
    %c0_i32_0 = arith.constant 0 : i32
    %c0_i32_1 = arith.constant 0 : i32
    return %c0_i32, %c0_i32_0 : i32, i32
  }
  func.func @transform_3(%arg0: i32) -> (i32, i32) {
    %c0_i32 = arith.constant 0 : i32
    %c0_i32_0 = arith.constant 0 : i32
    %c0_i32_1 = arith.constant 0 : i32
    return %c0_i32, %c0_i32_0 : i32, i32
  }
  func.func @transform_4(%arg0: i32) -> (i32, i32) {
    %c0_i32 = arith.constant 0 : i32
    %c0_i32_0 = arith.constant 0 : i32
    %c0_i32_1 = arith.constant 0 : i32
    return %c0_i32, %c0_i32_0 : i32, i32
  }
  func.func @transform_5(%arg0: i32) -> (i32, i32) {
    %c0_i32 = arith.constant 0 : i32
    %c0_i32_0 = arith.constant 0 : i32
    return %arg0, %c0_i32 : i32, i32
  }
  func.func @transform_6(%arg0: i32) -> (i32, i32) {
    %c0_i32 = arith.constant 0 : i32
    %c0_i32_0 = arith.constant 0 : i32
    return %arg0, %c0_i32 : i32, i32
  }
  func.func @transform_7(%arg0: i32) -> (i32, i32) {
    %c0_i32 = arith.constant 0 : i32
    %c0_i32_0 = arith.constant 0 : i32
    return %c0_i32, %arg0 : i32, i32
  }
}

</mosaic_0001>

<llo_original>
// kernel: tpu_custom_call.1
$region0: #{tpu_custom_call.1}
  #allocation0 [shape = 'u32[]', space=smem, size = 0x4, offset = 0x4, fixed_abs, tag = 'smem constant byte address 0x4 - core index']
  #allocation1 [shape = 'u32[72,128]{1,0:T(1,128)}', space=vmem, size = 0x9000, scoped, tag = 'internal scratch']
  %s0 = inlined_call_operand.hbm [shape: bf16[512,128], index: 0, kind: input, shape index: {}]
  %s1 = inlined_call_operand.hbm [shape: bf16[128,128], index: 1, kind: input, shape index: {}]
  %s2 = inlined_call_operand.vmem [shape: f32[1,128], index: 2, kind: input, shape index: {}]
  %s3 = inlined_call_operand.hbm [shape: bf16[128,128], index: 3, kind: input, shape index: {}]
  %s4 = inlined_call_operand.vmem [shape: f32[1,128], index: 4, kind: input, shape index: {}]
  %s5 = inlined_call_operand.hbm [shape: f32[512,128], index: 5, kind: output, shape index: {0}]
  %s6 = inlined_call_operand.hbm [shape: bf16[512,128], index: 6, kind: output, shape index: {1}]
  %s7 = inlined_call_operand.hbm [shape: bf16[128,512], index: 7, kind: output, shape index: {2}]
  %8 = xla_tuple %s5, %s6, %s7
  %s9 = sld [smem:[#allocation0]]
  $region81: #{tpu_custom_call.1} parent=0
    _
  %s11 = ssub.s32 1, %s9
  %s12 = scalar_select 0, %s11, %s9
  $region1: #{tpu_custom_call.1} parent=0
    #allocation2 [shape = 'u8[131072]{0}', space=vmem, size = 0x20000, scoped, tag = 'input window, operand 0']
    #allocation3 [shape = 's32[2]{0}', space=sflag, size = 0x8, scoped, tag = 'scoped memory for tpu_custom_call.1']
    #allocation4 [shape = 's32[2]{0}', space=sflag, size = 0x8, scoped, tag = 'scoped memory for tpu_custom_call.1']
    #allocation5 [shape = 'u8[32768]{0}', space=vmem, size = 0x8000, scoped, tag = 'input window, operand 1, single buffered']
    #allocation6 [shape = 's32[1]{0}', space=sflag, size = 0x4, scoped, tag = 'scoped memory for tpu_custom_call.1']
    #allocation7 [shape = 'u8[32768]{0}', space=vmem, size = 0x8000, scoped, tag = 'input window, operand 3, single buffered']
    #allocation8 [shape = 'u8[262144]{0}', space=vmem, size = 0x40000, scoped, tag = 'output window, operand 0']
    #allocation9 [shape = 'u8[131072]{0}', space=vmem, size = 0x20000, scoped, tag = 'output window, operand 1']
    #allocation10 [shape = 's32[2]{0}', space=sflag, size = 0x8, scoped, tag = 'scoped memory for tpu_custom_call.1']
    #allocation11 [shape = 'u8[131072]{0}', space=vmem, size = 0x20000, scoped, tag = 'output window, operand 2']
    %13 = vsyncpa [#allocation3], 0
    %s14 = scalar_lea.sflag [#allocation3], 1
    %15 = vsyncpa %s14, 0
    %16 = vsyncpa [#allocation6], 0
    %17 = vsyncpa [#allocation4], 0
    %s18 = scalar_lea.sflag [#allocation4], 1
    %19 = vsyncpa %s18, 0
    %20 = vsyncpa [#allocation10], 0
    %s21 = scalar_lea.sflag [#allocation10], 1
    %22 = vsyncpa %s21, 0
    loop: start=0, step=1, limit=4
    $region2: #{tpu_custom_call.1} parent=1 // loop_pre_header
      _
    $region3: #{tpu_custom_call.1} parent=1 // loop_header
      %s24 = sphi 0, %s28
      %p25 = scmp.ge.s32.totalorder %s24, 4
      %s34 = sphi 0, %s36
      %s37 = sphi 0, %s34
      %s38 = sphi 0, %s37
      %s54 = sphi 0, %s38
      %s58 = sphi 0, %s58
      %s60 = sphi 0, %s58
      %s61 = sphi 0, %s60
      %s75 = sphi 0, %s61
      %s79 = sphi 0, %s79
      %s81 = sphi 0, %s79
      %s82 = sphi 0, %s81
      %s96 = sphi 0, %s82
      %s100 = sphi 0, %s100
      %s102 = sphi 0, %s100
      %s103 = sphi 0, %s102
      %s117 = sphi 0, %s103
      %s121 = sphi 0, %s121
      %s123 = sphi 0, %s121
      %s124 = sphi 0, %s123
      %s138 = sphi 0, %s124
      %s144 = sphi 0, %s146
      %s147 = sphi 0, %s144
      %s148 = sphi 0, %s147
      %s164 = sphi 0, %s148
      %s170 = sphi 0, %s172
      %s173 = sphi 0, %s170
      %s174 = sphi 0, %s173
      %s190 = sphi 0, %s174
      %s196 = sphi 0, %s198
      %s199 = sphi 0, %s196
      %s200 = sphi 0, %s199
      %s216 = sphi 0, %s200
    $region4: #{tpu_custom_call.1} parent=1 // loop_header_branch
      %27 = sbr.rel (%p25) target = $region8
    $region5: #{tpu_custom_call.1} parent=1 // loop_body
      %s29 = ssub.s32 %s24, 1
      %s30 = ssub.s32 %s24, 2
      %s31 = sadd.s32 %s24, 1
      %s32 = ssub.s32 %s24, %s31
      %p33 = scmp.eq.s32.totalorder %s32, 0
      %s35 = sadd.s32 %s34, 1
      %s36 = scalar_select %p33, %s34, %s35
      %p39 = pneg %p33
      %p40 = scmp.eq.s32.totalorder %s24, 1
      %p41 = por %p39, %p40
      %p42 = scmp.ne.s32.totalorder %s34, %s37
      %p43 = scmp.eq.s32.totalorder %s24, 0
      %p44 = por %p42, %p43
      %p45 = scmp.ne.s32.totalorder %s34, %s37
      %p46 = scmp.eq.s32.totalorder %s29, 1
      %p47 = por %p45, %p46
      %p48 = scmp.ne.s32.totalorder %s37, %s38
      %p49 = scmp.eq.s32.totalorder %s29, 0
      %p50 = por %p48, %p49
      %p51 = scmp.ne.s32.totalorder %s37, %s38
      %p52 = scmp.eq.s32.totalorder %s30, 1
      %p53 = por %p51, %p52
      %p55 = scmp.ne.s32.totalorder %s38, %s54
      %p56 = scmp.eq.s32.totalorder %s30, 0
      %p57 = por %p55, %p56
      %s59 = sadd.s32 %s58, 1
      %p62 = scmp.eq.s32.totalorder %s24, 1
      %p63 = scmp.ne.s32.totalorder %s58, %s60
      %p64 = scmp.eq.s32.totalorder %s24, 0
      %p65 = por %p63, %p64
      %p66 = scmp.ne.s32.totalorder %s58, %s60
      %p67 = scmp.eq.s32.totalorder %s29, 1
      %p68 = por %p66, %p67
      %p69 = scmp.ne.s32.totalorder %s60, %s61
      %p70 = scmp.eq.s32.totalorder %s29, 0
      %p71 = por %p69, %p70
      %p72 = scmp.ne.s32.totalorder %s60, %s61
      %p73 = scmp.eq.s32.totalorder %s30, 1
      %p74 = por %p72, %p73
      %p76 = scmp.ne.s32.totalorder %s61, %s75
      %p77 = scmp.eq.s32.totalorder %s30, 0
      %p78 = por %p76, %p77
      %s80 = sadd.s32 %s79, 1
      %p83 = scmp.eq.s32.totalorder %s24, 1
      %p84 = scmp.ne.s32.totalorder %s79, %s81
      %p85 = scmp.eq.s32.totalorder %s24, 0
      %p86 = por %p84, %p85
      %p87 = scmp.ne.s32.totalorder %s79, %s81
      %p88 = scmp.eq.s32.totalorder %s29, 1
      %p89 = por %p87, %p88
      %p90 = scmp.ne.s32.totalorder %s81, %s82
      %p91 = scmp.eq.s32.totalorder %s29, 0
      %p92 = por %p90, %p91
      %p93 = scmp.ne.s32.totalorder %s81, %s82
      %p94 = scmp.eq.s32.totalorder %s30, 1
      %p95 = por %p93, %p94
      %p97 = scmp.ne.s32.totalorder %s82, %s96
      %p98 = scmp.eq.s32.totalorder %s30, 0
      %p99 = por %p97, %p98
      %s101 = sadd.s32 %s100, 1
      %p104 = scmp.eq.s32.totalorder %s24, 1
      %p105 = scmp.ne.s32.totalorder %s100, %s102
      %p106 = scmp.eq.s32.totalorder %s24, 0
      %p107 = por %p105, %p106
      %p108 = scmp.ne.s32.totalorder %s100, %s102
      %p109 = scmp.eq.s32.totalorder %s29, 1
      %p110 = por %p108, %p109
      %p111 = scmp.ne.s32.totalorder %s102, %s103
      %p112 = scmp.eq.s32.totalorder %s29, 0
      %p113 = por %p111, %p112
      %p114 = scmp.ne.s32.totalorder %s102, %s103
      %p115 = scmp.eq.s32.totalorder %s30, 1
      %p116 = por %p114, %p115
      %p118 = scmp.ne.s32.totalorder %s103, %s117
      %p119 = scmp.eq.s32.totalorder %s30, 0
      %p120 = por %p118, %p119
      %s122 = sadd.s32 %s121, 1
      %p125 = scmp.eq.s32.totalorder %s24, 1
      %p126 = scmp.ne.s32.totalorder %s121, %s123
      %p127 = scmp.eq.s32.totalorder %s24, 0
      %p128 = por %p126, %p127
      %p129 = scmp.ne.s32.totalorder %s121, %s123
      %p130 = scmp.eq.s32.totalorder %s29, 1
      %p131 = por %p129, %p130
      %p132 = scmp.ne.s32.totalorder %s123, %s124
      %p133 = scmp.eq.s32.totalorder %s29, 0
      %p134 = por %p132, %p133
      %p135 = scmp.ne.s32.totalorder %s123, %s124
      %p136 = scmp.eq.s32.totalorder %s30, 1
      %p137 = por %p135, %p136
      %p139 = scmp.ne.s32.totalorder %s124, %s138
      %p140 = scmp.eq.s32.totalorder %s30, 0
      %p141 = por %p139, %p140
      %s142 = ssub.s32 %s24, %s31
      %p143 = scmp.eq.s32.totalorder %s142, 0
      %s145 = sadd.s32 %s144, 1
      %s146 = scalar_select %p143, %s144, %s145
      %p149 = pneg %p143
      %p150 = scmp.eq.s32.totalorder %s24, 1
      %p151 = por %p149, %p150
      %p152 = scmp.ne.s32.totalorder %s144, %s147
      %p153 = scmp.eq.s32.totalorder %s24, 0
      %p154 = por %p152, %p153
      %p155 = scmp.ne.s32.totalorder %s144, %s147
      %p156 = scmp.eq.s32.totalorder %s29, 1
      %p157 = por %p155, %p156
      %p158 = scmp.ne.s32.totalorder %s147, %s148
      %p159 = scmp.eq.s32.totalorder %s29, 0
      %p160 = por %p158, %p159
      %p161 = scmp.ne.s32.totalorder %s147, %s148
      %p162 = scmp.eq.s32.totalorder %s30, 1
      %p163 = por %p161, %p162
      %p165 = scmp.ne.s32.totalorder %s148, %s164
      %p166 = scmp.eq.s32.totalorder %s30, 0
      %p167 = por %p165, %p166
      %s168 = ssub.s32 %s24, %s31
      %p169 = scmp.eq.s32.totalorder %s168, 0
      %s171 = sadd.s32 %s170, 1
      %s172 = scalar_select %p169, %s170, %s171
      %p175 = pneg %p169
      %p176 = scmp.eq.s32.totalorder %s24, 1
      %p177 = por %p175, %p176
      %p178 = scmp.ne.s32.totalorder %s170, %s173
      %p179 = scmp.eq.s32.totalorder %s24, 0
      %p180 = por %p178, %p179
      %p181 = scmp.ne.s32.totalorder %s170, %s173
      %p182 = scmp.eq.s32.totalorder %s29, 1
      %p183 = por %p181, %p182
      %p184 = scmp.ne.s32.totalorder %s173, %s174
      %p185 = scmp.eq.s32.totalorder %s29, 0
      %p186 = por %p184, %p185
      %p187 = scmp.ne.s32.totalorder %s173, %s174
      %p188 = scmp.eq.s32.totalorder %s30, 1
      %p189 = por %p187, %p188
      %p191 = scmp.ne.s32.totalorder %s174, %s190
      %p192 = scmp.eq.s32.totalorder %s30, 0
      %p193 = por %p191, %p192
      %s194 = ssub.s32 %s24, %s31
      %p195 = scmp.eq.s32.totalorder %s194, 0
      %s197 = sadd.s32 %s196, 1
      %s198 = scalar_select %p195, %s196, %s197
      %p201 = pneg %p195
      %p202 = scmp.eq.s32.totalorder %s24, 1
      %p203 = por %p201, %p202
      %p204 = scmp.ne.s32.totalorder %s196, %s199
      %p205 = scmp.eq.s32.totalorder %s24, 0
      %p206 = por %p204, %p205
      %p207 = scmp.ne.s32.totalorder %s196, %s199
      %p208 = scmp.eq.s32.totalorder %s29, 1
      %p209 = por %p207, %p208
      %p210 = scmp.ne.s32.totalorder %s199, %s200
      %p211 = scmp.eq.s32.totalorder %s29, 0
      %p212 = por %p210, %p211
      %p213 = scmp.ne.s32.totalorder %s199, %s200
      %p214 = scmp.eq.s32.totalorder %s30, 1
      %p215 = por %p213, %p214
      %p217 = scmp.ne.s32.totalorder %s200, %s216
      %p218 = scmp.eq.s32.totalorder %s30, 0
      %p219 = por %p217, %p218
      %p220 = scmp.le.s32.totalorder 1, %s24
      %p221 = scmp.lt.s32.totalorder %s24, 3
      %p222 = pnand %p220, %p221
      %p223 = pneg %p222
      // Predicated region
      $region9: #{tpu_custom_call.1} parent=5 // pred_check
        _
      $region10: #{tpu_custom_call.1} parent=5 // pred_check_branch
        %225 = sbr.rel (%p222) target = $region12
      $region11: #{tpu_custom_call.1} parent=5 // pred_region
        %s226 = ssub.s32 %s24, 1
        // Predicated region
        $region13: #{tpu_custom_call.1} parent=11 // pred_check
          %p227 = pneg %p71
        $region14: #{tpu_custom_call.1} parent=11 // pred_check_branch
          %229 = sbr.rel (%p227) target = $region16
        $region15: #{tpu_custom_call.1} parent=11 // pred_region
          %231 = vsyncadd [#allocation6], 0
          %s232 = sshll.u32 %s1, 4
          %s233 = int_to_ptr.hbm [resolvable:$true] %s232
          %s234 = sshll.u32 [#allocation5], 4
          %s235 = int_to_ptr.vmem [resolvable:$true] %s234
          %240 = dma.hbm_to_vmem [thread:$0]  %s233, 1024, %s235, [#allocation6], 64, 64, 4
        $region16: #{tpu_custom_call.1} parent=11 // pred_fallthru
          _
        // Predicated region
        $region17: #{tpu_custom_call.1} parent=11 // pred_check
          %p241 = pneg %p92
        $region18: #{tpu_custom_call.1} parent=11 // pred_check_branch
          %243 = sbr.rel (%p241) target = $region20
        $region19: #{tpu_custom_call.1} parent=11 // pred_region
          _
        $region20: #{tpu_custom_call.1} parent=11 // pred_fallthru
          _
        // Predicated region
        $region21: #{tpu_custom_call.1} parent=11 // pred_check
          %p244 = pneg %p113
        $region22: #{tpu_custom_call.1} parent=11 // pred_check_branch
          %246 = sbr.rel (%p244) target = $region24
        $region23: #{tpu_custom_call.1} parent=11 // pred_region
          %248 = vsyncadd [#allocation6], 0
          %s249 = sshll.u32 %s3, 4
          %s250 = int_to_ptr.hbm [resolvable:$true] %s249
          %s251 = sshll.u32 [#allocation7], 4
          %s252 = int_to_ptr.vmem [resolvable:$true] %s251
          %257 = dma.hbm_to_vmem [thread:$0]  %s250, 1024, %s252, [#allocation6], 64, 64, 4
        $region24: #{tpu_custom_call.1} parent=11 // pred_fallthru
          _
        // Predicated region
        $region25: #{tpu_custom_call.1} parent=11 // pred_check
          %p258 = pneg %p134
        $region26: #{tpu_custom_call.1} parent=11 // pred_check_branch
          %260 = sbr.rel (%p258) target = $region28
        $region27: #{tpu_custom_call.1} parent=11 // pred_region
          _
        $region28: #{tpu_custom_call.1} parent=11 // pred_fallthru
          _
      $region12: #{tpu_custom_call.1} parent=5 // pred_fallthru
        _
      %p261 = scmp.lt.s32.totalorder %s24, 2
      // Predicated region
      $region29: #{tpu_custom_call.1} parent=5 // pred_check
        %p262 = pneg %p261
      $region30: #{tpu_custom_call.1} parent=5 // pred_check_branch
        %264 = sbr.rel (%p262) target = $region32
      $region31: #{tpu_custom_call.1} parent=5 // pred_region
        // Predicated region
        $region33: #{tpu_custom_call.1} parent=31 // pred_check
          %p265 = pneg %p44
        $region34: #{tpu_custom_call.1} parent=31 // pred_check_branch
          %267 = sbr.rel (%p265) target = $region36
        $region35: #{tpu_custom_call.1} parent=31 // pred_region
          %s268 = sand.u32 %s34, 1
          %s269 = scalar_lea.sflag [#allocation3], %s268
          %s270 = sand.u32 %s34, 1
          %s271 = smul.addr %s270, 128
          %s272 = scalar_lea.vmem [#allocation2], %s271
          %s273 = smul.u32 32, %s24
          %275 = vsyncadd %s269, 0
          %s276 = smul.addr %s273, 4
          %s277 = scalar_lea.hbm %s0, %s276
          %s278 = sshll.u32 %s277, 4
          %s279 = int_to_ptr.hbm [resolvable:$true] %s278
          %s280 = sshll.u32 %s272, 4
          %s281 = int_to_ptr.vmem [resolvable:$true] %s280
          %286 = dma.hbm_to_vmem [thread:$0]  %s279, 2048, %s281, %s269, 64, 64, 4
        $region36: #{tpu_custom_call.1} parent=31 // pred_fallthru
          _
      $region32: #{tpu_custom_call.1} parent=5 // pred_fallthru
        _
      %p287 = scmp.le.s32.totalorder 1, %s24
      %p288 = scmp.lt.s32.totalorder %s24, 3
      %p289 = pnand %p287, %p288
      %p290 = pneg %p289
      // Predicated region
      $region37: #{tpu_custom_call.1} parent=5 // pred_check
        _
      $region38: #{tpu_custom_call.1} parent=5 // pred_check_branch
        %292 = sbr.rel (%p289) target = $region40
      $region39: #{tpu_custom_call.1} parent=5 // pred_region
        %s293 = ssub.s32 %s24, 1
        %s294 = sand.u32 %s37, 1
        %s295 = scalar_lea.sflag [#allocation3], %s294
        %s296 = sand.u32 %s37, 1
        %s297 = smul.addr %s296, 128
        %s298 = scalar_lea.vmem [#allocation2], %s297
        // Predicated region
        $region41: #{tpu_custom_call.1} parent=39 // pred_check
          %p299 = pneg %p50
        $region42: #{tpu_custom_call.1} parent=39 // pred_check_branch
          %301 = sbr.rel (%p299) target = $region44
        $region43: #{tpu_custom_call.1} parent=39 // pred_region
          %303 = dma.done %s295, 2048
        $region44: #{tpu_custom_call.1} parent=39 // pred_fallthru
          _
        // Predicated region
        $region45: #{tpu_custom_call.1} parent=39 // pred_check
          %p304 = pneg %p71
        $region46: #{tpu_custom_call.1} parent=39 // pred_check_branch
          %306 = sbr.rel (%p304) target = $region48
        $region47: #{tpu_custom_call.1} parent=39 // pred_region
          %308 = dma.done [#allocation6], 1024
        $region48: #{tpu_custom_call.1} parent=39 // pred_fallthru
          _
        // Predicated region
        $region49: #{tpu_custom_call.1} parent=39 // pred_check
          %p309 = pneg %p113
        $region50: #{tpu_custom_call.1} parent=39 // pred_check_branch
          %311 = sbr.rel (%p309) target = $region52
        $region51: #{tpu_custom_call.1} parent=39 // pred_region
          %313 = dma.done [#allocation6], 1024
        $region52: #{tpu_custom_call.1} parent=39 // pred_fallthru
          _
        %s314 = sand.u32 %s37, 1
        %s315 = scalar_lea.sflag [#allocation3], %s314
        %s316 = sand.u32 %s37, 1
        %s317 = smul.addr %s316, 128
        %s318 = scalar_lea.vmem [#allocation2], %s317
        %p319 = pneg %p50
        %p320 = pneg %p47
        %p321 = pneg %p71
        %p322 = pneg %p68
        %p323 = pneg %p92
        %p324 = pneg %p89
        %p325 = pneg %p113
        %p326 = pneg %p110
        %p327 = pneg %p134
        %p328 = pneg %p131
        %p329 = pneg %p160
        %p330 = pneg %p157
        %s331 = sand.u32 %s147, 1
        %s332 = scalar_lea.sflag [#allocation4], %s331
        %s333 = sand.u32 %s147, 1
        %s334 = smul.addr %s333, 256
        %s335 = scalar_lea.vmem [#allocation8], %s334
        %p336 = pneg %p186
        %p337 = pneg %p183
        %s338 = sand.u32 %s29, 1
        %s339 = scalar_lea.sflag [#allocation10], %s338
        %s340 = sand.u32 %s173, 1
        %s341 = smul.addr %s340, 128
        %s342 = scalar_lea.vmem [#allocation9], %s341
        %p343 = pneg %p212
        %p344 = pneg %p209
        %s345 = sand.u32 %s29, 1
        %s346 = scalar_lea.sflag [#allocation10], %s345
        %s347 = sand.u32 %s199, 1
        %s348 = smul.addr %s347, 128
        %s349 = scalar_lea.vmem [#allocation11], %s348
        %s350 = smul.u32 32, %s29
        %s351 = smul.u32 32, %s29
        %s352 = smul.u32 32, %s29
        %s353 = smul.u32 2, %s29
        %v354 = vld [vmem:[%s298] sm:$0xf]
        %v355 = vld [vmem:[%s298 + $0x4] sm:$0xf]
        %v356 = vld [vmem:[%s298 + $0x8] sm:$0xf]
        %v357 = vld [vmem:[%s298 + $0xc] sm:$0xf]
        %v358 = vld [vmem:[%s298 + $0x10] sm:$0xf]
        %v359 = vld [vmem:[%s298 + $0x14] sm:$0xf]
        %v360 = vld [vmem:[%s298 + $0x18] sm:$0xf]
        %v361 = vld [vmem:[%s298 + $0x1c] sm:$0xf]
        %v362 = vld [vmem:[%s298 + $0x20] sm:$0xf]
        %v363 = vld [vmem:[%s298 + $0x24] sm:$0xf]
        %v364 = vld [vmem:[%s298 + $0x28] sm:$0xf]
        %v365 = vld [vmem:[%s298 + $0x2c] sm:$0xf]
        %v366 = vld [vmem:[%s298 + $0x30] sm:$0xf]
        %v367 = vld [vmem:[%s298 + $0x34] sm:$0xf]
        %v368 = vld [vmem:[%s298 + $0x38] sm:$0xf]
        %v369 = vld [vmem:[%s298 + $0x3c] sm:$0xf]
        %v370 = vld [vmem:[%s298 + $0x40] sm:$0xf]
        %v371 = vld [vmem:[%s298 + $0x44] sm:$0xf]
        %v372 = vld [vmem:[%s298 + $0x48] sm:$0xf]
        %v373 = vld [vmem:[%s298 + $0x4c] sm:$0xf]
        %v374 = vld [vmem:[%s298 + $0x50] sm:$0xf]
        %v375 = vld [vmem:[%s298 + $0x54] sm:$0xf]
        %v376 = vld [vmem:[%s298 + $0x58] sm:$0xf]
        %v377 = vld [vmem:[%s298 + $0x5c] sm:$0xf]
        %v378 = vld [vmem:[%s298 + $0x60] sm:$0xf]
        %v379 = vld [vmem:[%s298 + $0x64] sm:$0xf]
        %v380 = vld [vmem:[%s298 + $0x68] sm:$0xf]
        %v381 = vld [vmem:[%s298 + $0x6c] sm:$0xf]
        %v382 = vld [vmem:[%s298 + $0x70] sm:$0xf]
        %v383 = vld [vmem:[%s298 + $0x74] sm:$0xf]
        %v384 = vld [vmem:[%s298 + $0x78] sm:$0xf]
        %v385 = vld [vmem:[%s298 + $0x7c] sm:$0xf]
        %v386 = vld [vmem:[#allocation5] sm:$0xf]
        %v387 = vld [vmem:[#allocation5 + $0x4] sm:$0xf]
        %v388 = vld [vmem:[#allocation5 + $0x8] sm:$0xf]
        %v389 = vld [vmem:[#allocation5 + $0xc] sm:$0xf]
        %v390 = vld [vmem:[#allocation5 + $0x10] sm:$0xf]
        %v391 = vld [vmem:[#allocation5 + $0x14] sm:$0xf]
        %v392 = vld [vmem:[#allocation5 + $0x18] sm:$0xf]
        %v393 = vld [vmem:[#allocation5 + $0x1c] sm:$0xf]
        %v394 = vld [vmem:[#allocation5 + $0x20] sm:$0xf]
        %v395 = vld [vmem:[#allocation5 + $0x24] sm:$0xf]
        %v396 = vld [vmem:[#allocation5 + $0x28] sm:$0xf]
        %v397 = vld [vmem:[#allocation5 + $0x2c] sm:$0xf]
        %v398 = vld [vmem:[#allocation5 + $0x30] sm:$0xf]
        %v399 = vld [vmem:[#allocation5 + $0x34] sm:$0xf]
        %v400 = vld [vmem:[#allocation5 + $0x38] sm:$0xf]
        %v401 = vld [vmem:[#allocation5 + $0x3c] sm:$0xf]
        %v402 = vld [vmem:[%s2] sm:$0x1]
        %v404 = vperm.slane %v402, 0
        %v438 = vunpack.c.l.b16 %v354
        %v439 = vunpack.c.l.b16 %v355
        %v440 = vunpack.c.l.b16 %v356
        %v441 = vunpack.c.l.b16 %v357
        %v442 = vunpack.c.l.b16 %v358
        %v443 = vunpack.c.l.b16 %v359
        %v444 = vunpack.c.l.b16 %v360
        %v445 = vunpack.c.l.b16 %v361
        %v446 = vunpack.c.l.b16 %v362
        %v447 = vunpack.c.l.b16 %v363
        %v448 = vunpack.c.l.b16 %v364
        %v449 = vunpack.c.l.b16 %v365
        %v450 = vunpack.c.l.b16 %v366
        %v451 = vunpack.c.l.b16 %v367
        %v452 = vunpack.c.l.b16 %v368
        %v453 = vunpack.c.l.b16 %v369
        %v454 = vunpack.c.l.b16 %v370
        %v455 = vunpack.c.l.b16 %v371
        %v456 = vunpack.c.l.b16 %v372
        %v457 = vunpack.c.l.b16 %v373
        %v458 = vunpack.c.l.b16 %v374
        %v459 = vunpack.c.l.b16 %v375
        %v460 = vunpack.c.l.b16 %v376
        %v461 = vunpack.c.l.b16 %v377
        %v462 = vunpack.c.l.b16 %v378
        %v463 = vunpack.c.l.b16 %v379
        %v464 = vunpack.c.l.b16 %v380
        %v465 = vunpack.c.l.b16 %v381
        %v466 = vunpack.c.l.b16 %v382
        %v467 = vunpack.c.l.b16 %v383
        %v468 = vunpack.c.l.b16 %v384
        %v469 = vunpack.c.l.b16 %v385
        %v470 = vpack.c.b16 %v439, %v438
        %v471 = vpack.c.b16 %v441, %v440
        %v472 = vpack.c.b16 %v443, %v442
        %v473 = vpack.c.b16 %v445, %v444
        %v474 = vpack.c.b16 %v447, %v446
        %v475 = vpack.c.b16 %v449, %v448
        %v476 = vpack.c.b16 %v451, %v450
        %v477 = vpack.c.b16 %v453, %v452
        %v478 = vpack.c.b16 %v455, %v454
        %v479 = vpack.c.b16 %v457, %v456
        %v480 = vpack.c.b16 %v459, %v458
        %v481 = vpack.c.b16 %v461, %v460
        %v482 = vpack.c.b16 %v463, %v462
        %v483 = vpack.c.b16 %v465, %v464
        %v484 = vpack.c.b16 %v467, %v466
        %v485 = vpack.c.b16 %v469, %v468
        %v518 = vunpack.c.l.b16 %v386
        %v519 = vunpack.c.l.b16 %v387
        %v520 = vunpack.c.l.b16 %v388
        %v521 = vunpack.c.l.b16 %v389
        %v522 = vunpack.c.l.b16 %v390
        %v523 = vunpack.c.l.b16 %v391
        %v524 = vunpack.c.l.b16 %v392
        %v525 = vunpack.c.l.b16 %v393
        %v526 = vunpack.c.l.b16 %v394
        %v527 = vunpack.c.l.b16 %v395
        %v528 = vunpack.c.l.b16 %v396
        %v529 = vunpack.c.l.b16 %v397
        %v530 = vunpack.c.l.b16 %v398
        %v531 = vunpack.c.l.b16 %v399
        %v532 = vunpack.c.l.b16 %v400
        %v533 = vunpack.c.l.b16 %v401
        %v534 = vpack.c.b16 %v519, %v518
        %v535 = vpack.c.b16 %v521, %v520
        %v536 = vpack.c.b16 %v523, %v522
        %v537 = vpack.c.b16 %v525, %v524
        %v538 = vpack.c.b16 %v527, %v526
        %v539 = vpack.c.b16 %v529, %v528
        %v540 = vpack.c.b16 %v531, %v530
        %v541 = vpack.c.b16 %v533, %v532
        %550 = vmatpush.bf16.msra.mxu0 %v541
        %551 = vmatpush.bf16.msra.mxu0 %v540
        %552 = vmatpush.bf16.msra.mxu0 %v539
        %553 = vmatpush.bf16.msra.mxu0 %v538
        %554 = vmatpush.bf16.msra.mxu0 %v537
        %555 = vmatpush.bf16.msra.mxu0 %v536
        %556 = vmatpush.bf16.msra.mxu0 %v535
        %557 = vmatpush.bf16.msra.mxu0 %v534
        %558 = vmatmul.bf16.gmra.mxu0 %v470
        %v559 = vpop.f32.mrf.mxu0
        %v560 = vadd.f32 %v404, %v559
        %v561 = vpop.f32.mrf.mxu0
        %v562 = vadd.f32 %v404, %v561
        %563 = vmatmul.bf16.gmra.mxu0 %v471
        %v564 = vpop.f32.mrf.mxu0
        %v565 = vadd.f32 %v404, %v564
        %v566 = vpop.f32.mrf.mxu0
        %v567 = vadd.f32 %v404, %v566
        %568 = vmatmul.bf16.gmra.mxu0 %v472
        %v569 = vpop.f32.mrf.mxu0
        %v570 = vadd.f32 %v404, %v569
        %v571 = vpop.f32.mrf.mxu0
        %v572 = vadd.f32 %v404, %v571
        %573 = vmatmul.bf16.gmra.mxu0 %v473
        %v574 = vpop.f32.mrf.mxu0
        %v575 = vadd.f32 %v404, %v574
        %v576 = vpop.f32.mrf.mxu0
        %v577 = vadd.f32 %v404, %v576
        %578 = vmatmul.bf16.gmra.mxu0 %v474
        %v579 = vpop.f32.mrf.mxu0
        %v580 = vadd.f32 %v404, %v579
        %v581 = vpop.f32.mrf.mxu0
        %v582 = vadd.f32 %v404, %v581
        %583 = vmatmul.bf16.gmra.mxu0 %v475
        %v584 = vpop.f32.mrf.mxu0
        %v585 = vadd.f32 %v404, %v584
        %v586 = vpop.f32.mrf.mxu0
        %v587 = vadd.f32 %v404, %v586
        %588 = vmatmul.bf16.gmra.mxu0 %v476
        %v589 = vpop.f32.mrf.mxu0
        %v590 = vadd.f32 %v404, %v589
        %v591 = vpop.f32.mrf.mxu0
        %v592 = vadd.f32 %v404, %v591
        %593 = vmatmul.bf16.gmra.mxu0 %v477
        %v594 = vpop.f32.mrf.mxu0
        %v595 = vadd.f32 %v404, %v594
        %v596 = vpop.f32.mrf.mxu0
        %v597 = vadd.f32 %v404, %v596
        %598 = vmatmul.bf16.gmra.mxu0 %v478
        %v599 = vpop.f32.mrf.mxu0
        %v600 = vadd.f32 %v404, %v599
        %v601 = vpop.f32.mrf.mxu0
        %v602 = vadd.f32 %v404, %v601
        %603 = vmatmul.bf16.gmra.mxu0 %v479
        %v604 = vpop.f32.mrf.mxu0
        %v605 = vadd.f32 %v404, %v604
        %v606 = vpop.f32.mrf.mxu0
        %v607 = vadd.f32 %v404, %v606
        %608 = vmatmul.bf16.gmra.mxu0 %v480
        %v609 = vpop.f32.mrf.mxu0
        %v610 = vadd.f32 %v404, %v609
        %v611 = vpop.f32.mrf.mxu0
        %v612 = vadd.f32 %v404, %v611
        %613 = vmatmul.bf16.gmra.mxu0 %v481
        %v614 = vpop.f32.mrf.mxu0
        %v615 = vadd.f32 %v404, %v614
        %v616 = vpop.f32.mrf.mxu0
        %v617 = vadd.f32 %v404, %v616
        %618 = vmatmul.bf16.gmra.mxu0 %v482
        %v619 = vpop.f32.mrf.mxu0
        %v620 = vadd.f32 %v404, %v619
        %v621 = vpop.f32.mrf.mxu0
        %v622 = vadd.f32 %v404, %v621
        %623 = vmatmul.bf16.gmra.mxu0 %v483
        %v624 = vpop.f32.mrf.mxu0
        %v625 = vadd.f32 %v404, %v624
        %v626 = vpop.f32.mrf.mxu0
        %v627 = vadd.f32 %v404, %v626
        %628 = vmatmul.bf16.gmra.mxu0 %v484
        %v629 = vpop.f32.mrf.mxu0
        %v630 = vadd.f32 %v404, %v629
        %v631 = vpop.f32.mrf.mxu0
        %v632 = vadd.f32 %v404, %v631
        %633 = vmatmul.bf16.gmra.mxu0 %v485
        %v634 = vpop.f32.mrf.mxu0
        %v635 = vadd.f32 %v404, %v634
        %v636 = vpop.f32.mrf.mxu0
        %v637 = vadd.f32 %v404, %v636
        %638 = vdwg.mxu0
        %v639 = vmax.f32 %v560, 0.0
        %v640 = vmax.f32 %v562, 0.0
        %v641 = vmax.f32 %v565, 0.0
        %v642 = vmax.f32 %v567, 0.0
        %v643 = vmax.f32 %v570, 0.0
        %v644 = vmax.f32 %v572, 0.0
        %v645 = vmax.f32 %v575, 0.0
        %v646 = vmax.f32 %v577, 0.0
        %v647 = vmax.f32 %v580, 0.0
        %v648 = vmax.f32 %v582, 0.0
        %v649 = vmax.f32 %v585, 0.0
        %v650 = vmax.f32 %v587, 0.0
        %v651 = vmax.f32 %v590, 0.0
        %v652 = vmax.f32 %v592, 0.0
        %v653 = vmax.f32 %v595, 0.0
        %v654 = vmax.f32 %v597, 0.0
        %v655 = vmax.f32 %v600, 0.0
        %v656 = vmax.f32 %v602, 0.0
        %v657 = vmax.f32 %v605, 0.0
        %v658 = vmax.f32 %v607, 0.0
        %v659 = vmax.f32 %v610, 0.0
        %v660 = vmax.f32 %v612, 0.0
        %v661 = vmax.f32 %v615, 0.0
        %v662 = vmax.f32 %v617, 0.0
        %v663 = vmax.f32 %v620, 0.0
        %v664 = vmax.f32 %v622, 0.0
        %v665 = vmax.f32 %v625, 0.0
        %v666 = vmax.f32 %v627, 0.0
        %v667 = vmax.f32 %v630, 0.0
        %v668 = vmax.f32 %v632, 0.0
        %v669 = vmax.f32 %v635, 0.0
        %v670 = vmax.f32 %v637, 0.0
        %v671 = vpack.c.bf16 %v640, %v639
        %v672 = vpack.c.bf16 %v642, %v641
        %v673 = vpack.c.bf16 %v644, %v643
        %v674 = vpack.c.bf16 %v646, %v645
        %v675 = vpack.c.bf16 %v648, %v647
        %v676 = vpack.c.bf16 %v650, %v649
        %v677 = vpack.c.bf16 %v652, %v651
        %v678 = vpack.c.bf16 %v654, %v653
        %v679 = vpack.c.bf16 %v656, %v655
        %v680 = vpack.c.bf16 %v658, %v657
        %v681 = vpack.c.bf16 %v660, %v659
        %v682 = vpack.c.bf16 %v662, %v661
        %v683 = vpack.c.bf16 %v664, %v663
        %v684 = vpack.c.bf16 %v666, %v665
        %v685 = vpack.c.bf16 %v668, %v667
        %v686 = vpack.c.bf16 %v670, %v669
        %v687 = vld [vmem:[#allocation7] sm:$0xf]
        %v688 = vld [vmem:[#allocation7 + $0x4] sm:$0xf]
        %v689 = vld [vmem:[#allocation7 + $0x8] sm:$0xf]
        %v690 = vld [vmem:[#allocation7 + $0xc] sm:$0xf]
        %v691 = vld [vmem:[#allocation7 + $0x10] sm:$0xf]
        %v692 = vld [vmem:[#allocation7 + $0x14] sm:$0xf]
        %v693 = vld [vmem:[#allocation7 + $0x18] sm:$0xf]
        %v694 = vld [vmem:[#allocation7 + $0x1c] sm:$0xf]
        %v695 = vld [vmem:[#allocation7 + $0x20] sm:$0xf]
        %v696 = vld [vmem:[#allocation7 + $0x24] sm:$0xf]
        %v697 = vld [vmem:[#allocation7 + $0x28] sm:$0xf]
        %v698 = vld [vmem:[#allocation7 + $0x2c] sm:$0xf]
        %v699 = vld [vmem:[#allocation7 + $0x30] sm:$0xf]
        %v700 = vld [vmem:[#allocation7 + $0x34] sm:$0xf]
        %v701 = vld [vmem:[#allocation7 + $0x38] sm:$0xf]
        %v702 = vld [vmem:[#allocation7 + $0x3c] sm:$0xf]
        %v703 = vld [vmem:[%s4] sm:$0x1]
        %v705 = vperm.slane %v703, 0
        %v723 = vunpack.c.l.b16 %v687
        %v724 = vunpack.c.l.b16 %v688
        %v725 = vunpack.c.l.b16 %v689
        %v726 = vunpack.c.l.b16 %v690
        %v727 = vunpack.c.l.b16 %v691
        %v728 = vunpack.c.l.b16 %v692
        %v729 = vunpack.c.l.b16 %v693
        %v730 = vunpack.c.l.b16 %v694
        %v731 = vunpack.c.l.b16 %v695
        %v732 = vunpack.c.l.b16 %v696
        %v733 = vunpack.c.l.b16 %v697
        %v734 = vunpack.c.l.b16 %v698
        %v735 = vunpack.c.l.b16 %v699
        %v736 = vunpack.c.l.b16 %v700
        %v737 = vunpack.c.l.b16 %v701
        %v738 = vunpack.c.l.b16 %v702
        %v739 = vpack.c.b16 %v724, %v723
        %v740 = vpack.c.b16 %v726, %v725
        %v741 = vpack.c.b16 %v728, %v727
        %v742 = vpack.c.b16 %v730, %v729
        %v743 = vpack.c.b16 %v732, %v731
        %v744 = vpack.c.b16 %v734, %v733
        %v745 = vpack.c.b16 %v736, %v735
        %v746 = vpack.c.b16 %v738, %v737
        %755 = vmatpush.bf16.msra.mxu0 %v746
        %756 = vmatpush.bf16.msra.mxu0 %v745
        %757 = vmatpush.bf16.msra.mxu0 %v744
        %758 = vmatpush.bf16.msra.mxu0 %v743
        %759 = vmatpush.bf16.msra.mxu0 %v742
        %760 = vmatpush.bf16.msra.mxu0 %v741
        %761 = vmatpush.bf16.msra.mxu0 %v740
        %762 = vmatpush.bf16.msra.mxu0 %v739
        %763 = vmatmul.bf16.gmra.mxu0 %v671
        %v764 = vpop.f32.mrf.mxu0
        %v765 = vadd.f32 %v705, %v764
        %v766 = vpop.f32.mrf.mxu0
        %v767 = vadd.f32 %v705, %v766
        %768 = vmatmul.bf16.gmra.mxu0 %v672
        %v769 = vpop.f32.mrf.mxu0
        %v770 = vadd.f32 %v705, %v769
        %v771 = vpop.f32.mrf.mxu0
        %v772 = vadd.f32 %v705, %v771
        %773 = vmatmul.bf16.gmra.mxu0 %v673
        %v774 = vpop.f32.mrf.mxu0
        %v775 = vadd.f32 %v705, %v774
        %v776 = vpop.f32.mrf.mxu0
        %v777 = vadd.f32 %v705, %v776
        %778 = vmatmul.bf16.gmra.mxu0 %v674
        %v779 = vpop.f32.mrf.mxu0
        %v780 = vadd.f32 %v705, %v779
        %v781 = vpop.f32.mrf.mxu0
        %v782 = vadd.f32 %v705, %v781
        %783 = vmatmul.bf16.gmra.mxu0 %v675
        %v784 = vpop.f32.mrf.mxu0
        %v785 = vadd.f32 %v705, %v784
        %v786 = vpop.f32.mrf.mxu0
        %v787 = vadd.f32 %v705, %v786
        %788 = vmatmul.bf16.gmra.mxu0 %v676
        %v789 = vpop.f32.mrf.mxu0
        %v790 = vadd.f32 %v705, %v789
        %v791 = vpop.f32.mrf.mxu0
        %v792 = vadd.f32 %v705, %v791
        %793 = vmatmul.bf16.gmra.mxu0 %v677
        %v794 = vpop.f32.mrf.mxu0
        %v795 = vadd.f32 %v705, %v794
        %v796 = vpop.f32.mrf.mxu0
        %v797 = vadd.f32 %v705, %v796
        %798 = vmatmul.bf16.gmra.mxu0 %v678
        %v799 = vpop.f32.mrf.mxu0
        %v800 = vadd.f32 %v705, %v799
        %v801 = vpop.f32.mrf.mxu0
        %v802 = vadd.f32 %v705, %v801
        %803 = vmatmul.bf16.gmra.mxu0 %v679
        %v804 = vpop.f32.mrf.mxu0
        %v805 = vadd.f32 %v705, %v804
        %v806 = vpop.f32.mrf.mxu0
        %v807 = vadd.f32 %v705, %v806
        %808 = vmatmul.bf16.gmra.mxu0 %v680
        %v809 = vpop.f32.mrf.mxu0
        %v810 = vadd.f32 %v705, %v809
        %v811 = vpop.f32.mrf.mxu0
        %v812 = vadd.f32 %v705, %v811
        %813 = vmatmul.bf16.gmra.mxu0 %v681
        %v814 = vpop.f32.mrf.mxu0
        %v815 = vadd.f32 %v705, %v814
        %v816 = vpop.f32.mrf.mxu0
        %v817 = vadd.f32 %v705, %v816
        %818 = vmatmul.bf16.gmra.mxu0 %v682
        %v819 = vpop.f32.mrf.mxu0
        %v820 = vadd.f32 %v705, %v819
        %v821 = vpop.f32.mrf.mxu0
        %v822 = vadd.f32 %v705, %v821
        %823 = vmatmul.bf16.gmra.mxu0 %v683
        %v824 = vpop.f32.mrf.mxu0
        %v825 = vadd.f32 %v705, %v824
        %v826 = vpop.f32.mrf.mxu0
        %v827 = vadd.f32 %v705, %v826
        %828 = vmatmul.bf16.gmra.mxu0 %v684
        %v829 = vpop.f32.mrf.mxu0
        %v830 = vadd.f32 %v705, %v829
        %v831 = vpop.f32.mrf.mxu0
        %v832 = vadd.f32 %v705, %v831
        %833 = vmatmul.bf16.gmra.mxu0 %v685
        %v834 = vpop.f32.mrf.mxu0
        %v835 = vadd.f32 %v705, %v834
        %v836 = vpop.f32.mrf.mxu0
        %v837 = vadd.f32 %v705, %v836
        %838 = vmatmul.bf16.gmra.mxu0 %v686
        %v839 = vpop.f32.mrf.mxu0
        %v840 = vadd.f32 %v705, %v839
        %v841 = vpop.f32.mrf.mxu0
        %v842 = vadd.f32 %v705, %v841
        %843 = vdwg.mxu0
        %v844 = vmul.f32 %v765, %v765
        %v845 = vmul.f32 %v767, %v767
        %v846 = vmul.f32 %v770, %v770
        %v847 = vmul.f32 %v772, %v772
        %v848 = vmul.f32 %v775, %v775
        %v849 = vmul.f32 %v777, %v777
        %v850 = vmul.f32 %v780, %v780
        %v851 = vmul.f32 %v782, %v782
        %v852 = vmul.f32 %v785, %v785
        %v853 = vmul.f32 %v787, %v787
        %v854 = vmul.f32 %v790, %v790
        %v855 = vmul.f32 %v792, %v792
        %v856 = vmul.f32 %v795, %v795
        %v857 = vmul.f32 %v797, %v797
        %v858 = vmul.f32 %v800, %v800
        %v859 = vmul.f32 %v802, %v802
        %v860 = vmul.f32 %v805, %v805
        %v861 = vmul.f32 %v807, %v807
        %v862 = vmul.f32 %v810, %v810
        %v863 = vmul.f32 %v812, %v812
        %v864 = vmul.f32 %v815, %v815
        %v865 = vmul.f32 %v817, %v817
        %v866 = vmul.f32 %v820, %v820
        %v867 = vmul.f32 %v822, %v822
        %v868 = vmul.f32 %v825, %v825
        %v869 = vmul.f32 %v827, %v827
        %v870 = vmul.f32 %v830, %v830
        %v871 = vmul.f32 %v832, %v832
        %v872 = vmul.f32 %v835, %v835
        %v873 = vmul.f32 %v837, %v837
        %v874 = vmul.f32 %v840, %v840
        %v875 = vmul.f32 %v842, %v842
        %876 = vadd.xlane.f32.xlu0 %v844
        %v877 = vpop.xlane.xlu0 %876
        %878 = vadd.xlane.f32.xlu0 %v845
        %v879 = vpop.xlane.xlu0 %878
        %880 = vadd.xlane.f32.xlu0 %v846
        %v881 = vpop.xlane.xlu0 %880
        %882 = vadd.xlane.f32.xlu0 %v847
        %v883 = vpop.xlane.xlu0 %882
        %884 = vadd.xlane.f32.xlu0 %v848
        %v885 = vpop.xlane.xlu0 %884
        %886 = vadd.xlane.f32.xlu0 %v849
        %v887 = vpop.xlane.xlu0 %886
        %888 = vadd.xlane.f32.xlu0 %v850
        %v889 = vpop.xlane.xlu0 %888
        %890 = vadd.xlane.f32.xlu0 %v851
        %v891 = vpop.xlane.xlu0 %890
        %892 = vadd.xlane.f32.xlu0 %v852
        %v893 = vpop.xlane.xlu0 %892
        %894 = vadd.xlane.f32.xlu0 %v853
        %v895 = vpop.xlane.xlu0 %894
        %896 = vadd.xlane.f32.xlu0 %v854
        %v897 = vpop.xlane.xlu0 %896
        %898 = vadd.xlane.f32.xlu0 %v855
        %v899 = vpop.xlane.xlu0 %898
        %900 = vadd.xlane.f32.xlu0 %v856
        %v901 = vpop.xlane.xlu0 %900
        %902 = vadd.xlane.f32.xlu0 %v857
        %v903 = vpop.xlane.xlu0 %902
        %904 = vadd.xlane.f32.xlu0 %v858
        %v905 = vpop.xlane.xlu0 %904
        %906 = vadd.xlane.f32.xlu0 %v859
        %v907 = vpop.xlane.xlu0 %906
        %908 = vadd.xlane.f32.xlu0 %v860
        %v909 = vpop.xlane.xlu0 %908
        %910 = vadd.xlane.f32.xlu0 %v861
        %v911 = vpop.xlane.xlu0 %910
        %912 = vadd.xlane.f32.xlu0 %v862
        %v913 = vpop.xlane.xlu0 %912
        %914 = vadd.xlane.f32.xlu0 %v863
        %v915 = vpop.xlane.xlu0 %914
        %916 = vadd.xlane.f32.xlu0 %v864
        %v917 = vpop.xlane.xlu0 %916
        %918 = vadd.xlane.f32.xlu0 %v865
        %v919 = vpop.xlane.xlu0 %918
        %920 = vadd.xlane.f32.xlu0 %v866
        %v921 = vpop.xlane.xlu0 %920
        %922 = vadd.xlane.f32.xlu0 %v867
        %v923 = vpop.xlane.xlu0 %922
        %924 = vadd.xlane.f32.xlu0 %v868
        %v925 = vpop.xlane.xlu0 %924
        %926 = vadd.xlane.f32.xlu0 %v869
        %v927 = vpop.xlane.xlu0 %926
        %928 = vadd.xlane.f32.xlu0 %v870
        %v929 = vpop.xlane.xlu0 %928
        %930 = vadd.xlane.f32.xlu0 %v871
        %v931 = vpop.xlane.xlu0 %930
        %932 = vadd.xlane.f32.xlu0 %v872
        %v933 = vpop.xlane.xlu0 %932
        %934 = vadd.xlane.f32.xlu0 %v873
        %v935 = vpop.xlane.xlu0 %934
        %936 = vadd.xlane.f32.xlu0 %v874
        %v937 = vpop.xlane.xlu0 %936
        %938 = vadd.xlane.f32.xlu0 %v875
        %v939 = vpop.xlane.xlu0 %938
        %v940 = vmax.f32 %v877, 1e-24
        %v941 = vmax.f32 %v879, 1e-24
        %v942 = vmax.f32 %v881, 1e-24
        %v943 = vmax.f32 %v883, 1e-24
        %v944 = vmax.f32 %v885, 1e-24
        %v945 = vmax.f32 %v887, 1e-24
        %v946 = vmax.f32 %v889, 1e-24
        %v947 = vmax.f32 %v891, 1e-24
        %v948 = vmax.f32 %v893, 1e-24
        %v949 = vmax.f32 %v895, 1e-24
        %v950 = vmax.f32 %v897, 1e-24
        %v951 = vmax.f32 %v899, 1e-24
        %v952 = vmax.f32 %v901, 1e-24
        %v953 = vmax.f32 %v903, 1e-24
        %v954 = vmax.f32 %v905, 1e-24
        %v955 = vmax.f32 %v907, 1e-24
        %v956 = vmax.f32 %v909, 1e-24
        %v957 = vmax.f32 %v911, 1e-24
        %v958 = vmax.f32 %v913, 1e-24
        %v959 = vmax.f32 %v915, 1e-24
        %v960 = vmax.f32 %v917, 1e-24
        %v961 = vmax.f32 %v919, 1e-24
        %v962 = vmax.f32 %v921, 1e-24
        %v963 = vmax.f32 %v923, 1e-24
        %v964 = vmax.f32 %v925, 1e-24
        %v965 = vmax.f32 %v927, 1e-24
        %v966 = vmax.f32 %v929, 1e-24
        %v967 = vmax.f32 %v931, 1e-24
        %v968 = vmax.f32 %v933, 1e-24
        %v969 = vmax.f32 %v935, 1e-24
        %v970 = vmax.f32 %v937, 1e-24
        %v971 = vmax.f32 %v939, 1e-24
        %v972 = vrsqrt.pop %v940
        %v973 = vmul.f32 %v972, %v940
        %v974 = vmul.f32 %v973, %v972
        %v975 = vmul.f32 0.5, %v974
        %v976 = vsub.f32 1.5, %v975
        %v977 = vmul.f32 %v972, %v976
        %vm978 = vweird.f32 %v940
        %vm979 = vweird.f32 %v972
        %vm980 = vmor %vm978, %vm979
        %v981 = vsel %vm980, %v972, %v977
        %v982 = vrsqrt.pop %v941
        %v983 = vmul.f32 %v982, %v941
        %v984 = vmul.f32 %v983, %v982
        %v985 = vmul.f32 0.5, %v984
        %v986 = vsub.f32 1.5, %v985
        %v987 = vmul.f32 %v982, %v986
        %vm988 = vweird.f32 %v941
        %vm989 = vweird.f32 %v982
        %vm990 = vmor %vm988, %vm989
        %v991 = vsel %vm990, %v982, %v987
        %v992 = vrsqrt.pop %v942
        %v993 = vmul.f32 %v992, %v942
        %v994 = vmul.f32 %v993, %v992
        %v995 = vmul.f32 0.5, %v994
        %v996 = vsub.f32 1.5, %v995
        %v997 = vmul.f32 %v992, %v996
        %vm998 = vweird.f32 %v942
        %vm999 = vweird.f32 %v992
        %vm1000 = vmor %vm998, %vm999
        %v1001 = vsel %vm1000, %v992, %v997
        %v1002 = vrsqrt.pop %v943
        %v1003 = vmul.f32 %v1002, %v943
        %v1004 = vmul.f32 %v1003, %v1002
        %v1005 = vmul.f32 0.5, %v1004
        %v1006 = vsub.f32 1.5, %v1005
        %v1007 = vmul.f32 %v1002, %v1006
        %vm1008 = vweird.f32 %v943
        %vm1009 = vweird.f32 %v1002
        %vm1010 = vmor %vm1008, %vm1009
        %v1011 = vsel %vm1010, %v1002, %v1007
        %v1012 = vrsqrt.pop %v944
        %v1013 = vmul.f32 %v1012, %v944
        %v1014 = vmul.f32 %v1013, %v1012
        %v1015 = vmul.f32 0.5, %v1014
        %v1016 = vsub.f32 1.5, %v1015
        %v1017 = vmul.f32 %v1012, %v1016
        %vm1018 = vweird.f32 %v944
        %vm1019 = vweird.f32 %v1012
        %vm1020 = vmor %vm1018, %vm1019
        %v1021 = vsel %vm1020, %v1012, %v1017
        %v1022 = vrsqrt.pop %v945
        %v1023 = vmul.f32 %v1022, %v945
        %v1024 = vmul.f32 %v1023, %v1022
        %v1025 = vmul.f32 0.5, %v1024
        %v1026 = vsub.f32 1.5, %v1025
        %v1027 = vmul.f32 %v1022, %v1026
        %vm1028 = vweird.f32 %v945
        %vm1029 = vweird.f32 %v1022
        %vm1030 = vmor %vm1028, %vm1029
        %v1031 = vsel %vm1030, %v1022, %v1027
        %v1032 = vrsqrt.pop %v946
        %v1033 = vmul.f32 %v1032, %v946
        %v1034 = vmul.f32 %v1033, %v1032
        %v1035 = vmul.f32 0.5, %v1034
        %v1036 = vsub.f32 1.5, %v1035
        %v1037 = vmul.f32 %v1032, %v1036
        %vm1038 = vweird.f32 %v946
        %vm1039 = vweird.f32 %v1032
        %vm1040 = vmor %vm1038, %vm1039
        %v1041 = vsel %vm1040, %v1032, %v1037
        %v1042 = vrsqrt.pop %v947
        %v1043 = vmul.f32 %v1042, %v947
        %v1044 = vmul.f32 %v1043, %v1042
        %v1045 = vmul.f32 0.5, %v1044
        %v1046 = vsub.f32 1.5, %v1045
        %v1047 = vmul.f32 %v1042, %v1046
        %vm1048 = vweird.f32 %v947
        %vm1049 = vweird.f32 %v1042
        %vm1050 = vmor %vm1048, %vm1049
        %v1051 = vsel %vm1050, %v1042, %v1047
        %v1052 = vrsqrt.pop %v948
        %v1053 = vmul.f32 %v1052, %v948
        %v1054 = vmul.f32 %v1053, %v1052
        %v1055 = vmul.f32 0.5, %v1054
        %v1056 = vsub.f32 1.5, %v1055
        %v1057 = vmul.f32 %v1052, %v1056
        %vm1058 = vweird.f32 %v948
        %vm1059 = vweird.f32 %v1052
        %vm1060 = vmor %vm1058, %vm1059
        %v1061 = vsel %vm1060, %v1052, %v1057
        %v1062 = vrsqrt.pop %v949
        %v1063 = vmul.f32 %v1062, %v949
        %v1064 = vmul.f32 %v1063, %v1062
        %v1065 = vmul.f32 0.5, %v1064
        %v1066 = vsub.f32 1.5, %v1065
        %v1067 = vmul.f32 %v1062, %v1066
        %vm1068 = vweird.f32 %v949
        %vm1069 = vweird.f32 %v1062
        %vm1070 = vmor %vm1068, %vm1069
        %v1071 = vsel %vm1070, %v1062, %v1067
        %v1072 = vrsqrt.pop %v950
        %v1073 = vmul.f32 %v1072, %v950
        %v1074 = vmul.f32 %v1073, %v1072
        %v1075 = vmul.f32 0.5, %v1074
        %v1076 = vsub.f32 1.5, %v1075
        %v1077 = vmul.f32 %v1072, %v1076
        %vm1078 = vweird.f32 %v950
        %vm1079 = vweird.f32 %v1072
        %vm1080 = vmor %vm1078, %vm1079
        %v1081 = vsel %vm1080, %v1072, %v1077
        %v1082 = vrsqrt.pop %v951
        %v1083 = vmul.f32 %v1082, %v951
        %v1084 = vmul.f32 %v1083, %v1082
        %v1085 = vmul.f32 0.5, %v1084
        %v1086 = vsub.f32 1.5, %v1085
        %v1087 = vmul.f32 %v1082, %v1086
        %vm1088 = vweird.f32 %v951
        %vm1089 = vweird.f32 %v1082
        %vm1090 = vmor %vm1088, %vm1089
        %v1091 = vsel %vm1090, %v1082, %v1087
        %v1092 = vrsqrt.pop %v952
        %v1093 = vmul.f32 %v1092, %v952
        %v1094 = vmul.f32 %v1093, %v1092
        %v1095 = vmul.f32 0.5, %v1094
        %v1096 = vsub.f32 1.5, %v1095
        %v1097 = vmul.f32 %v1092, %v1096
        %vm1098 = vweird.f32 %v952
        %vm1099 = vweird.f32 %v1092
        %vm1100 = vmor %vm1098, %vm1099
        %v1101 = vsel %vm1100, %v1092, %v1097
        %v1102 = vrsqrt.pop %v953
        %v1103 = vmul.f32 %v1102, %v953
        %v1104 = vmul.f32 %v1103, %v1102
        %v1105 = vmul.f32 0.5, %v1104
        %v1106 = vsub.f32 1.5, %v1105
        %v1107 = vmul.f32 %v1102, %v1106
        %vm1108 = vweird.f32 %v953
        %vm1109 = vweird.f32 %v1102
        %vm1110 = vmor %vm1108, %vm1109
        %v1111 = vsel %vm1110, %v1102, %v1107
        %v1112 = vrsqrt.pop %v954
        %v1113 = vmul.f32 %v1112, %v954
        %v1114 = vmul.f32 %v1113, %v1112
        %v1115 = vmul.f32 0.5, %v1114
        %v1116 = vsub.f32 1.5, %v1115
        %v1117 = vmul.f32 %v1112, %v1116
        %vm1118 = vweird.f32 %v954
        %vm1119 = vweird.f32 %v1112
        %vm1120 = vmor %vm1118, %vm1119
        %v1121 = vsel %vm1120, %v1112, %v1117
        %v1122 = vrsqrt.pop %v955
        %v1123 = vmul.f32 %v1122, %v955
        %v1124 = vmul.f32 %v1123, %v1122
        %v1125 = vmul.f32 0.5, %v1124
        %v1126 = vsub.f32 1.5, %v1125
        %v1127 = vmul.f32 %v1122, %v1126
        %vm1128 = vweird.f32 %v955
        %vm1129 = vweird.f32 %v1122
        %vm1130 = vmor %vm1128, %vm1129
        %v1131 = vsel %vm1130, %v1122, %v1127
        %v1132 = vrsqrt.pop %v956
        %v1133 = vmul.f32 %v1132, %v956
        %v1134 = vmul.f32 %v1133, %v1132
        %v1135 = vmul.f32 0.5, %v1134
        %v1136 = vsub.f32 1.5, %v1135
        %v1137 = vmul.f32 %v1132, %v1136
        %vm1138 = vweird.f32 %v956
        %vm1139 = vweird.f32 %v1132
        %vm1140 = vmor %vm1138, %vm1139
        %v1141 = vsel %vm1140, %v1132, %v1137
        %v1142 = vrsqrt.pop %v957
        %v1143 = vmul.f32 %v1142, %v957
        %v1144 = vmul.f32 %v1143, %v1142
        %v1145 = vmul.f32 0.5, %v1144
        %v1146 = vsub.f32 1.5, %v1145
        %v1147 = vmul.f32 %v1142, %v1146
        %vm1148 = vweird.f32 %v957
        %vm1149 = vweird.f32 %v1142
        %vm1150 = vmor %vm1148, %vm1149
        %v1151 = vsel %vm1150, %v1142, %v1147
        %v1152 = vrsqrt.pop %v958
        %v1153 = vmul.f32 %v1152, %v958
        %v1154 = vmul.f32 %v1153, %v1152
        %v1155 = vmul.f32 0.5, %v1154
        %v1156 = vsub.f32 1.5, %v1155
        %v1157 = vmul.f32 %v1152, %v1156
        %vm1158 = vweird.f32 %v958
        %vm1159 = vweird.f32 %v1152
        %vm1160 = vmor %vm1158, %vm1159
        %v1161 = vsel %vm1160, %v1152, %v1157
        %v1162 = vrsqrt.pop %v959
        %v1163 = vmul.f32 %v1162, %v959
        %v1164 = vmul.f32 %v1163, %v1162
        %v1165 = vmul.f32 0.5, %v1164
        %v1166 = vsub.f32 1.5, %v1165
        %v1167 = vmul.f32 %v1162, %v1166
        %vm1168 = vweird.f32 %v959
        %vm1169 = vweird.f32 %v1162
        %vm1170 = vmor %vm1168, %vm1169
        %v1171 = vsel %vm1170, %v1162, %v1167
        %v1172 = vrsqrt.pop %v960
        %v1173 = vmul.f32 %v1172, %v960
        %v1174 = vmul.f32 %v1173, %v1172
        %v1175 = vmul.f32 0.5, %v1174
        %v1176 = vsub.f32 1.5, %v1175
        %v1177 = vmul.f32 %v1172, %v1176
        %vm1178 = vweird.f32 %v960
        %vm1179 = vweird.f32 %v1172
        %vm1180 = vmor %vm1178, %vm1179
        %v1181 = vsel %vm1180, %v1172, %v1177
        %v1182 = vrsqrt.pop %v961
        %v1183 = vmul.f32 %v1182, %v961
        %v1184 = vmul.f32 %v1183, %v1182
        %v1185 = vmul.f32 0.5, %v1184
        %v1186 = vsub.f32 1.5, %v1185
        %v1187 = vmul.f32 %v1182, %v1186
        %vm1188 = vweird.f32 %v961
        %vm1189 = vweird.f32 %v1182
        %vm1190 = vmor %vm1188, %vm1189
        %v1191 = vsel %vm1190, %v1182, %v1187
        %v1192 = vrsqrt.pop %v962
        %v1193 = vmul.f32 %v1192, %v962
        %v1194 = vmul.f32 %v1193, %v1192
        %v1195 = vmul.f32 0.5, %v1194
        %v1196 = vsub.f32 1.5, %v1195
        %v1197 = vmul.f32 %v1192, %v1196
        %vm1198 = vweird.f32 %v962
        %vm1199 = vweird.f32 %v1192
        %vm1200 = vmor %vm1198, %vm1199
        %v1201 = vsel %vm1200, %v1192, %v1197
        %v1202 = vrsqrt.pop %v963
        %v1203 = vmul.f32 %v1202, %v963
        %v1204 = vmul.f32 %v1203, %v1202
        %v1205 = vmul.f32 0.5, %v1204
        %v1206 = vsub.f32 1.5, %v1205
        %v1207 = vmul.f32 %v1202, %v1206
        %vm1208 = vweird.f32 %v963
        %vm1209 = vweird.f32 %v1202
        %vm1210 = vmor %vm1208, %vm1209
        %v1211 = vsel %vm1210, %v1202, %v1207
        %v1212 = vrsqrt.pop %v964
        %v1213 = vmul.f32 %v1212, %v964
        %v1214 = vmul.f32 %v1213, %v1212
        %v1215 = vmul.f32 0.5, %v1214
        %v1216 = vsub.f32 1.5, %v1215
        %v1217 = vmul.f32 %v1212, %v1216
        %vm1218 = vweird.f32 %v964
        %vm1219 = vweird.f32 %v1212
        %vm1220 = vmor %vm1218, %vm1219
        %v1221 = vsel %vm1220, %v1212, %v1217
        %v1222 = vrsqrt.pop %v965
        %v1223 = vmul.f32 %v1222, %v965
        %v1224 = vmul.f32 %v1223, %v1222
        %v1225 = vmul.f32 0.5, %v1224
        %v1226 = vsub.f32 1.5, %v1225
        %v1227 = vmul.f32 %v1222, %v1226
        %vm1228 = vweird.f32 %v965
        %vm1229 = vweird.f32 %v1222
        %vm1230 = vmor %vm1228, %vm1229
        %v1231 = vsel %vm1230, %v1222, %v1227
        %v1232 = vrsqrt.pop %v966
        %v1233 = vmul.f32 %v1232, %v966
        %v1234 = vmul.f32 %v1233, %v1232
        %v1235 = vmul.f32 0.5, %v1234
        %v1236 = vsub.f32 1.5, %v1235
        %v1237 = vmul.f32 %v1232, %v1236
        %vm1238 = vweird.f32 %v966
        %vm1239 = vweird.f32 %v1232
        %vm1240 = vmor %vm1238, %vm1239
        %v1241 = vsel %vm1240, %v1232, %v1237
        %v1242 = vrsqrt.pop %v967
        %v1243 = vmul.f32 %v1242, %v967
        %v1244 = vmul.f32 %v1243, %v1242
        %v1245 = vmul.f32 0.5, %v1244
        %v1246 = vsub.f32 1.5, %v1245
        %v1247 = vmul.f32 %v1242, %v1246
        %vm1248 = vweird.f32 %v967
        %vm1249 = vweird.f32 %v1242
        %vm1250 = vmor %vm1248, %vm1249
        %v1251 = vsel %vm1250, %v1242, %v1247
        %v1252 = vrsqrt.pop %v968
        %v1253 = vmul.f32 %v1252, %v968
        %v1254 = vmul.f32 %v1253, %v1252
        %v1255 = vmul.f32 0.5, %v1254
        %v1256 = vsub.f32 1.5, %v1255
        %v1257 = vmul.f32 %v1252, %v1256
        %vm1258 = vweird.f32 %v968
        %vm1259 = vweird.f32 %v1252
        %vm1260 = vmor %vm1258, %vm1259
        %v1261 = vsel %vm1260, %v1252, %v1257
        %v1262 = vrsqrt.pop %v969
        %v1263 = vmul.f32 %v1262, %v969
        %v1264 = vmul.f32 %v1263, %v1262
        %v1265 = vmul.f32 0.5, %v1264
        %v1266 = vsub.f32 1.5, %v1265
        %v1267 = vmul.f32 %v1262, %v1266
        %vm1268 = vweird.f32 %v969
        %vm1269 = vweird.f32 %v1262
        %vm1270 = vmor %vm1268, %vm1269
        %v1271 = vsel %vm1270, %v1262, %v1267
        %v1272 = vrsqrt.pop %v970
        %v1273 = vmul.f32 %v1272, %v970
        %v1274 = vmul.f32 %v1273, %v1272
        %v1275 = vmul.f32 0.5, %v1274
        %v1276 = vsub.f32 1.5, %v1275
        %v1277 = vmul.f32 %v1272, %v1276
        %vm1278 = vweird.f32 %v970
        %vm1279 = vweird.f32 %v1272
        %vm1280 = vmor %vm1278, %vm1279
        %v1281 = vsel %vm1280, %v1272, %v1277
        %v1282 = vrsqrt.pop %v971
        %v1283 = vmul.f32 %v1282, %v971
        %v1284 = vmul.f32 %v1283, %v1282
        %v1285 = vmul.f32 0.5, %v1284
        %v1286 = vsub.f32 1.5, %v1285
        %v1287 = vmul.f32 %v1282, %v1286
        %vm1288 = vweird.f32 %v971
        %vm1289 = vweird.f32 %v1282
        %vm1290 = vmor %vm1288, %vm1289
        %v1291 = vsel %vm1290, %v1282, %v1287
        %v1292 = vmul.f32 %v765, %v981
        %v1293 = vmul.f32 %v767, %v991
        %v1294 = vmul.f32 %v770, %v1001
        %v1295 = vmul.f32 %v772, %v1011
        %v1296 = vmul.f32 %v775, %v1021
        %v1297 = vmul.f32 %v777, %v1031
        %v1298 = vmul.f32 %v780, %v1041
        %v1299 = vmul.f32 %v782, %v1051
        %v1300 = vmul.f32 %v785, %v1061
        %v1301 = vmul.f32 %v787, %v1071
        %v1302 = vmul.f32 %v790, %v1081
        %v1303 = vmul.f32 %v792, %v1091
        %v1304 = vmul.f32 %v795, %v1101
        %v1305 = vmul.f32 %v797, %v1111
        %v1306 = vmul.f32 %v800, %v1121
        %v1307 = vmul.f32 %v802, %v1131
        %v1308 = vmul.f32 %v805, %v1141
        %v1309 = vmul.f32 %v807, %v1151
        %v1310 = vmul.f32 %v810, %v1161
        %v1311 = vmul.f32 %v812, %v1171
        %v1312 = vmul.f32 %v815, %v1181
        %v1313 = vmul.f32 %v817, %v1191
        %v1314 = vmul.f32 %v820, %v1201
        %v1315 = vmul.f32 %v822, %v1211
        %v1316 = vmul.f32 %v825, %v1221
        %v1317 = vmul.f32 %v827, %v1231
        %v1318 = vmul.f32 %v830, %v1241
        %v1319 = vmul.f32 %v832, %v1251
        %v1320 = vmul.f32 %v835, %v1261
        %v1321 = vmul.f32 %v837, %v1271
        %v1322 = vmul.f32 %v840, %v1281
        %v1323 = vmul.f32 %v842, %v1291
        %1324 = vst [vmem:[%s335] sm:$0xff] %v1292
        %1325 = vst [vmem:[%s335 + $0x8] sm:$0xff] %v1293
        %1326 = vst [vmem:[%s335 + $0x10] sm:$0xff] %v1294
        %1327 = vst [vmem:[%s335 + $0x18] sm:$0xff] %v1295
        %1328 = vst [vmem:[%s335 + $0x20] sm:$0xff] %v1296
        %1329 = vst [vmem:[%s335 + $0x28] sm:$0xff] %v1297
        %1330 = vst [vmem:[%s335 + $0x30] sm:$0xff] %v1298
        %1331 = vst [vmem:[%s335 + $0x38] sm:$0xff] %v1299
        %1332 = vst [vmem:[%s335 + $0x40] sm:$0xff] %v1300
        %1333 = vst [vmem:[%s335 + $0x48] sm:$0xff] %v1301
        %1334 = vst [vmem:[%s335 + $0x50] sm:$0xff] %v1302
        %1335 = vst [vmem:[%s335 + $0x58] sm:$0xff] %v1303
        %1336 = vst [vmem:[%s335 + $0x60] sm:$0xff] %v1304
        %1337 = vst [vmem:[%s335 + $0x68] sm:$0xff] %v1305
        %1338 = vst [vmem:[%s335 + $0x70] sm:$0xff] %v1306
        %1339 = vst [vmem:[%s335 + $0x78] sm:$0xff] %v1307
        %1340 = vst [vmem:[%s335 + $0x80] sm:$0xff] %v1308
        %1341 = vst [vmem:[%s335 + $0x88] sm:$0xff] %v1309
        %1342 = vst [vmem:[%s335 + $0x90] sm:$0xff] %v1310
        %1343 = vst [vmem:[%s335 + $0x98] sm:$0xff] %v1311
        %1344 = vst [vmem:[%s335 + $0xa0] sm:$0xff] %v1312
        %1345 = vst [vmem:[%s335 + $0xa8] sm:$0xff] %v1313
        %1346 = vst [vmem:[%s335 + $0xb0] sm:$0xff] %v1314
        %1347 = vst [vmem:[%s335 + $0xb8] sm:$0xff] %v1315
        %1348 = vst [vmem:[%s335 + $0xc0] sm:$0xff] %v1316
        %1349 = vst [vmem:[%s335 + $0xc8] sm:$0xff] %v1317
        %1350 = vst [vmem:[%s335 + $0xd0] sm:$0xff] %v1318
        %1351 = vst [vmem:[%s335 + $0xd8] sm:$0xff] %v1319
        %1352 = vst [vmem:[%s335 + $0xe0] sm:$0xff] %v1320
        %1353 = vst [vmem:[%s335 + $0xe8] sm:$0xff] %v1321
        %1354 = vst [vmem:[%s335 + $0xf0] sm:$0xff] %v1322
        %1355 = vst [vmem:[%s335 + $0xf8] sm:$0xff] %v1323
        %v1356 = vpack.c.bf16 %v1292, %v1292
        %v1357 = vpack.c.bf16 %v1293, %v1293
        %v1358 = vpack.c.bf16 %v1294, %v1294
        %v1359 = vpack.c.bf16 %v1295, %v1295
        %v1360 = vpack.c.bf16 %v1296, %v1296
        %v1361 = vpack.c.bf16 %v1297, %v1297
        %v1362 = vpack.c.bf16 %v1298, %v1298
        %v1363 = vpack.c.bf16 %v1299, %v1299
        %v1364 = vpack.c.bf16 %v1300, %v1300
        %v1365 = vpack.c.bf16 %v1301, %v1301
        %v1366 = vpack.c.bf16 %v1302, %v1302
        %v1367 = vpack.c.bf16 %v1303, %v1303
        %v1368 = vpack.c.bf16 %v1304, %v1304
        %v1369 = vpack.c.bf16 %v1305, %v1305
        %v1370 = vpack.c.bf16 %v1306, %v1306
        %v1371 = vpack.c.bf16 %v1307, %v1307
        %v1372 = vpack.c.bf16 %v1308, %v1308
        %v1373 = vpack.c.bf16 %v1309, %v1309
        %v1374 = vpack.c.bf16 %v1310, %v1310
        %v1375 = vpack.c.bf16 %v1311, %v1311
        %v1376 = vpack.c.bf16 %v1312, %v1312
        %v1377 = vpack.c.bf16 %v1313, %v1313
        %v1378 = vpack.c.bf16 %v1314, %v1314
        %v1379 = vpack.c.bf16 %v1315, %v1315
        %v1380 = vpack.c.bf16 %v1316, %v1316
        %v1381 = vpack.c.bf16 %v1317, %v1317
        %v1382 = vpack.c.bf16 %v1318, %v1318
        %v1383 = vpack.c.bf16 %v1319, %v1319
        %v1384 = vpack.c.bf16 %v1320, %v1320
        %v1385 = vpack.c.bf16 %v1321, %v1321
        %v1386 = vpack.c.bf16 %v1322, %v1322
        %v1387 = vpack.c.bf16 %v1323, %v1323
        %1388 = vst [vmem:[%s342] sm:$0xf] %v1356
        %1389 = vst [vmem:[%s342 + $0x4] sm:$0xf] %v1357
        %1390 = vst [vmem:[%s342 + $0x8] sm:$0xf] %v1358
        %1391 = vst [vmem:[%s342 + $0xc] sm:$0xf] %v1359
        %1392 = vst [vmem:[%s342 + $0x10] sm:$0xf] %v1360
        %1393 = vst [vmem:[%s342 + $0x14] sm:$0xf] %v1361
        %1394 = vst [vmem:[%s342 + $0x18] sm:$0xf] %v1362
        %1395 = vst [vmem:[%s342 + $0x1c] sm:$0xf] %v1363
        %1396 = vst [vmem:[%s342 + $0x20] sm:$0xf] %v1364
        %1397 = vst [vmem:[%s342 + $0x24] sm:$0xf] %v1365
        %1398 = vst [vmem:[%s342 + $0x28] sm:$0xf] %v1366
        %1399 = vst [vmem:[%s342 + $0x2c] sm:$0xf] %v1367
        %1400 = vst [vmem:[%s342 + $0x30] sm:$0xf] %v1368
        %1401 = vst [vmem:[%s342 + $0x34] sm:$0xf] %v1369
        %1402 = vst [vmem:[%s342 + $0x38] sm:$0xf] %v1370
        %1403 = vst [vmem:[%s342 + $0x3c] sm:$0xf] %v1371
        %1404 = vst [vmem:[%s342 + $0x40] sm:$0xf] %v1372
        %1405 = vst [vmem:[%s342 + $0x44] sm:$0xf] %v1373
        %1406 = vst [vmem:[%s342 + $0x48] sm:$0xf] %v1374
        %1407 = vst [vmem:[%s342 + $0x4c] sm:$0xf] %v1375
        %1408 = vst [vmem:[%s342 + $0x50] sm:$0xf] %v1376
        %1409 = vst [vmem:[%s342 + $0x54] sm:$0xf] %v1377
        %1410 = vst [vmem:[%s342 + $0x58] sm:$0xf] %v1378
        %1411 = vst [vmem:[%s342 + $0x5c] sm:$0xf] %v1379
        %1412 = vst [vmem:[%s342 + $0x60] sm:$0xf] %v1380
        %1413 = vst [vmem:[%s342 + $0x64] sm:$0xf] %v1381
        %1414 = vst [vmem:[%s342 + $0x68] sm:$0xf] %v1382
        %1415 = vst [vmem:[%s342 + $0x6c] sm:$0xf] %v1383
        %1416 = vst [vmem:[%s342 + $0x70] sm:$0xf] %v1384
        %1417 = vst [vmem:[%s342 + $0x74] sm:$0xf] %v1385
        %1418 = vst [vmem:[%s342 + $0x78] sm:$0xf] %v1386
        %1419 = vst [vmem:[%s342 + $0x7c] sm:$0xf] %v1387
        %1420 = vxpose.xlu0.b32.start [1/16] %v1292, 128
        %1421 = vxpose.xlu0.b32.cont [2/16] %v1293, 128
        %1422 = vxpose.xlu0.b32.cont [3/16] %v1294, 128
        %1423 = vxpose.xlu0.b32.cont [4/16] %v1295, 128
        %1424 = vxpose.xlu0.b32.cont [5/16] %v1296, 128
        %1425 = vxpose.xlu0.b32.cont [6/16] %v1297, 128
        %1426 = vxpose.xlu0.b32.cont [7/16] %v1298, 128
        %1427 = vxpose.xlu0.b32.cont [8/16] %v1299, 128
        %1428 = vxpose.xlu0.b32.cont [9/16] %v1300, 128
        %1429 = vxpose.xlu0.b32.cont [10/16] %v1301, 128
        %1430 = vxpose.xlu0.b32.cont [11/16] %v1302, 128
        %1431 = vxpose.xlu0.b32.cont [12/16] %v1303, 128
        %1432 = vxpose.xlu0.b32.cont [13/16] %v1304, 128
        %1433 = vxpose.xlu0.b32.cont [14/16] %v1305, 128
        %1434 = vxpose.xlu0.b32.cont [15/16] %v1306, 128
        %1435 = vxpose.xlu0.b32.end [16/16] %v1307, 128
        %v1436 = vpop.trf.xlu0
        %v1437 = vpop.trf.xlu0
        %v1438 = vpop.trf.xlu0
        %v1439 = vpop.trf.xlu0
        %v1440 = vpop.trf.xlu0
        %v1441 = vpop.trf.xlu0
        %v1442 = vpop.trf.xlu0
        %v1443 = vpop.trf.xlu0
        %v1444 = vpop.trf.xlu0
        %v1445 = vpop.trf.xlu0
        %v1446 = vpop.trf.xlu0
        %v1447 = vpop.trf.xlu0
        %v1448 = vpop.trf.xlu0
        %v1449 = vpop.trf.xlu0
        %v1450 = vpop.trf.xlu0
        %v1451 = vpop.trf.xlu0
        %1452 = vxpose.xlu0.b32.start [1/16] %v1308, 128
        %1453 = vxpose.xlu0.b32.cont [2/16] %v1309, 128
        %1454 = vxpose.xlu0.b32.cont [3/16] %v1310, 128
        %1455 = vxpose.xlu0.b32.cont [4/16] %v1311, 128
        %1456 = vxpose.xlu0.b32.cont [5/16] %v1312, 128
        %1457 = vxpose.xlu0.b32.cont [6/16] %v1313, 128
        %1458 = vxpose.xlu0.b32.cont [7/16] %v1314, 128
        %1459 = vxpose.xlu0.b32.cont [8/16] %v1315, 128
        %1460 = vxpose.xlu0.b32.cont [9/16] %v1316, 128
        %1461 = vxpose.xlu0.b32.cont [10/16] %v1317, 128
        %1462 = vxpose.xlu0.b32.cont [11/16] %v1318, 128
        %1463 = vxpose.xlu0.b32.cont [12/16] %v1319, 128
        %1464 = vxpose.xlu0.b32.cont [13/16] %v1320, 128
        %1465 = vxpose.xlu0.b32.cont [14/16] %v1321, 128
        %1466 = vxpose.xlu0.b32.cont [15/16] %v1322, 128
        %1467 = vxpose.xlu0.b32.end [16/16] %v1323, 128
        %v1468 = vpop.trf.xlu0
        %v1469 = vpop.trf.xlu0
        %v1470 = vpop.trf.xlu0
        %v1471 = vpop.trf.xlu0
        %v1472 = vpop.trf.xlu0
        %v1473 = vpop.trf.xlu0
        %v1474 = vpop.trf.xlu0
        %v1475 = vpop.trf.xlu0
        %v1476 = vpop.trf.xlu0
        %v1477 = vpop.trf.xlu0
        %v1478 = vpop.trf.xlu0
        %v1479 = vpop.trf.xlu0
        %v1480 = vpop.trf.xlu0
        %v1481 = vpop.trf.xlu0
        %v1482 = vpop.trf.xlu0
        %v1483 = vpop.trf.xlu0
        %v1484 = vpack.c.bf16 %v1468, %v1436
        %v1485 = vpack.c.bf16 %v1469, %v1437
        %v1486 = vpack.c.bf16 %v1470, %v1438
        %v1487 = vpack.c.bf16 %v1471, %v1439
        %v1488 = vpack.c.bf16 %v1472, %v1440
        %v1489 = vpack.c.bf16 %v1473, %v1441
        %v1490 = vpack.c.bf16 %v1474, %v1442
        %v1491 = vpack.c.bf16 %v1475, %v1443
        %v1492 = vpack.c.bf16 %v1476, %v1444
        %v1493 = vpack.c.bf16 %v1477, %v1445
        %v1494 = vpack.c.bf16 %v1478, %v1446
        %v1495 = vpack.c.bf16 %v1479, %v1447
        %v1496 = vpack.c.bf16 %v1480, %v1448
        %v1497 = vpack.c.bf16 %v1481, %v1449
        %v1498 = vpack.c.bf16 %v1482, %v1450
        %v1499 = vpack.c.bf16 %v1483, %v1451
        %1500 = vst [vmem:[%s349] sm:$0xff] %v1484
        %1501 = vst [vmem:[%s349 + $0x8] sm:$0xff] %v1485
        %1502 = vst [vmem:[%s349 + $0x10] sm:$0xff] %v1486
        %1503 = vst [vmem:[%s349 + $0x18] sm:$0xff] %v1487
        %1504 = vst [vmem:[%s349 + $0x20] sm:$0xff] %v1488
        %1505 = vst [vmem:[%s349 + $0x28] sm:$0xff] %v1489
        %1506 = vst [vmem:[%s349 + $0x30] sm:$0xff] %v1490
        %1507 = vst [vmem:[%s349 + $0x38] sm:$0xff] %v1491
        %1508 = vst [vmem:[%s349 + $0x40] sm:$0xff] %v1492
        %1509 = vst [vmem:[%s349 + $0x48] sm:$0xff] %v1493
        %1510 = vst [vmem:[%s349 + $0x50] sm:$0xff] %v1494
        %1511 = vst [vmem:[%s349 + $0x58] sm:$0xff] %v1495
        %1512 = vst [vmem:[%s349 + $0x60] sm:$0xff] %v1496
        %1513 = vst [vmem:[%s349 + $0x68] sm:$0xff] %v1497
        %1514 = vst [vmem:[%s349 + $0x70] sm:$0xff] %v1498
        %1515 = vst [vmem:[%s349 + $0x78] sm:$0xff] %v1499
        %s1516 = sand.u32 %s147, 1
        %s1517 = scalar_lea.sflag [#allocation4], %s1516
        %s1518 = sand.u32 %s147, 1
        %s1519 = smul.addr %s1518, 256
        %s1520 = scalar_lea.vmem [#allocation8], %s1519
        %s1521 = sand.u32 %s29, 1
        %s1522 = scalar_lea.sflag [#allocation10], %s1521
        %s1523 = sand.u32 %s173, 1
        %s1524 = smul.addr %s1523, 128
        %s1525 = scalar_lea.vmem [#allocation9], %s1524
        %s1526 = sand.u32 %s29, 1
        %s1527 = scalar_lea.sflag [#allocation10], %s1526
        %s1528 = sand.u32 %s199, 1
        %s1529 = smul.addr %s1528, 128
        %s1530 = scalar_lea.vmem [#allocation11], %s1529
        // Predicated region
        $region53: #{tpu_custom_call.1} parent=39 // pred_check
          %p1531 = pneg %p157
        $region54: #{tpu_custom_call.1} parent=39 // pred_check_branch
          %1533 = sbr.rel (%p1531) target = $region56
        $region55: #{tpu_custom_call.1} parent=39 // pred_region
          %s1534 = smul.u32 32, %s29
          %1536 = vsyncadd %s1517, 0
          %s1537 = smul.addr %s1534, 8
          %s1538 = scalar_lea.hbm %s5, %s1537
          %s1539 = sshll.u32 %s1520, 4
          %s1540 = int_to_ptr.vmem [resolvable:$true] %s1539
          %s1541 = sshll.u32 %s1538, 4
          %s1542 = int_to_ptr.hbm [resolvable:$true] %s1541
          %1547 = dma.vmem_to_hbm [thread:$0]  %s1540, 4096, %s1542, %s1517, 128, 128, 8
        $region56: #{tpu_custom_call.1} parent=39 // pred_fallthru
          _
        // Predicated region
        $region57: #{tpu_custom_call.1} parent=39 // pred_check
          %p1548 = pneg %p183
        $region58: #{tpu_custom_call.1} parent=39 // pred_check_branch
          %1550 = sbr.rel (%p1548) target = $region60
        $region59: #{tpu_custom_call.1} parent=39 // pred_region
          %s1551 = smul.u32 32, %s29
          %1553 = vsyncadd %s1522, 0
          %s1554 = smul.addr %s1551, 4
          %s1555 = scalar_lea.hbm %s6, %s1554
          %s1556 = sshll.u32 %s1525, 4
          %s1557 = int_to_ptr.vmem [resolvable:$true] %s1556
          %s1558 = sshll.u32 %s1555, 4
          %s1559 = int_to_ptr.hbm [resolvable:$true] %s1558
          %1564 = dma.vmem_to_hbm [thread:$0]  %s1557, 2048, %s1559, %s1522, 64, 64, 4
        $region60: #{tpu_custom_call.1} parent=39 // pred_fallthru
          _
        // Predicated region
        $region61: #{tpu_custom_call.1} parent=39 // pred_check
          %p1565 = pneg %p209
        $region62: #{tpu_custom_call.1} parent=39 // pred_check_branch
          %1567 = sbr.rel (%p1565) target = $region64
        $region63: #{tpu_custom_call.1} parent=39 // pred_region
          %s1568 = smul.u32 2, %s29
          %1570 = vsyncadd %s1527, 0
          %s1571 = smul.addr %s1568, 4
          %s1572 = scalar_lea.hbm %s7, %s1571
          %s1573 = sshll.u32 %s1530, 4
          %s1574 = int_to_ptr.vmem [resolvable:$true] %s1573
          %s1575 = sshll.u32 %s1572, 4
          %s1576 = int_to_ptr.hbm [resolvable:$true] %s1575
          %1581 = dma.vmem_to_hbm [thread:$0]  %s1574, 2048, %s1576, %s1527, 128, 256, 8
        $region64: #{tpu_custom_call.1} parent=39 // pred_fallthru
          _
      $region40: #{tpu_custom_call.1} parent=5 // pred_fallthru
        _
      %p1582 = scmp.le.s32.totalorder 2, %s24
      // Predicated region
      $region65: #{tpu_custom_call.1} parent=5 // pred_check
        %p1583 = pneg %p1582
      $region66: #{tpu_custom_call.1} parent=5 // pred_check_branch
        %1585 = sbr.rel (%p1583) target = $region68
      $region67: #{tpu_custom_call.1} parent=5 // pred_region
        %s1586 = ssub.s32 %s24, 2
        // Predicated region
        $region69: #{tpu_custom_call.1} parent=67 // pred_check
          %p1587 = pneg %p163
        $region70: #{tpu_custom_call.1} parent=67 // pred_check_branch
          %1589 = sbr.rel (%p1587) target = $region72
        $region71: #{tpu_custom_call.1} parent=67 // pred_region
          %s1590 = sand.u32 %s148, 1
          %s1591 = scalar_lea.sflag [#allocation4], %s1590
          %s1592 = sand.u32 %s148, 1
          %s1593 = smul.addr %s1592, 256
          %s1594 = scalar_lea.vmem [#allocation8], %s1593
          %1596 = dma.done %s1591, 4096
        $region72: #{tpu_custom_call.1} parent=67 // pred_fallthru
          _
        // Predicated region
        $region73: #{tpu_custom_call.1} parent=67 // pred_check
          %p1597 = pneg %p189
        $region74: #{tpu_custom_call.1} parent=67 // pred_check_branch
          %1599 = sbr.rel (%p1597) target = $region76
        $region75: #{tpu_custom_call.1} parent=67 // pred_region
          %s1600 = sand.u32 %s30, 1
          %s1601 = scalar_lea.sflag [#allocation10], %s1600
          %s1602 = sand.u32 %s174, 1
          %s1603 = smul.addr %s1602, 128
          %s1604 = scalar_lea.vmem [#allocation9], %s1603
          %1606 = dma.done %s1601, 2048
        $region76: #{tpu_custom_call.1} parent=67 // pred_fallthru
          _
        // Predicated region
        $region77: #{tpu_custom_call.1} parent=67 // pred_check
          %p1607 = pneg %p215
        $region78: #{tpu_custom_call.1} parent=67 // pred_check_branch
          %1609 = sbr.rel (%p1607) target = $region80
        $region79: #{tpu_custom_call.1} parent=67 // pred_region
          %s1610 = sand.u32 %s30, 1
          %s1611 = scalar_lea.sflag [#allocation10], %s1610
          %s1612 = sand.u32 %s200, 1
          %s1613 = smul.addr %s1612, 128
          %s1614 = scalar_lea.vmem [#allocation11], %s1613
          %1616 = dma.done %s1611, 2048
        $region80: #{tpu_custom_call.1} parent=67 // pred_fallthru
          _
      $region68: #{tpu_custom_call.1} parent=5 // pred_fallthru
        _
    $region6: #{tpu_custom_call.1} parent=1 // loop_footer
      %s28 = sadd.s32 1, %s24
    $region7: #{tpu_custom_call.1} parent=1 // loop_footer_branch
      %23 = sbr.rel target = $region3
    $region8: #{tpu_custom_call.1} parent=1 // loop_exit
      _
    %1617 = vsyncpa [#allocation3], 1
    %s1618 = scalar_lea.sflag [#allocation3], 1
    %1619 = vsyncpa %s1618, 1
    %1620 = vsyncpa [#allocation6], 1
    %1621 = vsyncpa [#allocation4], 1
    %s1622 = scalar_lea.sflag [#allocation4], 1
    %1623 = vsyncpa %s1622, 1
    %1624 = vsyncpa [#allocation10], 1
    %s1625 = scalar_lea.sflag [#allocation10], 1
    %1626 = vsyncpa %s1625, 1

// kernel: tpu_custom_call.1
$region0: #{tpu_custom_call.1}
  #allocation0 [shape = 'u32[]', space=smem, size = 0x4, offset = 0x4, fixed_abs, tag = 'smem constant byte address 0x4 - core index']
  #allocation1 [shape = 'u32[72,128]{1,0:T(1,128)}', space=vmem, size = 0x9000, scoped, tag = 'internal scratch']
  %s0 = inlined_call_operand.hbm [shape: bf16[512,128], index: 0, kind: input, shape index: {}]
  %s1 = inlined_call_operand.hbm [shape: bf16[128,128], index: 1, kind: input, shape index: {}]
  %s2 = inlined_call_operand.vmem [shape: f32[1,128], index: 2, kind: input, shape index: {}]
  %s3 = inlined_call_operand.hbm [shape: bf16[128,128], index: 3, kind: input, shape index: {}]
  %s4 = inlined_call_operand.vmem [shape: f32[1,128], index: 4, kind: input, shape index: {}]
  %s5 = inlined_call_operand.hbm [shape: f32[512,128], index: 5, kind: output, shape index: {0}]
  %s6 = inlined_call_operand.hbm [shape: bf16[512,128], index: 6, kind: output, shape index: {1}]
  %s7 = inlined_call_operand.hbm [shape: bf16[128,512], index: 7, kind: output, shape index: {2}]
  %8 = xla_tuple %s5, %s6, %s7
  %s9 = sld [smem:[#allocation0]]
  $region81: #{tpu_custom_call.1} parent=0
    _
  %s11 = ssub.s32 1, %s9
  %s12 = scalar_select 0, %s11, %s9
  $region1: #{tpu_custom_call.1} parent=0
    #allocation2 [shape = 'u8[131072]{0}', space=vmem, size = 0x20000, scoped, tag = 'input window, operand 0']
    #allocation3 [shape = 's32[2]{0}', space=sflag, size = 0x8, scoped, tag = 'scoped memory for tpu_custom_call.1']
    #allocation4 [shape = 's32[2]{0}', space=sflag, size = 0x8, scoped, tag = 'scoped memory for tpu_custom_call.1']
    #allocation5 [shape = 'u8[32768]{0}', space=vmem, size = 0x8000, scoped, tag = 'input window, operand 1, single buffered']
    #allocation6 [shape = 's32[1]{0}', space=sflag, size = 0x4, scoped, tag = 'scoped memory for tpu_custom_call.1']
    #allocation7 [shape = 'u8[32768]{0}', space=vmem, size = 0x8000, scoped, tag = 'input window, operand 3, single buffered']
    #allocation8 [shape = 'u8[262144]{0}', space=vmem, size = 0x40000, scoped, tag = 'output window, operand 0']
    #allocation9 [shape = 'u8[131072]{0}', space=vmem, size = 0x20000, scoped, tag = 'output window, operand 1']
    #allocation10 [shape = 's32[2]{0}', space=sflag, size = 0x8, scoped, tag = 'scoped memory for tpu_custom_call.1']
    #allocation11 [shape = 'u8[131072]{0}', space=vmem, size = 0x20000, scoped, tag = 'output window, operand 2']
    %13 = vsyncpa [#allocation3], 0
    %s14 = scalar_lea.sflag [#allocation3], 1
    %15 = vsyncpa %s14, 0
    %16 = vsyncpa [#allocation6], 0
    %17 = vsyncpa [#allocation4], 0
    %s18 = scalar_lea.sflag [#allocation4], 1
    %19 = vsyncpa %s18, 0
    %20 = vsyncpa [#allocation10], 0
    %s21 = scalar_lea.sflag [#allocation10], 1
    %22 = vsyncpa %s21, 0
    loop: start=0, step=1, limit=4
    $region2: #{tpu_custom_call.1} parent=1 // loop_pre_header
      _
    $region3: #{tpu_custom_call.1} parent=1 // loop_header
      %s24 = sphi 0, %s28
      %p25 = scmp.ge.s32.totalorder %s24, 4
      %s34 = sphi 0, %s36
      %s37 = sphi 0, %s34
      %s38 = sphi 0, %s37
      %s54 = sphi 0, %s38
      %s58 = sphi 0, %s58
      %s60 = sphi 0, %s58
      %s61 = sphi 0, %s60
      %s75 = sphi 0, %s61
      %s79 = sphi 0, %s79
      %s81 = sphi 0, %s79
      %s82 = sphi 0, %s81
      %s96 = sphi 0, %s82
      %s100 = sphi 0, %s100
      %s102 = sphi 0, %s100
      %s103 = sphi 0, %s102
      %s117 = sphi 0, %s103
      %s121 = sphi 0, %s121
      %s123 = sphi 0, %s121
      %s124 = sphi 0, %s123
      %s138 = sphi 0, %s124
      %s144 = sphi 0, %s146
      %s147 = sphi 0, %s144
      %s148 = sphi 0, %s147
      %s164 = sphi 0, %s148
      %s170 = sphi 0, %s172
      %s173 = sphi 0, %s170
      %s174 = sphi 0, %s173
      %s190 = sphi 0, %s174
      %s196 = sphi 0, %s198
      %s199 = sphi 0, %s196
      %s200 = sphi 0, %s199
      %s216 = sphi 0, %s200
    $region4: #{tpu_custom_call.1} parent=1 // loop_header_branch
      %27 = sbr.rel (%p25) target = $region8
    $region5: #{tpu_custom_call.1} parent=1 // loop_body
      %s29 = ssub.s32 %s24, 1
      %s30 = ssub.s32 %s24, 2
      %s31 = sadd.s32 %s24, 1
      %s32 = ssub.s32 %s24, %s31
      %p33 = scmp.eq.s32.totalorder %s32, 0
      %s35 = sadd.s32 %s34, 1
      %s36 = scalar_select %p33, %s34, %s35
      %p39 = pneg %p33
      %p40 = scmp.eq.s32.totalorder %s24, 1
      %p41 = por %p39, %p40
      %p42 = scmp.ne.s32.totalorder %s34, %s37
      %p43 = scmp.eq.s32.totalorder %s24, 0
      %p44 = por %p42, %p43
      %p45 = scmp.ne.s32.totalorder %s34, %s37
      %p46 = scmp.eq.s32.totalorder %s29, 1
      %p47 = por %p45, %p46
      %p48 = scmp.ne.s32.totalorder %s37, %s38
      %p49 = scmp.eq.s32.totalorder %s29, 0
      %p50 = por %p48, %p49
      %p51 = scmp.ne.s32.totalorder %s37, %s38
      %p52 = scmp.eq.s32.totalorder %s30, 1
      %p53 = por %p51, %p52
      %p55 = scmp.ne.s32.totalorder %s38, %s54
      %p56 = scmp.eq.s32.totalorder %s30, 0
      %p57 = por %p55, %p56
      %s59 = sadd.s32 %s58, 1
      %p62 = scmp.eq.s32.totalorder %s24, 1
      %p63 = scmp.ne.s32.totalorder %s58, %s60
      %p64 = scmp.eq.s32.totalorder %s24, 0
      %p65 = por %p63, %p64
      %p66 = scmp.ne.s32.totalorder %s58, %s60
      %p67 = scmp.eq.s32.totalorder %s29, 1
      %p68 = por %p66, %p67
      %p69 = scmp.ne.s32.totalorder %s60, %s61
      %p70 = scmp.eq.s32.totalorder %s29, 0
      %p71 = por %p69, %p70
      %p72 = scmp.ne.s32.totalorder %s60, %s61
      %p73 = scmp.eq.s32.totalorder %s30, 1
      %p74 = por %p72, %p73
      %p76 = scmp.ne.s32.totalorder %s61, %s75
      %p77 = scmp.eq.s32.totalorder %s30, 0
      %p78 = por %p76, %p77
      %s80 = sadd.s32 %s79, 1
      %p83 = scmp.eq.s32.totalorder %s24, 1
      %p84 = scmp.ne.s32.totalorder %s79, %s81
      %p85 = scmp.eq.s32.totalorder %s24, 0
      %p86 = por %p84, %p85
      %p87 = scmp.ne.s32.totalorder %s79, %s81
      %p88 = scmp.eq.s32.totalorder %s29, 1
      %p89 = por %p87, %p88
      %p90 = scmp.ne.s32.totalorder %s81, %s82
      %p91 = scmp.eq.s32.totalorder %s29, 0
      %p92 = por %p90, %p91
      %p93 = scmp.ne.s32.totalorder %s81, %s82
      %p94 = scmp.eq.s32.totalorder %s30, 1
      %p95 = por %p93, %p94
      %p97 = scmp.ne.s32.totalorder %s82, %s96
      %p98 = scmp.eq.s32.totalorder %s30, 0
      %p99 = por %p97, %p98
      %s101 = sadd.s32 %s100, 1
      %p104 = scmp.eq.s32.totalorder %s24, 1
      %p105 = scmp.ne.s32.totalorder %s100, %s102
      %p106 = scmp.eq.s32.totalorder %s24, 0
      %p107 = por %p105, %p106
      %p108 = scmp.ne.s32.totalorder %s100, %s102
      %p109 = scmp.eq.s32.totalorder %s29, 1
      %p110 = por %p108, %p109
      %p111 = scmp.ne.s32.totalorder %s102, %s103
      %p112 = scmp.eq.s32.totalorder %s29, 0
      %p113 = por %p111, %p112
      %p114 = scmp.ne.s32.totalorder %s102, %s103
      %p115 = scmp.eq.s32.totalorder %s30, 1
      %p116 = por %p114, %p115
      %p118 = scmp.ne.s32.totalorder %s103, %s117
      %p119 = scmp.eq.s32.totalorder %s30, 0
      %p120 = por %p118, %p119
      %s122 = sadd.s32 %s121, 1
      %p125 = scmp.eq.s32.totalorder %s24, 1
      %p126 = scmp.ne.s32.totalorder %s121, %s123
      %p127 = scmp.eq.s32.totalorder %s24, 0
      %p128 = por %p126, %p127
      %p129 = scmp.ne.s32.totalorder %s121, %s123
      %p130 = scmp.eq.s32.totalorder %s29, 1
      %p131 = por %p129, %p130
      %p132 = scmp.ne.s32.totalorder %s123, %s124
      %p133 = scmp.eq.s32.totalorder %s29, 0
      %p134 = por %p132, %p133
      %p135 = scmp.ne.s32.totalorder %s123, %s124
      %p136 = scmp.eq.s32.totalorder %s30, 1
      %p137 = por %p135, %p136
      %p139 = scmp.ne.s32.totalorder %s124, %s138
      %p140 = scmp.eq.s32.totalorder %s30, 0
      %p141 = por %p139, %p140
      %s142 = ssub.s32 %s24, %s31
      %p143 = scmp.eq.s32.totalorder %s142, 0
      %s145 = sadd.s32 %s144, 1
      %s146 = scalar_select %p143, %s144, %s145
      %p149 = pneg %p143
      %p150 = scmp.eq.s32.totalorder %s24, 1
      %p151 = por %p149, %p150
      %p152 = scmp.ne.s32.totalorder %s144, %s147
      %p153 = scmp.eq.s32.totalorder %s24, 0
      %p154 = por %p152, %p153
      %p155 = scmp.ne.s32.totalorder %s144, %s147
      %p156 = scmp.eq.s32.totalorder %s29, 1
      %p157 = por %p155, %p156
      %p158 = scmp.ne.s32.totalorder %s147, %s148
      %p159 = scmp.eq.s32.totalorder %s29, 0
      %p160 = por %p158, %p159
      %p161 = scmp.ne.s32.totalorder %s147, %s148
      %p162 = scmp.eq.s32.totalorder %s30, 1
      %p163 = por %p161, %p162
      %p165 = scmp.ne.s32.totalorder %s148, %s164
      %p166 = scmp.eq.s32.totalorder %s30, 0
      %p167 = por %p165, %p166
      %s168 = ssub.s32 %s24, %s31
      %p169 = scmp.eq.s32.totalorder %s168, 0
      %s171 = sadd.s32 %s170, 1
      %s172 = scalar_select %p169, %s170, %s171
      %p175 = pneg %p169
      %p176 = scmp.eq.s32.totalorder %s24, 1
      %p177 = por %p175, %p176
      %p178 = scmp.ne.s32.totalorder %s170, %s173
      %p179 = scmp.eq.s32.totalorder %s24, 0
      %p180 = por %p178, %p179
      %p181 = scmp.ne.s32.totalorder %s170, %s173
      %p182 = scmp.eq.s32.totalorder %s29, 1
      %p183 = por %p181, %p182
      %p184 = scmp.ne.s32.totalorder %s173, %s174
      %p185 = scmp.eq.s32.totalorder %s29, 0
      %p186 = por %p184, %p185
      %p187 = scmp.ne.s32.totalorder %s173, %s174
      %p188 = scmp.eq.s32.totalorder %s30, 1
      %p189 = por %p187, %p188
      %p191 = scmp.ne.s32.totalorder %s174, %s190
      %p192 = scmp.eq.s32.totalorder %s30, 0
      %p193 = por %p191, %p192
      %s194 = ssub.s32 %s24, %s31
      %p195 = scmp.eq.s32.totalorder %s194, 0
      %s197 = sadd.s32 %s196, 1
      %s198 = scalar_select %p195, %s196, %s197
      %p201 = pneg %p195
      %p202 = scmp.eq.s32.totalorder %s24, 1
      %p203 = por %p201, %p202
      %p204 = scmp.ne.s32.totalorder %s196, %s199
      %p205 = scmp.eq.s32.totalorder %s24, 0
      %p206 = por %p204, %p205
      %p207 = scmp.ne.s32.totalorder %s196, %s199
      %p208 = scmp.eq.s32.totalorder %s29, 1
      %p209 = por %p207, %p208
      %p210 = scmp.ne.s32.totalorder %s199, %s200
      %p211 = scmp.eq.s32.totalorder %s29, 0
      %p212 = por %p210, %p211
      %p213 = scmp.ne.s32.totalorder %s199, %s200
      %p214 = scmp.eq.s32.totalorder %s30, 1
      %p215 = por %p213, %p214
      %p217 = scmp.ne.s32.totalorder %s200, %s216
      %p218 = scmp.eq.s32.totalorder %s30, 0
      %p219 = por %p217, %p218
      %p220 = scmp.le.s32.totalorder 1, %s24
      %p221 = scmp.lt.s32.totalorder %s24, 3
      %p222 = pnand %p220, %p221
      %p223 = pneg %p222
      // Predicated region
      $region9: #{tpu_custom_call.1} parent=5 // pred_check
        _
      $region10: #{tpu_custom_call.1} parent=5 // pred_check_branch
        %225 = sbr.rel (%p222) target = $region12
      $region11: #{tpu_custom_call.1} parent=5 // pred_region
        %s226 = ssub.s32 %s24, 1
        // Predicated region
        $region13: #{tpu_custom_call.1} parent=11 // pred_check
          %p227 = pneg %p71
        $region14: #{tpu_custom_call.1} parent=11 // pred_check_branch
          %229 = sbr.rel (%p227) target = $region16
        $region15: #{tpu_custom_call.1} parent=11 // pred_region
          %231 = vsyncadd [#allocation6], 0
          %s232 = sshll.u32 %s1, 4
          %s233 = int_to_ptr.hbm [resolvable:$true] %s232
          %s234 = sshll.u32 [#allocation5], 4
          %s235 = int_to_ptr.vmem [resolvable:$true] %s234
          %240 = dma.hbm_to_vmem [thread:$0]  %s233, 1024, %s235, [#allocation6], 64, 64, 4
        $region16: #{tpu_custom_call.1} parent=11 // pred_fallthru
          _
        // Predicated region
        $region17: #{tpu_custom_call.1} parent=11 // pred_check
          %p241 = pneg %p92
        $region18: #{tpu_custom_call.1} parent=11 // pred_check_branch
          %243 = sbr.rel (%p241) target = $region20
        $region19: #{tpu_custom_call.1} parent=11 // pred_region
          _
        $region20: #{tpu_custom_call.1} parent=11 // pred_fallthru
          _
        // Predicated region
        $region21: #{tpu_custom_call.1} parent=11 // pred_check
          %p244 = pneg %p113
        $region22: #{tpu_custom_call.1} parent=11 // pred_check_branch
          %246 = sbr.rel (%p244) target = $region24
        $region23: #{tpu_custom_call.1} parent=11 // pred_region
          %248 = vsyncadd [#allocation6], 0
          %s249 = sshll.u32 %s3, 4
          %s250 = int_to_ptr.hbm [resolvable:$true] %s249
          %s251 = sshll.u32 [#allocation7], 4
          %s252 = int_to_ptr.vmem [resolvable:$true] %s251
          %257 = dma.hbm_to_vmem [thread:$0]  %s250, 1024, %s252, [#allocation6], 64, 64, 4
        $region24: #{tpu_custom_call.1} parent=11 // pred_fallthru
          _
        // Predicated region
        $region25: #{tpu_custom_call.1} parent=11 // pred_check
          %p258 = pneg %p134
        $region26: #{tpu_custom_call.1} parent=11 // pred_check_branch
          %260 = sbr.rel (%p258) target = $region28
        $region27: #{tpu_custom_call.1} parent=11 // pred_region
          _
        $region28: #{tpu_custom_call.1} parent=11 // pred_fallthru
          _
      $region12: #{tpu_custom_call.1} parent=5 // pred_fallthru
        _
      %p261 = scmp.lt.s32.totalorder %s24, 2
      // Predicated region
      $region29: #{tpu_custom_call.1} parent=5 // pred_check
        %p262 = pneg %p261
      $region30: #{tpu_custom_call.1} parent=5 // pred_check_branch
        %264 = sbr.rel (%p262) target = $region32
      $region31: #{tpu_custom_call.1} parent=5 // pred_region
        // Predicated region
        $region33: #{tpu_custom_call.1} parent=31 // pred_check
          %p265 = pneg %p44
        $region34: #{tpu_custom_call.1} parent=31 // pred_check_branch
          %267 = sbr.rel (%p265) target = $region36
        $region35: #{tpu_custom_call.1} parent=31 // pred_region
          %s268 = sand.u32 %s34, 1
          %s269 = scalar_lea.sflag [#allocation3], %s268
          %s270 = sand.u32 %s34, 1
          %s271 = smul.addr %s270, 128
          %s272 = scalar_lea.vmem [#allocation2], %s271
          %s273 = smul.u32 32, %s24
          %275 = vsyncadd %s269, 0
          %s276 = smul.addr %s273, 4
          %s277 = scalar_lea.hbm %s0, %s276
          %s278 = sshll.u32 %s277, 4
          %s279 = int_to_ptr.hbm [resolvable:$true] %s278
          %s280 = sshll.u32 %s272, 4
          %s281 = int_to_ptr.vmem [resolvable:$true] %s280
          %286 = dma.hbm_to_vmem [thread:$0]  %s279, 2048, %s281, %s269, 64, 64, 4
        $region36: #{tpu_custom_call.1} parent=31 // pred_fallthru
          _
      $region32: #{tpu_custom_call.1} parent=5 // pred_fallthru
        _
      %p287 = scmp.le.s32.totalorder 1, %s24
      %p288 = scmp.lt.s32.totalorder %s24, 3
      %p289 = pnand %p287, %p288
      %p290 = pneg %p289
      // Predicated region
      $region37: #{tpu_custom_call.1} parent=5 // pred_check
        _
      $region38: #{tpu_custom_call.1} parent=5 // pred_check_branch
        %292 = sbr.rel (%p289) target = $region40
      $region39: #{tpu_custom_call.1} parent=5 // pred_region
        %s293 = ssub.s32 %s24, 1
        %s294 = sand.u32 %s37, 1
        %s295 = scalar_lea.sflag [#allocation3], %s294
        %s296 = sand.u32 %s37, 1
        %s297 = smul.addr %s296, 128
        %s298 = scalar_lea.vmem [#allocation2], %s297
        // Predicated region
        $region41: #{tpu_custom_call.1} parent=39 // pred_check
          %p299 = pneg %p50
        $region42: #{tpu_custom_call.1} parent=39 // pred_check_branch
          %301 = sbr.rel (%p299) target = $region44
        $region43: #{tpu_custom_call.1} parent=39 // pred_region
          %303 = dma.done %s295, 2048
        $region44: #{tpu_custom_call.1} parent=39 // pred_fallthru
          _
        // Predicated region
        $region45: #{tpu_custom_call.1} parent=39 // pred_check
          %p304 = pneg %p71
        $region46: #{tpu_custom_call.1} parent=39 // pred_check_branch
          %306 = sbr.rel (%p304) target = $region48
        $region47: #{tpu_custom_call.1} parent=39 // pred_region
          %308 = dma.done [#allocation6], 1024
        $region48: #{tpu_custom_call.1} parent=39 // pred_fallthru
          _
        // Predicated region
        $region49: #{tpu_custom_call.1} parent=39 // pred_check
          %p309 = pneg %p113
        $region50: #{tpu_custom_call.1} parent=39 // pred_check_branch
          %311 = sbr.rel (%p309) target = $region52
        $region51: #{tpu_custom_call.1} parent=39 // pred_region
          %313 = dma.done [#allocation6], 1024
        $region52: #{tpu_custom_call.1} parent=39 // pred_fallthru
          _
        %s314 = sand.u32 %s37, 1
        %s315 = scalar_lea.sflag [#allocation3], %s314
        %s316 = sand.u32 %s37, 1
        %s317 = smul.addr %s316, 128
        %s318 = scalar_lea.vmem [#allocation2], %s317
        %p319 = pneg %p50
        %p320 = pneg %p47
        %p321 = pneg %p71
        %p322 = pneg %p68
        %p323 = pneg %p92
        %p324 = pneg %p89
        %p325 = pneg %p113
        %p326 = pneg %p110
        %p327 = pneg %p134
        %p328 = pneg %p131
        %p329 = pneg %p160
        %p330 = pneg %p157
        %s331 = sand.u32 %s147, 1
        %s332 = scalar_lea.sflag [#allocation4], %s331
        %s333 = sand.u32 %s147, 1
        %s334 = smul.addr %s333, 256
        %s335 = scalar_lea.vmem [#allocation8], %s334
        %p336 = pneg %p186
        %p337 = pneg %p183
        %s338 = sand.u32 %s29, 1
        %s339 = scalar_lea.sflag [#allocation10], %s338
        %s340 = sand.u32 %s173, 1
        %s341 = smul.addr %s340, 128
        %s342 = scalar_lea.vmem [#allocation9], %s341
        %p343 = pneg %p212
        %p344 = pneg %p209
        %s345 = sand.u32 %s29, 1
        %s346 = scalar_lea.sflag [#allocation10], %s345
        %s347 = sand.u32 %s199, 1
        %s348 = smul.addr %s347, 128
        %s349 = scalar_lea.vmem [#allocation11], %s348
        %s350 = smul.u32 32, %s29
        %s351 = smul.u32 32, %s29
        %s352 = smul.u32 32, %s29
        %s353 = smul.u32 2, %s29
        %v354 = vld [vmem:[%s298] sm:$0xf]
        %v355 = vld [vmem:[%s298 + $0x4] sm:$0xf]
        %v356 = vld [vmem:[%s298 + $0x8] sm:$0xf]
        %v357 = vld [vmem:[%s298 + $0xc] sm:$0xf]
        %v358 = vld [vmem:[%s298 + $0x10] sm:$0xf]
        %v359 = vld [vmem:[%s298 + $0x14] sm:$0xf]
        %v360 = vld [vmem:[%s298 + $0x18] sm:$0xf]
        %v361 = vld [vmem:[%s298 + $0x1c] sm:$0xf]
        %v362 = vld [vmem:[%s298 + $0x20] sm:$0xf]
        %v363 = vld [vmem:[%s298 + $0x24] sm:$0xf]
        %v364 = vld [vmem:[%s298 + $0x28] sm:$0xf]
        %v365 = vld [vmem:[%s298 + $0x2c] sm:$0xf]
        %v366 = vld [vmem:[%s298 + $0x30] sm:$0xf]
        %v367 = vld [vmem:[%s298 + $0x34] sm:$0xf]
        %v368 = vld [vmem:[%s298 + $0x38] sm:$0xf]
        %v369 = vld [vmem:[%s298 + $0x3c] sm:$0xf]
        %v370 = vld [vmem:[%s298 + $0x40] sm:$0xf]
        %v371 = vld [vmem:[%s298 + $0x44] sm:$0xf]
        %v372 = vld [vmem:[%s298 + $0x48] sm:$0xf]
        %v373 = vld [vmem:[%s298 + $0x4c] sm:$0xf]
        %v374 = vld [vmem:[%s298 + $0x50] sm:$0xf]
        %v375 = vld [vmem:[%s298 + $0x54] sm:$0xf]
        %v376 = vld [vmem:[%s298 + $0x58] sm:$0xf]
        %v377 = vld [vmem:[%s298 + $0x5c] sm:$0xf]
        %v378 = vld [vmem:[%s298 + $0x60] sm:$0xf]
        %v379 = vld [vmem:[%s298 + $0x64] sm:$0xf]
        %v380 = vld [vmem:[%s298 + $0x68] sm:$0xf]
        %v381 = vld [vmem:[%s298 + $0x6c] sm:$0xf]
        %v382 = vld [vmem:[%s298 + $0x70] sm:$0xf]
        %v383 = vld [vmem:[%s298 + $0x74] sm:$0xf]
        %v384 = vld [vmem:[%s298 + $0x78] sm:$0xf]
        %v385 = vld [vmem:[%s298 + $0x7c] sm:$0xf]
        %v386 = vld [vmem:[#allocation5] sm:$0xf]
        %v387 = vld [vmem:[#allocation5 + $0x4] sm:$0xf]
        %v388 = vld [vmem:[#allocation5 + $0x8] sm:$0xf]
        %v389 = vld [vmem:[#allocation5 + $0xc] sm:$0xf]
        %v390 = vld [vmem:[#allocation5 + $0x10] sm:$0xf]
        %v391 = vld [vmem:[#allocation5 + $0x14] sm:$0xf]
        %v392 = vld [vmem:[#allocation5 + $0x18] sm:$0xf]
        %v393 = vld [vmem:[#allocation5 + $0x1c] sm:$0xf]
        %v394 = vld [vmem:[#allocation5 + $0x20] sm:$0xf]
        %v395 = vld [vmem:[#allocation5 + $0x24] sm:$0xf]
        %v396 = vld [vmem:[#allocation5 + $0x28] sm:$0xf]
        %v397 = vld [vmem:[#allocation5 + $0x2c] sm:$0xf]
        %v398 = vld [vmem:[#allocation5 + $0x30] sm:$0xf]
        %v399 = vld [vmem:[#allocation5 + $0x34] sm:$0xf]
        %v400 = vld [vmem:[#allocation5 + $0x38] sm:$0xf]
        %v401 = vld [vmem:[#allocation5 + $0x3c] sm:$0xf]
        %v402 = vld [vmem:[%s2] sm:$0x1]
        %v404 = vperm.slane %v402, 0
        %v438 = vunpack.c.l.b16 %v354
        %v439 = vunpack.c.l.b16 %v355
        %v440 = vunpack.c.l.b16 %v356
        %v441 = vunpack.c.l.b16 %v357
        %v442 = vunpack.c.l.b16 %v358
        %v443 = vunpack.c.l.b16 %v359
        %v444 = vunpack.c.l.b16 %v360
        %v445 = vunpack.c.l.b16 %v361
        %v446 = vunpack.c.l.b16 %v362
        %v447 = vunpack.c.l.b16 %v363
        %v448 = vunpack.c.l.b16 %v364
        %v449 = vunpack.c.l.b16 %v365
        %v450 = vunpack.c.l.b16 %v366
        %v451 = vunpack.c.l.b16 %v367
        %v452 = vunpack.c.l.b16 %v368
        %v453 = vunpack.c.l.b16 %v369
        %v454 = vunpack.c.l.b16 %v370
        %v455 = vunpack.c.l.b16 %v371
        %v456 = vunpack.c.l.b16 %v372
        %v457 = vunpack.c.l.b16 %v373
        %v458 = vunpack.c.l.b16 %v374
        %v459 = vunpack.c.l.b16 %v375
        %v460 = vunpack.c.l.b16 %v376
        %v461 = vunpack.c.l.b16 %v377
        %v462 = vunpack.c.l.b16 %v378
        %v463 = vunpack.c.l.b16 %v379
        %v464 = vunpack.c.l.b16 %v380
        %v465 = vunpack.c.l.b16 %v381
        %v466 = vunpack.c.l.b16 %v382
        %v467 = vunpack.c.l.b16 %v383
        %v468 = vunpack.c.l.b16 %v384
        %v469 = vunpack.c.l.b16 %v385
        %v470 = vpack.c.b16 %v439, %v438
        %v471 = vpack.c.b16 %v441, %v440
        %v472 = vpack.c.b16 %v443, %v442
        %v473 = vpack.c.b16 %v445, %v444
        %v474 = vpack.c.b16 %v447, %v446
        %v475 = vpack.c.b16 %v449, %v448
        %v476 = vpack.c.b16 %v451, %v450
        %v477 = vpack.c.b16 %v453, %v452
        %v478 = vpack.c.b16 %v455, %v454
        %v479 = vpack.c.b16 %v457, %v456
        %v480 = vpack.c.b16 %v459, %v458
        %v481 = vpack.c.b16 %v461, %v460
        %v482 = vpack.c.b16 %v463, %v462
        %v483 = vpack.c.b16 %v465, %v464
        %v484 = vpack.c.b16 %v467, %v466
        %v485 = vpack.c.b16 %v469, %v468
        %v518 = vunpack.c.l.b16 %v386
        %v519 = vunpack.c.l.b16 %v387
        %v520 = vunpack.c.l.b16 %v388
        %v521 = vunpack.c.l.b16 %v389
        %v522 = vunpack.c.l.b16 %v390
        %v523 = vunpack.c.l.b16 %v391
        %v524 = vunpack.c.l.b16 %v392
        %v525 = vunpack.c.l.b16 %v393
        %v526 = vunpack.c.l.b16 %v394
        %v527 = vunpack.c.l.b16 %v395
        %v528 = vunpack.c.l.b16 %v396
        %v529 = vunpack.c.l.b16 %v397
        %v530 = vunpack.c.l.b16 %v398
        %v531 = vunpack.c.l.b16 %v399
        %v532 = vunpack.c.l.b16 %v400
        %v533 = vunpack.c.l.b16 %v401
        %v534 = vpack.c.b16 %v519, %v518
        %v535 = vpack.c.b16 %v521, %v520
        %v536 = vpack.c.b16 %v523, %v522
        %v537 = vpack.c.b16 %v525, %v524
        %v538 = vpack.c.b16 %v527, %v526
        %v539 = vpack.c.b16 %v529, %v528
        %v540 = vpack.c.b16 %v531, %v530
        %v541 = vpack.c.b16 %v533, %v532
        %550 = vmatpush.bf16.msra.mxu0 %v541
        %551 = vmatpush.bf16.msra.mxu0 %v540
        %552 = vmatpush.bf16.msra.mxu0 %v539
        %553 = vmatpush.bf16.msra.mxu0 %v538
        %554 = vmatpush.bf16.msra.mxu0 %v537
        %555 = vmatpush.bf16.msra.mxu0 %v536
        %556 = vmatpush.bf16.msra.mxu0 %v535
        %557 = vmatpush.bf16.msra.mxu0 %v534
        %558 = vmatmul.bf16.gmra.mxu0 %v470
        %v559 = vpop.f32.mrf.mxu0
        %v560 = vadd.f32 %v404, %v559
        %v561 = vpop.f32.mrf.mxu0
        %v562 = vadd.f32 %v404, %v561
        %563 = vmatmul.bf16.gmra.mxu0 %v471
        %v564 = vpop.f32.mrf.mxu0
        %v565 = vadd.f32 %v404, %v564
        %v566 = vpop.f32.mrf.mxu0
        %v567 = vadd.f32 %v404, %v566
        %568 = vmatmul.bf16.gmra.mxu0 %v472
        %v569 = vpop.f32.mrf.mxu0
        %v570 = vadd.f32 %v404, %v569
        %v571 = vpop.f32.mrf.mxu0
        %v572 = vadd.f32 %v404, %v571
        %573 = vmatmul.bf16.gmra.mxu0 %v473
        %v574 = vpop.f32.mrf.mxu0
        %v575 = vadd.f32 %v404, %v574
        %v576 = vpop.f32.mrf.mxu0
        %v577 = vadd.f32 %v404, %v576
        %578 = vmatmul.bf16.gmra.mxu0 %v474
        %v579 = vpop.f32.mrf.mxu0
        %v580 = vadd.f32 %v404, %v579
        %v581 = vpop.f32.mrf.mxu0
        %v582 = vadd.f32 %v404, %v581
        %583 = vmatmul.bf16.gmra.mxu0 %v475
        %v584 = vpop.f32.mrf.mxu0
        %v585 = vadd.f32 %v404, %v584
        %v586 = vpop.f32.mrf.mxu0
        %v587 = vadd.f32 %v404, %v586
        %588 = vmatmul.bf16.gmra.mxu0 %v476
        %v589 = vpop.f32.mrf.mxu0
        %v590 = vadd.f32 %v404, %v589
        %v591 = vpop.f32.mrf.mxu0
        %v592 = vadd.f32 %v404, %v591
        %593 = vmatmul.bf16.gmra.mxu0 %v477
        %v594 = vpop.f32.mrf.mxu0
        %v595 = vadd.f32 %v404, %v594
        %v596 = vpop.f32.mrf.mxu0
        %v597 = vadd.f32 %v404, %v596
        %598 = vmatmul.bf16.gmra.mxu0 %v478
        %v599 = vpop.f32.mrf.mxu0
        %v600 = vadd.f32 %v404, %v599
        %v601 = vpop.f32.mrf.mxu0
        %v602 = vadd.f32 %v404, %v601
        %603 = vmatmul.bf16.gmra.mxu0 %v479
        %v604 = vpop.f32.mrf.mxu0
        %v605 = vadd.f32 %v404, %v604
        %v606 = vpop.f32.mrf.mxu0
        %v607 = vadd.f32 %v404, %v606
        %608 = vmatmul.bf16.gmra.mxu0 %v480
        %v609 = vpop.f32.mrf.mxu0
        %v610 = vadd.f32 %v404, %v609
        %v611 = vpop.f32.mrf.mxu0
        %v612 = vadd.f32 %v404, %v611
        %613 = vmatmul.bf16.gmra.mxu0 %v481
        %v614 = vpop.f32.mrf.mxu0
        %v615 = vadd.f32 %v404, %v614
        %v616 = vpop.f32.mrf.mxu0
        %v617 = vadd.f32 %v404, %v616
        %618 = vmatmul.bf16.gmra.mxu0 %v482
        %v619 = vpop.f32.mrf.mxu0
        %v620 = vadd.f32 %v404, %v619
        %v621 = vpop.f32.mrf.mxu0
        %v622 = vadd.f32 %v404, %v621
        %623 = vmatmul.bf16.gmra.mxu0 %v483
        %v624 = vpop.f32.mrf.mxu0
        %v625 = vadd.f32 %v404, %v624
        %v626 = vpop.f32.mrf.mxu0
        %v627 = vadd.f32 %v404, %v626
        %628 = vmatmul.bf16.gmra.mxu0 %v484
        %v629 = vpop.f32.mrf.mxu0
        %v630 = vadd.f32 %v404, %v629
        %v631 = vpop.f32.mrf.mxu0
        %v632 = vadd.f32 %v404, %v631
        %633 = vmatmul.bf16.gmra.mxu0 %v485
        %v634 = vpop.f32.mrf.mxu0
        %v635 = vadd.f32 %v404, %v634
        %v636 = vpop.f32.mrf.mxu0
        %v637 = vadd.f32 %v404, %v636
        %638 = vdwg.mxu0
        %v639 = vmax.f32 %v560, 0.0
        %v640 = vmax.f32 %v562, 0.0
        %v641 = vmax.f32 %v565, 0.0
        %v642 = vmax.f32 %v567, 0.0
        %v643 = vmax.f32 %v570, 0.0
        %v644 = vmax.f32 %v572, 0.0
        %v645 = vmax.f32 %v575, 0.0
        %v646 = vmax.f32 %v577, 0.0
        %v647 = vmax.f32 %v580, 0.0
        %v648 = vmax.f32 %v582, 0.0
        %v649 = vmax.f32 %v585, 0.0
        %v650 = vmax.f32 %v587, 0.0
        %v651 = vmax.f32 %v590, 0.0
        %v652 = vmax.f32 %v592, 0.0
        %v653 = vmax.f32 %v595, 0.0
        %v654 = vmax.f32 %v597, 0.0
        %v655 = vmax.f32 %v600, 0.0
        %v656 = vmax.f32 %v602, 0.0
        %v657 = vmax.f32 %v605, 0.0
        %v658 = vmax.f32 %v607, 0.0
        %v659 = vmax.f32 %v610, 0.0
        %v660 = vmax.f32 %v612, 0.0
        %v661 = vmax.f32 %v615, 0.0
        %v662 = vmax.f32 %v617, 0.0
        %v663 = vmax.f32 %v620, 0.0
        %v664 = vmax.f32 %v622, 0.0
        %v665 = vmax.f32 %v625, 0.0
        %v666 = vmax.f32 %v627, 0.0
        %v667 = vmax.f32 %v630, 0.0
        %v668 = vmax.f32 %v632, 0.0
        %v669 = vmax.f32 %v635, 0.0
        %v670 = vmax.f32 %v637, 0.0
        %v671 = vpack.c.bf16 %v640, %v639
        %v672 = vpack.c.bf16 %v642, %v641
        %v673 = vpack.c.bf16 %v644, %v643
        %v674 = vpack.c.bf16 %v646, %v645
        %v675 = vpack.c.bf16 %v648, %v647
        %v676 = vpack.c.bf16 %v650, %v649
        %v677 = vpack.c.bf16 %v652, %v651
        %v678 = vpack.c.bf16 %v654, %v653
        %v679 = vpack.c.bf16 %v656, %v655
        %v680 = vpack.c.bf16 %v658, %v657
        %v681 = vpack.c.bf16 %v660, %v659
        %v682 = vpack.c.bf16 %v662, %v661
        %v683 = vpack.c.bf16 %v664, %v663
        %v684 = vpack.c.bf16 %v666, %v665
        %v685 = vpack.c.bf16 %v668, %v667
        %v686 = vpack.c.bf16 %v670, %v669
        %v687 = vld [vmem:[#allocation7] sm:$0xf]
        %v688 = vld [vmem:[#allocation7 + $0x4] sm:$0xf]
        %v689 = vld [vmem:[#allocation7 + $0x8] sm:$0xf]
        %v690 = vld [vmem:[#allocation7 + $0xc] sm:$0xf]
        %v691 = vld [vmem:[#allocation7 + $0x10] sm:$0xf]
        %v692 = vld [vmem:[#allocation7 + $0x14] sm:$0xf]
        %v693 = vld [vmem:[#allocation7 + $0x18] sm:$0xf]
        %v694 = vld [vmem:[#allocation7 + $0x1c] sm:$0xf]
        %v695 = vld [vmem:[#allocation7 + $0x20] sm:$0xf]
        %v696 = vld [vmem:[#allocation7 + $0x24] sm:$0xf]
        %v697 = vld [vmem:[#allocation7 + $0x28] sm:$0xf]
        %v698 = vld [vmem:[#allocation7 + $0x2c] sm:$0xf]
        %v699 = vld [vmem:[#allocation7 + $0x30] sm:$0xf]
        %v700 = vld [vmem:[#allocation7 + $0x34] sm:$0xf]
        %v701 = vld [vmem:[#allocation7 + $0x38] sm:$0xf]
        %v702 = vld [vmem:[#allocation7 + $0x3c] sm:$0xf]
        %v703 = vld [vmem:[%s4] sm:$0x1]
        %v705 = vperm.slane %v703, 0
        %v723 = vunpack.c.l.b16 %v687
        %v724 = vunpack.c.l.b16 %v688
        %v725 = vunpack.c.l.b16 %v689
        %v726 = vunpack.c.l.b16 %v690
        %v727 = vunpack.c.l.b16 %v691
        %v728 = vunpack.c.l.b16 %v692
        %v729 = vunpack.c.l.b16 %v693
        %v730 = vunpack.c.l.b16 %v694
        %v731 = vunpack.c.l.b16 %v695
        %v732 = vunpack.c.l.b16 %v696
        %v733 = vunpack.c.l.b16 %v697
        %v734 = vunpack.c.l.b16 %v698
        %v735 = vunpack.c.l.b16 %v699
        %v736 = vunpack.c.l.b16 %v700
        %v737 = vunpack.c.l.b16 %v701
        %v738 = vunpack.c.l.b16 %v702
        %v739 = vpack.c.b16 %v724, %v723
        %v740 = vpack.c.b16 %v726, %v725
        %v741 = vpack.c.b16 %v728, %v727
        %v742 = vpack.c.b16 %v730, %v729
        %v743 = vpack.c.b16 %v732, %v731
        %v744 = vpack.c.b16 %v734, %v733
        %v745 = vpack.c.b16 %v736, %v735
        %v746 = vpack.c.b16 %v738, %v737
        %755 = vmatpush.bf16.msra.mxu0 %v746
        %756 = vmatpush.bf16.msra.mxu0 %v745
        %757 = vmatpush.bf16.msra.mxu0 %v744
        %758 = vmatpush.bf16.msra.mxu0 %v743
        %759 = vmatpush.bf16.msra.mxu0 %v742
        %760 = vmatpush.bf16.msra.mxu0 %v741
        %761 = vmatpush.bf16.msra.mxu0 %v740
        %762 = vmatpush.bf16.msra.mxu0 %v739
        %763 = vmatmul.bf16.gmra.mxu0 %v671
        %v764 = vpop.f32.mrf.mxu0
        %v765 = vadd.f32 %v705, %v764
        %v766 = vpop.f32.mrf.mxu0
        %v767 = vadd.f32 %v705, %v766
        %768 = vmatmul.bf16.gmra.mxu0 %v672
        %v769 = vpop.f32.mrf.mxu0
        %v770 = vadd.f32 %v705, %v769
        %v771 = vpop.f32.mrf.mxu0
        %v772 = vadd.f32 %v705, %v771
        %773 = vmatmul.bf16.gmra.mxu0 %v673
        %v774 = vpop.f32.mrf.mxu0
        %v775 = vadd.f32 %v705, %v774
        %v776 = vpop.f32.mrf.mxu0
        %v777 = vadd.f32 %v705, %v776
        %778 = vmatmul.bf16.gmra.mxu0 %v674
        %v779 = vpop.f32.mrf.mxu0
        %v780 = vadd.f32 %v705, %v779
        %v781 = vpop.f32.mrf.mxu0
        %v782 = vadd.f32 %v705, %v781
        %783 = vmatmul.bf16.gmra.mxu0 %v675
        %v784 = vpop.f32.mrf.mxu0
        %v785 = vadd.f32 %v705, %v784
        %v786 = vpop.f32.mrf.mxu0
        %v787 = vadd.f32 %v705, %v786
        %788 = vmatmul.bf16.gmra.mxu0 %v676
        %v789 = vpop.f32.mrf.mxu0
        %v790 = vadd.f32 %v705, %v789
        %v791 = vpop.f32.mrf.mxu0
        %v792 = vadd.f32 %v705, %v791
        %793 = vmatmul.bf16.gmra.mxu0 %v677
        %v794 = vpop.f32.mrf.mxu0
        %v795 = vadd.f32 %v705, %v794
        %v796 = vpop.f32.mrf.mxu0
        %v797 = vadd.f32 %v705, %v796
        %798 = vmatmul.bf16.gmra.mxu0 %v678
        %v799 = vpop.f32.mrf.mxu0
        %v800 = vadd.f32 %v705, %v799
        %v801 = vpop.f32.mrf.mxu0
        %v802 = vadd.f32 %v705, %v801
        %803 = vmatmul.bf16.gmra.mxu0 %v679
        %v804 = vpop.f32.mrf.mxu0
        %v805 = vadd.f32 %v705, %v804
        %v806 = vpop.f32.mrf.mxu0
        %v807 = vadd.f32 %v705, %v806
        %808 = vmatmul.bf16.gmra.mxu0 %v680
        %v809 = vpop.f32.mrf.mxu0
        %v810 = vadd.f32 %v705, %v809
        %v811 = vpop.f32.mrf.mxu0
        %v812 = vadd.f32 %v705, %v811
        %813 = vmatmul.bf16.gmra.mxu0 %v681
        %v814 = vpop.f32.mrf.mxu0
        %v815 = vadd.f32 %v705, %v814
        %v816 = vpop.f32.mrf.mxu0
        %v817 = vadd.f32 %v705, %v816
        %818 = vmatmul.bf16.gmra.mxu0 %v682
        %v819 = vpop.f32.mrf.mxu0
        %v820 = vadd.f32 %v705, %v819
        %v821 = vpop.f32.mrf.mxu0
        %v822 = vadd.f32 %v705, %v821
        %823 = vmatmul.bf16.gmra.mxu0 %v683
        %v824 = vpop.f32.mrf.mxu0
        %v825 = vadd.f32 %v705, %v824
        %v826 = vpop.f32.mrf.mxu0
        %v827 = vadd.f32 %v705, %v826
        %828 = vmatmul.bf16.gmra.mxu0 %v684
        %v829 = vpop.f32.mrf.mxu0
        %v830 = vadd.f32 %v705, %v829
        %v831 = vpop.f32.mrf.mxu0
        %v832 = vadd.f32 %v705, %v831
        %833 = vmatmul.bf16.gmra.mxu0 %v685
        %v834 = vpop.f32.mrf.mxu0
        %v835 = vadd.f32 %v705, %v834
        %v836 = vpop.f32.mrf.mxu0
        %v837 = vadd.f32 %v705, %v836
        %838 = vmatmul.bf16.gmra.mxu0 %v686
        %v839 = vpop.f32.mrf.mxu0
        %v840 = vadd.f32 %v705, %v839
        %v841 = vpop.f32.mrf.mxu0
        %v842 = vadd.f32 %v705, %v841
        %843 = vdwg.mxu0
        %v844 = vmul.f32 %v765, %v765
        %v845 = vmul.f32 %v767, %v767
        %v846 = vmul.f32 %v770, %v770
        %v847 = vmul.f32 %v772, %v772
        %v848 = vmul.f32 %v775, %v775
        %v849 = vmul.f32 %v777, %v777
        %v850 = vmul.f32 %v780, %v780
        %v851 = vmul.f32 %v782, %v782
        %v852 = vmul.f32 %v785, %v785
        %v853 = vmul.f32 %v787, %v787
        %v854 = vmul.f32 %v790, %v790
        %v855 = vmul.f32 %v792, %v792
        %v856 = vmul.f32 %v795, %v795
        %v857 = vmul.f32 %v797, %v797
        %v858 = vmul.f32 %v800, %v800
        %v859 = vmul.f32 %v802, %v802
        %v860 = vmul.f32 %v805, %v805
        %v861 = vmul.f32 %v807, %v807
        %v862 = vmul.f32 %v810, %v810
        %v863 = vmul.f32 %v812, %v812
        %v864 = vmul.f32 %v815, %v815
        %v865 = vmul.f32 %v817, %v817
        %v866 = vmul.f32 %v820, %v820
        %v867 = vmul.f32 %v822, %v822
        %v868 = vmul.f32 %v825, %v825
        %v869 = vmul.f32 %v827, %v827
        %v870 = vmul.f32 %v830, %v830
        %v871 = vmul.f32 %v832, %v832
        %v872 = vmul.f32 %v835, %v835
        %v873 = vmul.f32 %v837, %v837
        %v874 = vmul.f32 %v840, %v840
        %v875 = vmul.f32 %v842, %v842
        %876 = vadd.xlane.f32.xlu0 %v844
        %v877 = vpop.xlane.xlu0 %876
        %878 = vadd.xlane.f32.xlu0 %v845
        %v879 = vpop.xlane.xlu0 %878
        %880 = vadd.xlane.f32.xlu0 %v846
        %v881 = vpop.xlane.xlu0 %880
        %882 = vadd.xlane.f32.xlu0 %v847
        %v883 = vpop.xlane.xlu0 %882
        %884 = vadd.xlane.f32.xlu0 %v848
        %v885 = vpop.xlane.xlu0 %884
        %886 = vadd.xlane.f32.xlu0 %v849
        %v887 = vpop.xlane.xlu0 %886
        %888 = vadd.xlane.f32.xlu0 %v850
        %v889 = vpop.xlane.xlu0 %888
        %890 = vadd.xlane.f32.xlu0 %v851
        %v891 = vpop.xlane.xlu0 %890
        %892 = vadd.xlane.f32.xlu0 %v852
        %v893 = vpop.xlane.xlu0 %892
        %894 = vadd.xlane.f32.xlu0 %v853
        %v895 = vpop.xlane.xlu0 %894
        %896 = vadd.xlane.f32.xlu0 %v854
        %v897 = vpop.xlane.xlu0 %896
        %898 = vadd.xlane.f32.xlu0 %v855
        %v899 = vpop.xlane.xlu0 %898
        %900 = vadd.xlane.f32.xlu0 %v856
        %v901 = vpop.xlane.xlu0 %900
        %902 = vadd.xlane.f32.xlu0 %v857
        %v903 = vpop.xlane.xlu0 %902
        %904 = vadd.xlane.f32.xlu0 %v858
        %v905 = vpop.xlane.xlu0 %904
        %906 = vadd.xlane.f32.xlu0 %v859
        %v907 = vpop.xlane.xlu0 %906
        %908 = vadd.xlane.f32.xlu0 %v860
        %v909 = vpop.xlane.xlu0 %908
        %910 = vadd.xlane.f32.xlu0 %v861
        %v911 = vpop.xlane.xlu0 %910
        %912 = vadd.xlane.f32.xlu0 %v862
        %v913 = vpop.xlane.xlu0 %912
        %914 = vadd.xlane.f32.xlu0 %v863
        %v915 = vpop.xlane.xlu0 %914
        %916 = vadd.xlane.f32.xlu0 %v864
        %v917 = vpop.xlane.xlu0 %916
        %918 = vadd.xlane.f32.xlu0 %v865
        %v919 = vpop.xlane.xlu0 %918
        %920 = vadd.xlane.f32.xlu0 %v866
        %v921 = vpop.xlane.xlu0 %920
        %922 = vadd.xlane.f32.xlu0 %v867
        %v923 = vpop.xlane.xlu0 %922
        %924 = vadd.xlane.f32.xlu0 %v868
        %v925 = vpop.xlane.xlu0 %924
        %926 = vadd.xlane.f32.xlu0 %v869
        %v927 = vpop.xlane.xlu0 %926
        %928 = vadd.xlane.f32.xlu0 %v870
        %v929 = vpop.xlane.xlu0 %928
        %930 = vadd.xlane.f32.xlu0 %v871
        %v931 = vpop.xlane.xlu0 %930
        %932 = vadd.xlane.f32.xlu0 %v872
        %v933 = vpop.xlane.xlu0 %932
        %934 = vadd.xlane.f32.xlu0 %v873
        %v935 = vpop.xlane.xlu0 %934
        %936 = vadd.xlane.f32.xlu0 %v874
        %v937 = vpop.xlane.xlu0 %936
        %938 = vadd.xlane.f32.xlu0 %v875
        %v939 = vpop.xlane.xlu0 %938
        %v940 = vmax.f32 %v877, 1e-24
        %v941 = vmax.f32 %v879, 1e-24
        %v942 = vmax.f32 %v881, 1e-24
        %v943 = vmax.f32 %v883, 1e-24
        %v944 = vmax.f32 %v885, 1e-24
        %v945 = vmax.f32 %v887, 1e-24
        %v946 = vmax.f32 %v889, 1e-24
        %v947 = vmax.f32 %v891, 1e-24
        %v948 = vmax.f32 %v893, 1e-24
        %v949 = vmax.f32 %v895, 1e-24
        %v950 = vmax.f32 %v897, 1e-24
        %v951 = vmax.f32 %v899, 1e-24
        %v952 = vmax.f32 %v901, 1e-24
        %v953 = vmax.f32 %v903, 1e-24
        %v954 = vmax.f32 %v905, 1e-24
        %v955 = vmax.f32 %v907, 1e-24
        %v956 = vmax.f32 %v909, 1e-24
        %v957 = vmax.f32 %v911, 1e-24
        %v958 = vmax.f32 %v913, 1e-24
        %v959 = vmax.f32 %v915, 1e-24
        %v960 = vmax.f32 %v917, 1e-24
        %v961 = vmax.f32 %v919, 1e-24
        %v962 = vmax.f32 %v921, 1e-24
        %v963 = vmax.f32 %v923, 1e-24
        %v964 = vmax.f32 %v925, 1e-24
        %v965 = vmax.f32 %v927, 1e-24
        %v966 = vmax.f32 %v929, 1e-24
        %v967 = vmax.f32 %v931, 1e-24
        %v968 = vmax.f32 %v933, 1e-24
        %v969 = vmax.f32 %v935, 1e-24
        %v970 = vmax.f32 %v937, 1e-24
        %v971 = vmax.f32 %v939, 1e-24
        %v972 = vrsqrt.pop %v940
        %v973 = vmul.f32 %v972, %v940
        %v974 = vmul.f32 %v973, %v972
        %v975 = vmul.f32 0.5, %v974
        %v976 = vsub.f32 1.5, %v975
        %v977 = vmul.f32 %v972, %v976
        %vm978 = vweird.f32 %v940
        %vm979 = vweird.f32 %v972
        %vm980 = vmor %vm978, %vm979
        %v981 = vsel %vm980, %v972, %v977
        %v982 = vrsqrt.pop %v941
        %v983 = vmul.f32 %v982, %v941
        %v984 = vmul.f32 %v983, %v982
        %v985 = vmul.f32 0.5, %v984
        %v986 = vsub.f32 1.5, %v985
        %v987 = vmul.f32 %v982, %v986
        %vm988 = vweird.f32 %v941
        %vm989 = vweird.f32 %v982
        %vm990 = vmor %vm988, %vm989
        %v991 = vsel %vm990, %v982, %v987
        %v992 = vrsqrt.pop %v942
        %v993 = vmul.f32 %v992, %v942
        %v994 = vmul.f32 %v993, %v992
        %v995 = vmul.f32 0.5, %v994
        %v996 = vsub.f32 1.5, %v995
        %v997 = vmul.f32 %v992, %v996
        %vm998 = vweird.f32 %v942
        %vm999 = vweird.f32 %v992
        %vm1000 = vmor %vm998, %vm999
        %v1001 = vsel %vm1000, %v992, %v997
        %v1002 = vrsqrt.pop %v943
        %v1003 = vmul.f32 %v1002, %v943
        %v1004 = vmul.f32 %v1003, %v1002
        %v1005 = vmul.f32 0.5, %v1004
        %v1006 = vsub.f32 1.5, %v1005
        %v1007 = vmul.f32 %v1002, %v1006
        %vm1008 = vweird.f32 %v943
        %vm1009 = vweird.f32 %v1002
        %vm1010 = vmor %vm1008, %vm1009
        %v1011 = vsel %vm1010, %v1002, %v1007
        %v1012 = vrsqrt.pop %v944
        %v1013 = vmul.f32 %v1012, %v944
        %v1014 = vmul.f32 %v1013, %v1012
        %v1015 = vmul.f32 0.5, %v1014
        %v1016 = vsub.f32 1.5, %v1015
        %v1017 = vmul.f32 %v1012, %v1016
        %vm1018 = vweird.f32 %v944
        %vm1019 = vweird.f32 %v1012
        %vm1020 = vmor %vm1018, %vm1019
        %v1021 = vsel %vm1020, %v1012, %v1017
        %v1022 = vrsqrt.pop %v945
        %v1023 = vmul.f32 %v1022, %v945
        %v1024 = vmul.f32 %v1023, %v1022
        %v1025 = vmul.f32 0.5, %v1024
        %v1026 = vsub.f32 1.5, %v1025
        %v1027 = vmul.f32 %v1022, %v1026
        %vm1028 = vweird.f32 %v945
        %vm1029 = vweird.f32 %v1022
        %vm1030 = vmor %vm1028, %vm1029
        %v1031 = vsel %vm1030, %v1022, %v1027
        %v1032 = vrsqrt.pop %v946
        %v1033 = vmul.f32 %v1032, %v946
        %v1034 = vmul.f32 %v1033, %v1032
        %v1035 = vmul.f32 0.5, %v1034
        %v1036 = vsub.f32 1.5, %v1035
        %v1037 = vmul.f32 %v1032, %v1036
        %vm1038 = vweird.f32 %v946
        %vm1039 = vweird.f32 %v1032
        %vm1040 = vmor %vm1038, %vm1039
        %v1041 = vsel %vm1040, %v1032, %v1037
        %v1042 = vrsqrt.pop %v947
        %v1043 = vmul.f32 %v1042, %v947
        %v1044 = vmul.f32 %v1043, %v1042
        %v1045 = vmul.f32 0.5, %v1044
        %v1046 = vsub.f32 1.5, %v1045
        %v1047 = vmul.f32 %v1042, %v1046
        %vm1048 = vweird.f32 %v947
        %vm1049 = vweird.f32 %v1042
        %vm1050 = vmor %vm1048, %vm1049
        %v1051 = vsel %vm1050, %v1042, %v1047
        %v1052 = vrsqrt.pop %v948
        %v1053 = vmul.f32 %v1052, %v948
        %v1054 = vmul.f32 %v1053, %v1052
        %v1055 = vmul.f32 0.5, %v1054
        %v1056 = vsub.f32 1.5, %v1055
        %v1057 = vmul.f32 %v1052, %v1056
        %vm1058 = vweird.f32 %v948
        %vm1059 = vweird.f32 %v1052
        %vm1060 = vmor %vm1058, %vm1059
        %v1061 = vsel %vm1060, %v1052, %v1057
        %v1062 = vrsqrt.pop %v949
        %v1063 = vmul.f32 %v1062, %v949
        %v1064 = vmul.f32 %v1063, %v1062
        %v1065 = vmul.f32 0.5, %v1064
        %v1066 = vsub.f32 1.5, %v1065
        %v1067 = vmul.f32 %v1062, %v1066
        %vm1068 = vweird.f32 %v949
        %vm1069 = vweird.f32 %v1062
        %vm1070 = vmor %vm1068, %vm1069
        %v1071 = vsel %vm1070, %v1062, %v1067
        %v1072 = vrsqrt.pop %v950
        %v1073 = vmul.f32 %v1072, %v950
        %v1074 = vmul.f32 %v1073, %v1072
        %v1075 = vmul.f32 0.5, %v1074
        %v1076 = vsub.f32 1.5, %v1075
        %v1077 = vmul.f32 %v1072, %v1076
        %vm1078 = vweird.f32 %v950
        %vm1079 = vweird.f32 %v1072
        %vm1080 = vmor %vm1078, %vm1079
        %v1081 = vsel %vm1080, %v1072, %v1077
        %v1082 = vrsqrt.pop %v951
        %v1083 = vmul.f32 %v1082, %v951
        %v1084 = vmul.f32 %v1083, %v1082
        %v1085 = vmul.f32 0.5, %v1084
        %v1086 = vsub.f32 1.5, %v1085
        %v1087 = vmul.f32 %v1082, %v1086
        %vm1088 = vweird.f32 %v951
        %vm1089 = vweird.f32 %v1082
        %vm1090 = vmor %vm1088, %vm1089
        %v1091 = vsel %vm1090, %v1082, %v1087
        %v1092 = vrsqrt.pop %v952
        %v1093 = vmul.f32 %v1092, %v952
        %v1094 = vmul.f32 %v1093, %v1092
        %v1095 = vmul.f32 0.5, %v1094
        %v1096 = vsub.f32 1.5, %v1095
        %v1097 = vmul.f32 %v1092, %v1096
        %vm1098 = vweird.f32 %v952
        %vm1099 = vweird.f32 %v1092
        %vm1100 = vmor %vm1098, %vm1099
        %v1101 = vsel %vm1100, %v1092, %v1097
        %v1102 = vrsqrt.pop %v953
        %v1103 = vmul.f32 %v1102, %v953
        %v1104 = vmul.f32 %v1103, %v1102
        %v1105 = vmul.f32 0.5, %v1104
        %v1106 = vsub.f32 1.5, %v1105
        %v1107 = vmul.f32 %v1102, %v1106
        %vm1108 = vweird.f32 %v953
        %vm1109 = vweird.f32 %v1102
        %vm1110 = vmor %vm1108, %vm1109
        %v1111 = vsel %vm1110, %v1102, %v1107
        %v1112 = vrsqrt.pop %v954
        %v1113 = vmul.f32 %v1112, %v954
        %v1114 = vmul.f32 %v1113, %v1112
        %v1115 = vmul.f32 0.5, %v1114
        %v1116 = vsub.f32 1.5, %v1115
        %v1117 = vmul.f32 %v1112, %v1116
        %vm1118 = vweird.f32 %v954
        %vm1119 = vweird.f32 %v1112
        %vm1120 = vmor %vm1118, %vm1119
        %v1121 = vsel %vm1120, %v1112, %v1117
        %v1122 = vrsqrt.pop %v955
        %v1123 = vmul.f32 %v1122, %v955
        %v1124 = vmul.f32 %v1123, %v1122
        %v1125 = vmul.f32 0.5, %v1124
        %v1126 = vsub.f32 1.5, %v1125
        %v1127 = vmul.f32 %v1122, %v1126
        %vm1128 = vweird.f32 %v955
        %vm1129 = vweird.f32 %v1122
        %vm1130 = vmor %vm1128, %vm1129
        %v1131 = vsel %vm1130, %v1122, %v1127
        %v1132 = vrsqrt.pop %v956
        %v1133 = vmul.f32 %v1132, %v956
        %v1134 = vmul.f32 %v1133, %v1132
        %v1135 = vmul.f32 0.5, %v1134
        %v1136 = vsub.f32 1.5, %v1135
        %v1137 = vmul.f32 %v1132, %v1136
        %vm1138 = vweird.f32 %v956
        %vm1139 = vweird.f32 %v1132
        %vm1140 = vmor %vm1138, %vm1139
        %v1141 = vsel %vm1140, %v1132, %v1137
        %v1142 = vrsqrt.pop %v957
        %v1143 = vmul.f32 %v1142, %v957
        %v1144 = vmul.f32 %v1143, %v1142
        %v1145 = vmul.f32 0.5, %v1144
        %v1146 = vsub.f32 1.5, %v1145
        %v1147 = vmul.f32 %v1142, %v1146
        %vm1148 = vweird.f32 %v957
        %vm1149 = vweird.f32 %v1142
        %vm1150 = vmor %vm1148, %vm1149
        %v1151 = vsel %vm1150, %v1142, %v1147
        %v1152 = vrsqrt.pop %v958
        %v1153 = vmul.f32 %v1152, %v958
        %v1154 = vmul.f32 %v1153, %v1152
        %v1155 = vmul.f32 0.5, %v1154
        %v1156 = vsub.f32 1.5, %v1155
        %v1157 = vmul.f32 %v1152, %v1156
        %vm1158 = vweird.f32 %v958
        %vm1159 = vweird.f32 %v1152
        %vm1160 = vmor %vm1158, %vm1159
        %v1161 = vsel %vm1160, %v1152, %v1157
        %v1162 = vrsqrt.pop %v959
        %v1163 = vmul.f32 %v1162, %v959
        %v1164 = vmul.f32 %v1163, %v1162
        %v1165 = vmul.f32 0.5, %v1164
        %v1166 = vsub.f32 1.5, %v1165
        %v1167 = vmul.f32 %v1162, %v1166
        %vm1168 = vweird.f32 %v959
        %vm1169 = vweird.f32 %v1162
        %vm1170 = vmor %vm1168, %vm1169
        %v1171 = vsel %vm1170, %v1162, %v1167
        %v1172 = vrsqrt.pop %v960
        %v1173 = vmul.f32 %v1172, %v960
        %v1174 = vmul.f32 %v1173, %v1172
        %v1175 = vmul.f32 0.5, %v1174
        %v1176 = vsub.f32 1.5, %v1175
        %v1177 = vmul.f32 %v1172, %v1176
        %vm1178 = vweird.f32 %v960
        %vm1179 = vweird.f32 %v1172
        %vm1180 = vmor %vm1178, %vm1179
        %v1181 = vsel %vm1180, %v1172, %v1177
        %v1182 = vrsqrt.pop %v961
        %v1183 = vmul.f32 %v1182, %v961
        %v1184 = vmul.f32 %v1183, %v1182
        %v1185 = vmul.f32 0.5, %v1184
        %v1186 = vsub.f32 1.5, %v1185
        %v1187 = vmul.f32 %v1182, %v1186
        %vm1188 = vweird.f32 %v961
        %vm1189 = vweird.f32 %v1182
        %vm1190 = vmor %vm1188, %vm1189
        %v1191 = vsel %vm1190, %v1182, %v1187
        %v1192 = vrsqrt.pop %v962
        %v1193 = vmul.f32 %v1192, %v962
        %v1194 = vmul.f32 %v1193, %v1192
        %v1195 = vmul.f32 0.5, %v1194
        %v1196 = vsub.f32 1.5, %v1195
        %v1197 = vmul.f32 %v1192, %v1196
        %vm1198 = vweird.f32 %v962
        %vm1199 = vweird.f32 %v1192
        %vm1200 = vmor %vm1198, %vm1199
        %v1201 = vsel %vm1200, %v1192, %v1197
        %v1202 = vrsqrt.pop %v963
        %v1203 = vmul.f32 %v1202, %v963
        %v1204 = vmul.f32 %v1203, %v1202
        %v1205 = vmul.f32 0.5, %v1204
        %v1206 = vsub.f32 1.5, %v1205
        %v1207 = vmul.f32 %v1202, %v1206
        %vm1208 = vweird.f32 %v963
        %vm1209 = vweird.f32 %v1202
        %vm1210 = vmor %vm1208, %vm1209
        %v1211 = vsel %vm1210, %v1202, %v1207
        %v1212 = vrsqrt.pop %v964
        %v1213 = vmul.f32 %v1212, %v964
        %v1214 = vmul.f32 %v1213, %v1212
        %v1215 = vmul.f32 0.5, %v1214
        %v1216 = vsub.f32 1.5, %v1215
        %v1217 = vmul.f32 %v1212, %v1216
        %vm1218 = vweird.f32 %v964
        %vm1219 = vweird.f32 %v1212
        %vm1220 = vmor %vm1218, %vm1219
        %v1221 = vsel %vm1220, %v1212, %v1217
        %v1222 = vrsqrt.pop %v965
        %v1223 = vmul.f32 %v1222, %v965
        %v1224 = vmul.f32 %v1223, %v1222
        %v1225 = vmul.f32 0.5, %v1224
        %v1226 = vsub.f32 1.5, %v1225
        %v1227 = vmul.f32 %v1222, %v1226
        %vm1228 = vweird.f32 %v965
        %vm1229 = vweird.f32 %v1222
        %vm1230 = vmor %vm1228, %vm1229
        %v1231 = vsel %vm1230, %v1222, %v1227
        %v1232 = vrsqrt.pop %v966
        %v1233 = vmul.f32 %v1232, %v966
        %v1234 = vmul.f32 %v1233, %v1232
        %v1235 = vmul.f32 0.5, %v1234
        %v1236 = vsub.f32 1.5, %v1235
        %v1237 = vmul.f32 %v1232, %v1236
        %vm1238 = vweird.f32 %v966
        %vm1239 = vweird.f32 %v1232
        %vm1240 = vmor %vm1238, %vm1239
        %v1241 = vsel %vm1240, %v1232, %v1237
        %v1242 = vrsqrt.pop %v967
        %v1243 = vmul.f32 %v1242, %v967
        %v1244 = vmul.f32 %v1243, %v1242
        %v1245 = vmul.f32 0.5, %v1244
        %v1246 = vsub.f32 1.5, %v1245
        %v1247 = vmul.f32 %v1242, %v1246
        %vm1248 = vweird.f32 %v967
        %vm1249 = vweird.f32 %v1242
        %vm1250 = vmor %vm1248, %vm1249
        %v1251 = vsel %vm1250, %v1242, %v1247
        %v1252 = vrsqrt.pop %v968
        %v1253 = vmul.f32 %v1252, %v968
        %v1254 = vmul.f32 %v1253, %v1252
        %v1255 = vmul.f32 0.5, %v1254
        %v1256 = vsub.f32 1.5, %v1255
        %v1257 = vmul.f32 %v1252, %v1256
        %vm1258 = vweird.f32 %v968
        %vm1259 = vweird.f32 %v1252
        %vm1260 = vmor %vm1258, %vm1259
        %v1261 = vsel %vm1260, %v1252, %v1257
        %v1262 = vrsqrt.pop %v969
        %v1263 = vmul.f32 %v1262, %v969
        %v1264 = vmul.f32 %v1263, %v1262
        %v1265 = vmul.f32 0.5, %v1264
        %v1266 = vsub.f32 1.5, %v1265
        %v1267 = vmul.f32 %v1262, %v1266
        %vm1268 = vweird.f32 %v969
        %vm1269 = vweird.f32 %v1262
        %vm1270 = vmor %vm1268, %vm1269
        %v1271 = vsel %vm1270, %v1262, %v1267
        %v1272 = vrsqrt.pop %v970
        %v1273 = vmul.f32 %v1272, %v970
        %v1274 = vmul.f32 %v1273, %v1272
        %v1275 = vmul.f32 0.5, %v1274
        %v1276 = vsub.f32 1.5, %v1275
        %v1277 = vmul.f32 %v1272, %v1276
        %vm1278 = vweird.f32 %v970
        %vm1279 = vweird.f32 %v1272
        %vm1280 = vmor %vm1278, %vm1279
        %v1281 = vsel %vm1280, %v1272, %v1277
        %v1282 = vrsqrt.pop %v971
        %v1283 = vmul.f32 %v1282, %v971
        %v1284 = vmul.f32 %v1283, %v1282
        %v1285 = vmul.f32 0.5, %v1284
        %v1286 = vsub.f32 1.5, %v1285
        %v1287 = vmul.f32 %v1282, %v1286
        %vm1288 = vweird.f32 %v971
        %vm1289 = vweird.f32 %v1282
        %vm1290 = vmor %vm1288, %vm1289
        %v1291 = vsel %vm1290, %v1282, %v1287
        %v1292 = vmul.f32 %v765, %v981
        %v1293 = vmul.f32 %v767, %v991
        %v1294 = vmul.f32 %v770, %v1001
        %v1295 = vmul.f32 %v772, %v1011
        %v1296 = vmul.f32 %v775, %v1021
        %v1297 = vmul.f32 %v777, %v1031
        %v1298 = vmul.f32 %v780, %v1041
        %v1299 = vmul.f32 %v782, %v1051
        %v1300 = vmul.f32 %v785, %v1061
        %v1301 = vmul.f32 %v787, %v1071
        %v1302 = vmul.f32 %v790, %v1081
        %v1303 = vmul.f32 %v792, %v1091
        %v1304 = vmul.f32 %v795, %v1101
        %v1305 = vmul.f32 %v797, %v1111
        %v1306 = vmul.f32 %v800, %v1121
        %v1307 = vmul.f32 %v802, %v1131
        %v1308 = vmul.f32 %v805, %v1141
        %v1309 = vmul.f32 %v807, %v1151
        %v1310 = vmul.f32 %v810, %v1161
        %v1311 = vmul.f32 %v812, %v1171
        %v1312 = vmul.f32 %v815, %v1181
        %v1313 = vmul.f32 %v817, %v1191
        %v1314 = vmul.f32 %v820, %v1201
        %v1315 = vmul.f32 %v822, %v1211
        %v1316 = vmul.f32 %v825, %v1221
        %v1317 = vmul.f32 %v827, %v1231
        %v1318 = vmul.f32 %v830, %v1241
        %v1319 = vmul.f32 %v832, %v1251
        %v1320 = vmul.f32 %v835, %v1261
        %v1321 = vmul.f32 %v837, %v1271
        %v1322 = vmul.f32 %v840, %v1281
        %v1323 = vmul.f32 %v842, %v1291
        %1324 = vst [vmem:[%s335] sm:$0xff] %v1292
        %1325 = vst [vmem:[%s335 + $0x8] sm:$0xff] %v1293
        %1326 = vst [vmem:[%s335 + $0x10] sm:$0xff] %v1294
        %1327 = vst [vmem:[%s335 + $0x18] sm:$0xff] %v1295
        %1328 = vst [vmem:[%s335 + $0x20] sm:$0xff] %v1296
        %1329 = vst [vmem:[%s335 + $0x28] sm:$0xff] %v1297
        %1330 = vst [vmem:[%s335 + $0x30] sm:$0xff] %v1298
        %1331 = vst [vmem:[%s335 + $0x38] sm:$0xff] %v1299
        %1332 = vst [vmem:[%s335 + $0x40] sm:$0xff] %v1300
        %1333 = vst [vmem:[%s335 + $0x48] sm:$0xff] %v1301
        %1334 = vst [vmem:[%s335 + $0x50] sm:$0xff] %v1302
        %1335 = vst [vmem:[%s335 + $0x58] sm:$0xff] %v1303
        %1336 = vst [vmem:[%s335 + $0x60] sm:$0xff] %v1304
        %1337 = vst [vmem:[%s335 + $0x68] sm:$0xff] %v1305
        %1338 = vst [vmem:[%s335 + $0x70] sm:$0xff] %v1306
        %1339 = vst [vmem:[%s335 + $0x78] sm:$0xff] %v1307
        %1340 = vst [vmem:[%s335 + $0x80] sm:$0xff] %v1308
        %1341 = vst [vmem:[%s335 + $0x88] sm:$0xff] %v1309
        %1342 = vst [vmem:[%s335 + $0x90] sm:$0xff] %v1310
        %1343 = vst [vmem:[%s335 + $0x98] sm:$0xff] %v1311
        %1344 = vst [vmem:[%s335 + $0xa0] sm:$0xff] %v1312
        %1345 = vst [vmem:[%s335 + $0xa8] sm:$0xff] %v1313
        %1346 = vst [vmem:[%s335 + $0xb0] sm:$0xff] %v1314
        %1347 = vst [vmem:[%s335 + $0xb8] sm:$0xff] %v1315
        %1348 = vst [vmem:[%s335 + $0xc0] sm:$0xff] %v1316
        %1349 = vst [vmem:[%s335 + $0xc8] sm:$0xff] %v1317
        %1350 = vst [vmem:[%s335 + $0xd0] sm:$0xff] %v1318
        %1351 = vst [vmem:[%s335 + $0xd8] sm:$0xff] %v1319
        %1352 = vst [vmem:[%s335 + $0xe0] sm:$0xff] %v1320
        %1353 = vst [vmem:[%s335 + $0xe8] sm:$0xff] %v1321
        %1354 = vst [vmem:[%s335 + $0xf0] sm:$0xff] %v1322
        %1355 = vst [vmem:[%s335 + $0xf8] sm:$0xff] %v1323
        %v1356 = vpack.c.bf16 %v1292, %v1292
        %v1357 = vpack.c.bf16 %v1293, %v1293
        %v1358 = vpack.c.bf16 %v1294, %v1294
        %v1359 = vpack.c.bf16 %v1295, %v1295
        %v1360 = vpack.c.bf16 %v1296, %v1296
        %v1361 = vpack.c.bf16 %v1297, %v1297
        %v1362 = vpack.c.bf16 %v1298, %v1298
        %v1363 = vpack.c.bf16 %v1299, %v1299
        %v1364 = vpack.c.bf16 %v1300, %v1300
        %v1365 = vpack.c.bf16 %v1301, %v1301
        %v1366 = vpack.c.bf16 %v1302, %v1302
        %v1367 = vpack.c.bf16 %v1303, %v1303
        %v1368 = vpack.c.bf16 %v1304, %v1304
        %v1369 = vpack.c.bf16 %v1305, %v1305
        %v1370 = vpack.c.bf16 %v1306, %v1306
        %v1371 = vpack.c.bf16 %v1307, %v1307
        %v1372 = vpack.c.bf16 %v1308, %v1308
        %v1373 = vpack.c.bf16 %v1309, %v1309
        %v1374 = vpack.c.bf16 %v1310, %v1310
        %v1375 = vpack.c.bf16 %v1311, %v1311
        %v1376 = vpack.c.bf16 %v1312, %v1312
        %v1377 = vpack.c.bf16 %v1313, %v1313
        %v1378 = vpack.c.bf16 %v1314, %v1314
        %v1379 = vpack.c.bf16 %v1315, %v1315
        %v1380 = vpack.c.bf16 %v1316, %v1316
        %v1381 = vpack.c.bf16 %v1317, %v1317
        %v1382 = vpack.c.bf16 %v1318, %v1318
        %v1383 = vpack.c.bf16 %v1319, %v1319
        %v1384 = vpack.c.bf16 %v1320, %v1320
        %v1385 = vpack.c.bf16 %v1321, %v1321
        %v1386 = vpack.c.bf16 %v1322, %v1322
        %v1387 = vpack.c.bf16 %v1323, %v1323
        %1388 = vst [vmem:[%s342] sm:$0xf] %v1356
        %1389 = vst [vmem:[%s342 + $0x4] sm:$0xf] %v1357
        %1390 = vst [vmem:[%s342 + $0x8] sm:$0xf] %v1358
        %1391 = vst [vmem:[%s342 + $0xc] sm:$0xf] %v1359
        %1392 = vst [vmem:[%s342 + $0x10] sm:$0xf] %v1360
        %1393 = vst [vmem:[%s342 + $0x14] sm:$0xf] %v1361
        %1394 = vst [vmem:[%s342 + $0x18] sm:$0xf] %v1362
        %1395 = vst [vmem:[%s342 + $0x1c] sm:$0xf] %v1363
        %1396 = vst [vmem:[%s342 + $0x20] sm:$0xf] %v1364
        %1397 = vst [vmem:[%s342 + $0x24] sm:$0xf] %v1365
        %1398 = vst [vmem:[%s342 + $0x28] sm:$0xf] %v1366
        %1399 = vst [vmem:[%s342 + $0x2c] sm:$0xf] %v1367
        %1400 = vst [vmem:[%s342 + $0x30] sm:$0xf] %v1368
        %1401 = vst [vmem:[%s342 + $0x34] sm:$0xf] %v1369
        %1402 = vst [vmem:[%s342 + $0x38] sm:$0xf] %v1370
        %1403 = vst [vmem:[%s342 + $0x3c] sm:$0xf] %v1371
        %1404 = vst [vmem:[%s342 + $0x40] sm:$0xf] %v1372
        %1405 = vst [vmem:[%s342 + $0x44] sm:$0xf] %v1373
        %1406 = vst [vmem:[%s342 + $0x48] sm:$0xf] %v1374
        %1407 = vst [vmem:[%s342 + $0x4c] sm:$0xf] %v1375
        %1408 = vst [vmem:[%s342 + $0x50] sm:$0xf] %v1376
        %1409 = vst [vmem:[%s342 + $0x54] sm:$0xf] %v1377
        %1410 = vst [vmem:[%s342 + $0x58] sm:$0xf] %v1378
        %1411 = vst [vmem:[%s342 + $0x5c] sm:$0xf] %v1379
        %1412 = vst [vmem:[%s342 + $0x60] sm:$0xf] %v1380
        %1413 = vst [vmem:[%s342 + $0x64] sm:$0xf] %v1381
        %1414 = vst [vmem:[%s342 + $0x68] sm:$0xf] %v1382
        %1415 = vst [vmem:[%s342 + $0x6c] sm:$0xf] %v1383
        %1416 = vst [vmem:[%s342 + $0x70] sm:$0xf] %v1384
        %1417 = vst [vmem:[%s342 + $0x74] sm:$0xf] %v1385
        %1418 = vst [vmem:[%s342 + $0x78] sm:$0xf] %v1386
        %1419 = vst [vmem:[%s342 + $0x7c] sm:$0xf] %v1387
        %1420 = vxpose.xlu0.b32.start [1/16] %v1292, 128
        %1421 = vxpose.xlu0.b32.cont [2/16] %v1293, 128
        %1422 = vxpose.xlu0.b32.cont [3/16] %v1294, 128
        %1423 = vxpose.xlu0.b32.cont [4/16] %v1295, 128
        %1424 = vxpose.xlu0.b32.cont [5/16] %v1296, 128
        %1425 = vxpose.xlu0.b32.cont [6/16] %v1297, 128
        %1426 = vxpose.xlu0.b32.cont [7/16] %v1298, 128
        %1427 = vxpose.xlu0.b32.cont [8/16] %v1299, 128
        %1428 = vxpose.xlu0.b32.cont [9/16] %v1300, 128
        %1429 = vxpose.xlu0.b32.cont [10/16] %v1301, 128
        %1430 = vxpose.xlu0.b32.cont [11/16] %v1302, 128
        %1431 = vxpose.xlu0.b32.cont [12/16] %v1303, 128
        %1432 = vxpose.xlu0.b32.cont [13/16] %v1304, 128
        %1433 = vxpose.xlu0.b32.cont [14/16] %v1305, 128
        %1434 = vxpose.xlu0.b32.cont [15/16] %v1306, 128
        %1435 = vxpose.xlu0.b32.end [16/16] %v1307, 128
        %v1436 = vpop.trf.xlu0
        %v1437 = vpop.trf.xlu0
        %v1438 = vpop.trf.xlu0
        %v1439 = vpop.trf.xlu0
        %v1440 = vpop.trf.xlu0
        %v1441 = vpop.trf.xlu0
        %v1442 = vpop.trf.xlu0
        %v1443 = vpop.trf.xlu0
        %v1444 = vpop.trf.xlu0
        %v1445 = vpop.trf.xlu0
        %v1446 = vpop.trf.xlu0
        %v1447 = vpop.trf.xlu0
        %v1448 = vpop.trf.xlu0
        %v1449 = vpop.trf.xlu0
        %v1450 = vpop.trf.xlu0
        %v1451 = vpop.trf.xlu0
        %1452 = vxpose.xlu0.b32.start [1/16] %v1308, 128
        %1453 = vxpose.xlu0.b32.cont [2/16] %v1309, 128
        %1454 = vxpose.xlu0.b32.cont [3/16] %v1310, 128
        %1455 = vxpose.xlu0.b32.cont [4/16] %v1311, 128
        %1456 = vxpose.xlu0.b32.cont [5/16] %v1312, 128
        %1457 = vxpose.xlu0.b32.cont [6/16] %v1313, 128
        %1458 = vxpose.xlu0.b32.cont [7/16] %v1314, 128
        %1459 = vxpose.xlu0.b32.cont [8/16] %v1315, 128
        %1460 = vxpose.xlu0.b32.cont [9/16] %v1316, 128
        %1461 = vxpose.xlu0.b32.cont [10/16] %v1317, 128
        %1462 = vxpose.xlu0.b32.cont [11/16] %v1318, 128
        %1463 = vxpose.xlu0.b32.cont [12/16] %v1319, 128
        %1464 = vxpose.xlu0.b32.cont [13/16] %v1320, 128
        %1465 = vxpose.xlu0.b32.cont [14/16] %v1321, 128
        %1466 = vxpose.xlu0.b32.cont [15/16] %v1322, 128
        %1467 = vxpose.xlu0.b32.end [16/16] %v1323, 128
        %v1468 = vpop.trf.xlu0
        %v1469 = vpop.trf.xlu0
        %v1470 = vpop.trf.xlu0
        %v1471 = vpop.trf.xlu0
        %v1472 = vpop.trf.xlu0
        %v1473 = vpop.trf.xlu0
        %v1474 = vpop.trf.xlu0
        %v1475 = vpop.trf.xlu0
        %v1476 = vpop.trf.xlu0
        %v1477 = vpop.trf.xlu0
        %v1478 = vpop.trf.xlu0
        %v1479 = vpop.trf.xlu0
        %v1480 = vpop.trf.xlu0
        %v1481 = vpop.trf.xlu0
        %v1482 = vpop.trf.xlu0
        %v1483 = vpop.trf.xlu0
        %v1484 = vpack.c.bf16 %v1468, %v1436
        %v1485 = vpack.c.bf16 %v1469, %v1437
        %v1486 = vpack.c.bf16 %v1470, %v1438
        %v1487 = vpack.c.bf16 %v1471, %v1439
        %v1488 = vpack.c.bf16 %v1472, %v1440
        %v1489 = vpack.c.bf16 %v1473, %v1441
        %v1490 = vpack.c.bf16 %v1474, %v1442
        %v1491 = vpack.c.bf16 %v1475, %v1443
        %v1492 = vpack.c.bf16 %v1476, %v1444
        %v1493 = vpack.c.bf16 %v1477, %v1445
        %v1494 = vpack.c.bf16 %v1478, %v1446
        %v1495 = vpack.c.bf16 %v1479, %v1447
        %v1496 = vpack.c.bf16 %v1480, %v1448
        %v1497 = vpack.c.bf16 %v1481, %v1449
        %v1498 = vpack.c.bf16 %v1482, %v1450
        %v1499 = vpack.c.bf16 %v1483, %v1451
        %1500 = vst [vmem:[%s349] sm:$0xff] %v1484
        %1501 = vst [vmem:[%s349 + $0x8] sm:$0xff] %v1485
        %1502 = vst [vmem:[%s349 + $0x10] sm:$0xff] %v1486
        %1503 = vst [vmem:[%s349 + $0x18] sm:$0xff] %v1487
        %1504 = vst [vmem:[%s349 + $0x20] sm:$0xff] %v1488
        %1505 = vst [vmem:[%s349 + $0x28] sm:$0xff] %v1489
        %1506 = vst [vmem:[%s349 + $0x30] sm:$0xff] %v1490
        %1507 = vst [vmem:[%s349 + $0x38] sm:$0xff] %v1491
        %1508 = vst [vmem:[%s349 + $0x40] sm:$0xff] %v1492
        %1509 = vst [vmem:[%s349 + $0x48] sm:$0xff] %v1493
        %1510 = vst [vmem:[%s349 + $0x50] sm:$0xff] %v1494
        %1511 = vst [vmem:[%s349 + $0x58] sm:$0xff] %v1495
        %1512 = vst [vmem:[%s349 + $0x60] sm:$0xff] %v1496
        %1513 = vst [vmem:[%s349 + $0x68] sm:$0xff] %v1497
        %1514 = vst [vmem:[%s349 + $0x70] sm:$0xff] %v1498
        %1515 = vst [vmem:[%s349 + $0x78] sm:$0xff] %v1499
        %s1516 = sand.u32 %s147, 1
        %s1517 = scalar_lea.sflag [#allocation4], %s1516
        %s1518 = sand.u32 %s147, 1
        %s1519 = smul.addr %s1518, 256
        %s1520 = scalar_lea.vmem [#allocation8], %s1519
        %s1521 = sand.u32 %s29, 1
        %s1522 = scalar_lea.sflag [#allocation10], %s1521
        %s1523 = sand.u32 %s173, 1
        %s1524 = smul.addr %s1523, 128
        %s1525 = scalar_lea.vmem [#allocation9], %s1524
        %s1526 = sand.u32 %s29, 1
        %s1527 = scalar_lea.sflag [#allocation10], %s1526
        %s1528 = sand.u32 %s199, 1
        %s1529 = smul.addr %s1528, 128
        %s1530 = scalar_lea.vmem [#allocation11], %s1529
        // Predicated region
        $region53: #{tpu_custom_call.1} parent=39 // pred_check
          %p1531 = pneg %p157
        $region54: #{tpu_custom_call.1} parent=39 // pred_check_branch
          %1533 = sbr.rel (%p1531) target = $region56
        $region55: #{tpu_custom_call.1} parent=39 // pred_region
          %s1534 = smul.u32 32, %s29
          %1536 = vsyncadd %s1517, 0
          %s1537 = smul.addr %s1534, 8
          %s1538 = scalar_lea.hbm %s5, %s1537
          %s1539 = sshll.u32 %s1520, 4
          %s1540 = int_to_ptr.vmem [resolvable:$true] %s1539
          %s1541 = sshll.u32 %s1538, 4
          %s1542 = int_to_ptr.hbm [resolvable:$true] %s1541
          %1547 = dma.vmem_to_hbm [thread:$0]  %s1540, 4096, %s1542, %s1517, 128, 128, 8
        $region56: #{tpu_custom_call.1} parent=39 // pred_fallthru
          _
        // Predicated region
        $region57: #{tpu_custom_call.1} parent=39 // pred_check
          %p1548 = pneg %p183
        $region58: #{tpu_custom_call.1} parent=39 // pred_check_branch
          %1550 = sbr.rel (%p1548) target = $region60
        $region59: #{tpu_custom_call.1} parent=39 // pred_region
          %s1551 = smul.u32 32, %s29
          %1553 = vsyncadd %s1522, 0
          %s1554 = smul.addr %s1551, 4
          %s1555 = scalar_lea.hbm %s6, %s1554
          %s1556 = sshll.u32 %s1525, 4
          %s1557 = int_to_ptr.vmem [resolvable:$true] %s1556
          %s1558 = sshll.u32 %s1555, 4
          %s1559 = int_to_ptr.hbm [resolvable:$true] %s1558
          %1564 = dma.vmem_to_hbm [thread:$0]  %s1557, 2048, %s1559, %s1522, 64, 64, 4
        $region60: #{tpu_custom_call.1} parent=39 // pred_fallthru
          _
        // Predicated region
        $region61: #{tpu_custom_call.1} parent=39 // pred_check
          %p1565 = pneg %p209
        $region62: #{tpu_custom_call.1} parent=39 // pred_check_branch
          %1567 = sbr.rel (%p1565) target = $region64
        $region63: #{tpu_custom_call.1} parent=39 // pred_region
          %s1568 = smul.u32 2, %s29
          %1570 = vsyncadd %s1527, 0
          %s1571 = smul.addr %s1568, 4
          %s1572 = scalar_lea.hbm %s7, %s1571
          %s1573 = sshll.u32 %s1530, 4
          %s1574 = int_to_ptr.vmem [resolvable:$true] %s1573
          %s1575 = sshll.u32 %s1572, 4
          %s1576 = int_to_ptr.hbm [resolvable:$true] %s1575
          %1581 = dma.vmem_to_hbm [thread:$0]  %s1574, 2048, %s1576, %s1527, 128, 256, 8
        $region64: #{tpu_custom_call.1} parent=39 // pred_fallthru
          _
      $region40: #{tpu_custom_call.1} parent=5 // pred_fallthru
        _
      %p1582 = scmp.le.s32.totalorder 2, %s24
      // Predicated region
      $region65: #{tpu_custom_call.1} parent=5 // pred_check
        %p1583 = pneg %p1582
      $region66: #{tpu_custom_call.1} parent=5 // pred_check_branch
        %1585 = sbr.rel (%p1583) target = $region68
      $region67: #{tpu_custom_call.1} parent=5 // pred_region
        %s1586 = ssub.s32 %s24, 2
        // Predicated region
        $region69: #{tpu_custom_call.1} parent=67 // pred_check
          %p1587 = pneg %p163
        $region70: #{tpu_custom_call.1} parent=67 // pred_check_branch
          %1589 = sbr.rel (%p1587) target = $region72
        $region71: #{tpu_custom_call.1} parent=67 // pred_region
          %s1590 = sand.u32 %s148, 1
          %s1591 = scalar_lea.sflag [#allocation4], %s1590
          %s1592 = sand.u32 %s148, 1
          %s1593 = smul.addr %s1592, 256
          %s1594 = scalar_lea.vmem [#allocation8], %s1593
          %1596 = dma.done %s1591, 4096
        $region72: #{tpu_custom_call.1} parent=67 // pred_fallthru
          _
        // Predicated region
        $region73: #{tpu_custom_call.1} parent=67 // pred_check
          %p1597 = pneg %p189
        $region74: #{tpu_custom_call.1} parent=67 // pred_check_branch
          %1599 = sbr.rel (%p1597) target = $region76
        $region75: #{tpu_custom_call.1} parent=67 // pred_region
          %s1600 = sand.u32 %s30, 1
          %s1601 = scalar_lea.sflag [#allocation10], %s1600
          %s1602 = sand.u32 %s174, 1
          %s1603 = smul.addr %s1602, 128
          %s1604 = scalar_lea.vmem [#allocation9], %s1603
          %1606 = dma.done %s1601, 2048
        $region76: #{tpu_custom_call.1} parent=67 // pred_fallthru
          _
        // Predicated region
        $region77: #{tpu_custom_call.1} parent=67 // pred_check
          %p1607 = pneg %p215
        $region78: #{tpu_custom_call.1} parent=67 // pred_check_branch
          %1609 = sbr.rel (%p1607) target = $region80
        $region79: #{tpu_custom_call.1} parent=67 // pred_region
          %s1610 = sand.u32 %s30, 1
          %s1611 = scalar_lea.sflag [#allocation10], %s1610
          %s1612 = sand.u32 %s200, 1
          %s1613 = smul.addr %s1612, 128
          %s1614 = scalar_lea.vmem [#allocation11], %s1613
          %1616 = dma.done %s1611, 2048
        $region80: #{tpu_custom_call.1} parent=67 // pred_fallthru
          _
      $region68: #{tpu_custom_call.1} parent=5 // pred_fallthru
        _
    $region6: #{tpu_custom_call.1} parent=1 // loop_footer
      %s28 = sadd.s32 1, %s24
    $region7: #{tpu_custom_call.1} parent=1 // loop_footer_branch
      %23 = sbr.rel target = $region3
    $region8: #{tpu_custom_call.1} parent=1 // loop_exit
      _
    %1617 = vsyncpa [#allocation3], 1
    %s1618 = scalar_lea.sflag [#allocation3], 1
    %1619 = vsyncpa %s1618, 1
    %1620 = vsyncpa [#allocation6], 1
    %1621 = vsyncpa [#allocation4], 1
    %s1622 = scalar_lea.sflag [#allocation4], 1
    %1623 = vsyncpa %s1622, 1
    %1624 = vsyncpa [#allocation10], 1
    %s1625 = scalar_lea.sflag [#allocation10], 1
    %1626 = vsyncpa %s1625, 1

</llo_original>
